<compile_context>
chip_gen: v6e
topology: v6e:2x2x1
jax: 0.10.0
libtpu: 0.0.40
codegen_flags: <defaults>
</compile_context>

<pallas_src>
import functools

import jax
import jax.numpy as jnp
from jax.experimental import pallas as pl
from jax.experimental.pallas import tpu as pltpu


def _round_up(x, m):
    return (x + m - 1) // m * m


def cbow_kernel(x_ref, emb_ref, wt_ref, b_ref, out_ref):
    # x_ref  : (TB, C)  int32    context-word indices for this batch tile
    # emb_ref: (Vp, Dp) bf16     zero-padded embedding matrix (resident, 1-buffered)
    # wt_ref : (Dp, Vp) bf16     pre-transposed, zero-padded linear weight (resident)
    # b_ref  : (1, Vp)  f32      bias; padded vocab columns hold -1e30 (resident)
    # out_ref: (TB, Vp) f32      log_softmax output tile
    x = x_ref[...]
    tb, c_ctx = x.shape
    vp = emb_ref.shape[0]

    # Embedding gather+sum expressed as a counts matmul.  Counts are
    # accumulated directly in f32 (perf review: drop the int32->f32 convert
    # pass); C is tiny and static so the Python loop fully unrolls into
    # lane-aligned VPU work.
    vocab_iota = jax.lax.broadcasted_iota(jnp.int32, (tb, vp), 1)
    counts = jnp.zeros((tb, vp), jnp.float32)
    for c in range(c_ctx):
        counts = counts + (x[:, c:c + 1] == vocab_iota).astype(jnp.float32)

    # counts are small exact integers -> lossless bf16 cast; bf16 x bf16 MXU
    # matmul with f32 accumulation (v6e/v7x bf16-native MXU, f32 acc exact here
    # since each row has <= C nonzero products).
    summed = jnp.dot(counts.astype(jnp.bfloat16), emb_ref[...],
                     preferred_element_type=jnp.float32)

    # Linear layer: weight already transposed to (Dp, Vp) -> no in-kernel .T.
    logits = jnp.dot(summed.astype(jnp.bfloat16), wt_ref[...],
                     preferred_element_type=jnp.float32) + b_ref[...]

    # log_softmax over the vocab axis, entirely in f32 (the -1e30 padded-vocab
    # bias must stay f32 so padded columns vanish without overflow).
    m = jnp.max(logits, axis=-1, keepdims=True)
    shifted = logits - m
    lse = jnp.log(jnp.sum(jnp.exp(shifted), axis=-1, keepdims=True))
    out_ref[...] = shifted - lse


def prepare_cbow_params(emb, w, b):
    """One-time (init / parameter-load time) padding + transpose of the params.

    Hoisted out of the per-call hot path (perf review).  Returns MXU-ready:
      emb_p: (Vp, Dp) bf16  zero-padded embedding matrix
      wt_p : (Dp, Vp) bf16  zero-padded, transposed linear weight
      b_p  : (1, Vp)  f32   bias; padded vocab columns set to -1e30
    """
    V, D = emb.shape
    # Dp: pad to 128 lanes.  Note: if D ever grows >= 128, pad to a multiple of
    # 256 on v6e/v7x (256-wide MXU contraction) and 128 on v5e.
    dp = _round_up(max(D, 128), 128)
    vp = _round_up(max(V, 128), 128)
    emb_p = jnp.zeros((vp, dp), jnp.bfloat16).at[:V, :D].set(emb.astype(jnp.bfloat16))
    wt_p = jnp.zeros((dp, vp), jnp.bfloat16).at[:D, :V].set(w.astype(jnp.bfloat16).T)
    b_p = jnp.full((1, vp), -1e30, jnp.float32).at[0, :V].set(b.astype(jnp.float32))
    return emb_p, wt_p, b_p


def _choose_batch_tile(B, batch_tile):
    # Keep tiles at <=128 rows so larger batches give >=4-8 grid steps for the
    # software pipeline; when the whole batch would fit in one tile, split it
    # into two (even tile count -> both v7x TensorCores get work).
    tb = min(batch_tile, 128)
    if 16 <= B <= tb:
        tb = _round_up((B + 1) // 2, 8)
    tb = max(8, min(tb, _round_up(B, 8)))
    return tb


def cbow_forward_prepared(x, emb_p, wt_p, b_p, *, vocab_size, batch_tile=128):
    """log_softmax(sum_c emb[x[:, c]] @ w.T + b, axis=1), params pre-padded.

    Note: out-of-range / negative indices silently contribute zero to the sum
    (they match no vocab column), whereas torch.nn.Embedding would raise.
    """
    B, C = x.shape
    vp, dp = emb_p.shape

    tb = _choose_batch_tile(B, batch_tile)
    bp = _round_up(B, tb)
    grid = (bp // tb,)

    # Pad batch with index-0 rows (sliced off below).  Only x is touched per
    # call; the big parameter tables were padded once in prepare_cbow_params.
    x_p = jnp.zeros((bp, C), jnp.int32).at[:B, :].set(x.astype(jnp.int32))

    # VMEM budget from the padded shapes: resident single-buffered weights +
    # double-buffered per-tile x/out traffic, 2x headroom; floor 32 MiB (raises
    # v5e's 16 MiB scoped default), cap 48 MiB (headroom under v7x's 64 MiB).
    wbytes = emb_p.dtype.itemsize
    resident_bytes = 2 * vp * dp * wbytes + vp * 4
    tile_bytes = 2 * (tb * C * 4 + tb * vp * 4)
    vmem_limit = int(max(32 << 20, min(2 * (resident_bytes + tile_bytes), 48 << 20)))

    cost = pl.CostEstimate(
        flops=2 * bp * vp * dp + 2 * bp * dp * vp,
        transcendentals=bp * vp + bp,
        bytes_accessed=bp * C * 4 + 2 * vp * dp * wbytes + vp * 4 + bp * vp * 4,
    )

    # Resident blocks have a constant index_map -> a second pipeline buffer is
    # pure waste; single-buffer them.
    resident = dict(pipeline_mode=pl.Buffered(1))

    out = pl.pallas_call(
        cbow_kernel,
        out_shape=jax.ShapeDtypeStruct((bp, vp), jnp.float32),
        grid_spec=pltpu.PrefetchScalarGridSpec(
            num_scalar_prefetch=0,
            grid=grid,
            in_specs=[
                pl.BlockSpec((tb, C), lambda i: (i, 0)),               # x: batch-tiled
                pl.BlockSpec((vp, dp), lambda i: (0, 0), **resident),  # emb: resident
                pl.BlockSpec((dp, vp), lambda i: (0, 0), **resident),  # w^T: resident
                pl.BlockSpec((1, vp), lambda i: (0, 0), **resident),   # bias: resident
            ],
            out_specs=pl.BlockSpec((tb, vp), lambda i: (i, 0)),        # lane-dense out
        ),
        compiler_params=pltpu.CompilerParams(
            dimension_semantics=("parallel",),  # independent batch tiles -> 2 TCs on v7x
            vmem_limit_bytes=vmem_limit,
        ),
        cost_estimate=cost,
    )(x_p, emb_p, wt_p, b_p)

    # TODO(synk): for very large V, add a vocab-tiled second grid axis with an
    # online (running max / running sum) log-softmax so emb/w^T are streamed
    # per vocab tile instead of held fully resident (VMEM limit arrives ~2x
    # sooner on v7x's 64 MiB than on v5e/v6e).
    return out[:B, :vocab_size]


def cbow_forward(x, emb, w, b, *, batch_tile=128):
    """Convenience wrapper matching the PyTorch module interface."""
    emb_p, wt_p, b_p = prepare_cbow_params(emb, w, b)
    return cbow_forward_prepared(x, emb_p, wt_p, b_p,
                                 vocab_size=emb.shape[0], batch_tile=batch_tile)


def cbow_reference(x, emb, w, b):
    embedded = emb[x]                       # (B, C, D)
    summed = jnp.sum(embedded, axis=1)      # (B, D)
    logits = summed @ w.T + b               # (B, V)
    return jax.nn.log_softmax(logits, axis=1)


if __name__ == "__main__":
    key = jax.random.PRNGKey(0)
    k_emb, k_w, k_b, k_x = jax.random.split(key, 4)

    vocab_size = 1000     # not a multiple of 128 -> exercises vocab padding
    embedding_dim = 10    # matches the PyTorch module's embedding_dim
    batch = 256           # two 128-row batch tiles -> even "parallel" grid
    context = 4           # CBOW context window size

    emb = jax.random.normal(k_emb, (vocab_size, embedding_dim), dtype=jnp.float32)
    w = jax.random.normal(k_w, (vocab_size, embedding_dim), dtype=jnp.float32) * 0.1
    b = jax.random.normal(k_b, (vocab_size,), dtype=jnp.float32) * 0.1

    x = jax.random.randint(k_x, (batch, context), 0, vocab_size, dtype=jnp.int32)

    # One-time parameter prep (out of the hot path), then the jitted forward.
    emb_p, wt_p, b_p = prepare_cbow_params(emb, w, b)
    fwd = jax.jit(functools.partial(cbow_forward_prepared, vocab_size=vocab_size))

    out = fwd(x, emb_p, wt_p, b_p)
    out = jax.block_until_ready(out)

    ref = cbow_reference(x, emb, w, b)
    assert out.shape == (batch, vocab_size)
    # bf16 weight / operand cast (f32 accumulation) -> tolerance relaxed from
    # 1e-4 to 5e-2 absolute on the log-probs; real kernel bugs would be O(1+).
    assert jnp.allclose(out, ref, atol=5e-2, rtol=2e-2), "mismatch vs reference"

    print("KERNEL_OK")
</pallas_src>

<mosaic_0001>
module attributes {stable_mosaic.version = 11 : i64} {
  func.func @cbow_kernel(%arg0: i32, %arg1: memref<128x4xi32, #tpu.memory_space<vmem>>, %arg2: memref<1024x128xbf16, #tpu.memory_space<vmem>>, %arg3: memref<128x1024xbf16, #tpu.memory_space<vmem>>, %arg4: memref<1x1024xf32, #tpu.memory_space<vmem>>, %arg5: memref<128x1024xf32, #tpu.memory_space<vmem>>) attributes {dimension_semantics = [#tpu.dimension_semantics<parallel>], iteration_bounds = array<i64: 2>, scalar_prefetch = 0 : i64, scratch_operands = 0 : i64, tpu.core_type = #tpu.core_type<tc>, window_params = [{transform_indices = @transform_0, window_bounds = array<i64: 128, 4>}, {pipeline_mode = #tpu.pipeline_mode<synchronous>, transform_indices = @transform_1, window_bounds = array<i64: 1024, 128>}, {pipeline_mode = #tpu.pipeline_mode<synchronous>, transform_indices = @transform_2, window_bounds = array<i64: 128, 1024>}, {pipeline_mode = #tpu.pipeline_mode<synchronous>, transform_indices = @transform_3, window_bounds = array<i64: 1, 1024>}, {transform_indices = @transform_4, window_bounds = array<i64: 128, 1024>}]} {
    %c0 = arith.constant 0 : index
    %c0_0 = arith.constant 0 : index
    %0 = vector.load %arg1[%c0, %c0_0] : memref<128x4xi32, #tpu.memory_space<vmem>>, vector<128x4xi32>
    %1 = tpu.iota {dimensions = array<i32: 1>} : vector<128x1024xi32>
    %cst = arith.constant 0.000000e+00 : f32
    %2 = vector.broadcast %cst : f32 to vector<128x1024xf32>
    %3 = vector.extract_strided_slice %0 {offsets = [0, 0], sizes = [128, 1], strides = [1, 1]} : vector<128x4xi32> to vector<128x1xi32>
    %4 = vector.broadcast %3 : vector<128x1xi32> to vector<128x1024xi32>
    %5 = arith.cmpi eq, %4, %1 : vector<128x1024xi32>
    %6 = arith.extui %5 : vector<128x1024xi1> to vector<128x1024xi32>
    %7 = arith.sitofp %6 : vector<128x1024xi32> to vector<128x1024xf32>
    %8 = arith.addf %2, %7 : vector<128x1024xf32>
    %9 = vector.extract_strided_slice %0 {offsets = [0, 1], sizes = [128, 1], strides = [1, 1]} : vector<128x4xi32> to vector<128x1xi32>
    %10 = vector.broadcast %9 : vector<128x1xi32> to vector<128x1024xi32>
    %11 = arith.cmpi eq, %10, %1 : vector<128x1024xi32>
    %12 = arith.extui %11 : vector<128x1024xi1> to vector<128x1024xi32>
    %13 = arith.sitofp %12 : vector<128x1024xi32> to vector<128x1024xf32>
    %14 = arith.addf %8, %13 : vector<128x1024xf32>
    %15 = vector.extract_strided_slice %0 {offsets = [0, 2], sizes = [128, 1], strides = [1, 1]} : vector<128x4xi32> to vector<128x1xi32>
    %16 = vector.broadcast %15 : vector<128x1xi32> to vector<128x1024xi32>
    %17 = arith.cmpi eq, %16, %1 : vector<128x1024xi32>
    %18 = arith.extui %17 : vector<128x1024xi1> to vector<128x1024xi32>
    %19 = arith.sitofp %18 : vector<128x1024xi32> to vector<128x1024xf32>
    %20 = arith.addf %14, %19 : vector<128x1024xf32>
    %21 = vector.extract_strided_slice %0 {offsets = [0, 3], sizes = [128, 1], strides = [1, 1]} : vector<128x4xi32> to vector<128x1xi32>
    %22 = vector.broadcast %21 : vector<128x1xi32> to vector<128x1024xi32>
    %23 = arith.cmpi eq, %22, %1 : vector<128x1024xi32>
    %24 = arith.extui %23 : vector<128x1024xi1> to vector<128x1024xi32>
    %25 = arith.sitofp %24 : vector<128x1024xi32> to vector<128x1024xf32>
    %26 = arith.addf %20, %25 : vector<128x1024xf32>
    %27 = arith.truncf %26 : vector<128x1024xf32> to vector<128x1024xbf16>
    %c0_1 = arith.constant 0 : index
    %c0_2 = arith.constant 0 : index
    %28 = vector.load %arg2[%c0_1, %c0_2] : memref<1024x128xbf16, #tpu.memory_space<vmem>>, vector<1024x128xbf16>
    %cst_3 = arith.constant dense<0.000000e+00> : vector<128x128xf32>
    %29 = tpu.matmul %27, %28, %cst_3 {dimension_numbers = #tpu.dot_dimension_numbers<[1], [0], [0], [1], [0, 0, 1, 1], [], []>} : vector<128x1024xbf16>, vector<1024x128xbf16>, vector<128x128xf32> -> vector<128x128xf32>
    %30 = arith.truncf %29 : vector<128x128xf32> to vector<128x128xbf16>
    %c0_4 = arith.constant 0 : index
    %c0_5 = arith.constant 0 : index
    %31 = vector.load %arg3[%c0_4, %c0_5] : memref<128x1024xbf16, #tpu.memory_space<vmem>>, vector<128x1024xbf16>
    %cst_6 = arith.constant dense<0.000000e+00> : vector<128x1024xf32>
    %32 = tpu.matmul %30, %31, %cst_6 {dimension_numbers = #tpu.dot_dimension_numbers<[1], [0], [0], [1], [0, 0, 1, 1], [], []>} : vector<128x128xbf16>, vector<128x1024xbf16>, vector<128x1024xf32> -> vector<128x1024xf32>
    %c0_7 = arith.constant 0 : index
    %c0_8 = arith.constant 0 : index
    %33 = vector.load %arg4[%c0_7, %c0_8] : memref<1x1024xf32, #tpu.memory_space<vmem>>, vector<1x1024xf32>
    %34 = vector.broadcast %33 : vector<1x1024xf32> to vector<128x1024xf32>
    %35 = arith.addf %32, %34 : vector<128x1024xf32>
    %cst_9 = arith.constant dense<0xFF800000> : vector<128xf32>
    %36 = vector.multi_reduction <maximumf>, %35, %cst_9 [1] : vector<128x1024xf32> to vector<128xf32>
    %37 = vector.shape_cast %36 : vector<128xf32> to vector<128x1xf32>
    %38 = vector.broadcast %37 : vector<128x1xf32> to vector<128x1024xf32>
    %39 = arith.subf %35, %38 : vector<128x1024xf32>
    %40 = math.exp %39 : vector<128x1024xf32>
    %cst_10 = arith.constant dense<0.000000e+00> : vector<128xf32>
    %41 = vector.multi_reduction <add>, %40, %cst_10 [1] : vector<128x1024xf32> to vector<128xf32>
    %42 = vector.shape_cast %41 : vector<128xf32> to vector<128x1xf32>
    %43 = math.log %42 : vector<128x1xf32>
    %44 = vector.broadcast %43 : vector<128x1xf32> to vector<128x1024xf32>
    %45 = arith.subf %39, %44 : vector<128x1024xf32>
    %c0_11 = arith.constant 0 : index
    %c0_12 = arith.constant 0 : index
    %46 = vector.load %arg5[%c0_11, %c0_12] : memref<128x1024xf32, #tpu.memory_space<vmem>>, vector<128x1024xf32>
    tpu.vector_store %arg5[%c0_11, %c0_12], %45 {strides = array<i32>} : memref<128x1024xf32, #tpu.memory_space<vmem>>, vector<128x1024xf32>,
    return
  }
  func.func @transform_0(%arg0: i32) -> (i32, i32) {
    %c0_i32 = arith.constant 0 : i32
    %c0_i32_0 = arith.constant 0 : i32
    return %arg0, %c0_i32 : i32, i32
  }
  func.func @transform_1(%arg0: i32) -> (i32, i32) {
    %c0_i32 = arith.constant 0 : i32
    %c0_i32_0 = arith.constant 0 : i32
    %c0_i32_1 = arith.constant 0 : i32
    return %c0_i32, %c0_i32_0 : i32, i32
  }
  func.func @transform_2(%arg0: i32) -> (i32, i32) {
    %c0_i32 = arith.constant 0 : i32
    %c0_i32_0 = arith.constant 0 : i32
    %c0_i32_1 = arith.constant 0 : i32
    return %c0_i32, %c0_i32_0 : i32, i32
  }
  func.func @transform_3(%arg0: i32) -> (i32, i32) {
    %c0_i32 = arith.constant 0 : i32
    %c0_i32_0 = arith.constant 0 : i32
    %c0_i32_1 = arith.constant 0 : i32
    return %c0_i32, %c0_i32_0 : i32, i32
  }
  func.func @transform_4(%arg0: i32) -> (i32, i32) {
    %c0_i32 = arith.constant 0 : i32
    %c0_i32_0 = arith.constant 0 : i32
    return %arg0, %c0_i32 : i32, i32
  }
}

</mosaic_0001>

<llo_original>
// kernel: cbow_forward_prepared.1
$region0: #{cbow_forward_prepared.1}
  #allocation0 [shape = 'u32[]', space=smem, size = 0x4, offset = 0x4, fixed_abs, tag = 'smem constant byte address 0x4 - core index']
  #allocation1 [shape = 'u32[144,128]{1,0:T(1,128)}', space=vmem, size = 0x12000, scoped, tag = 'internal scratch']
  %s0 = inlined_call_operand.vmem [shape: s32[256,4], index: 0, kind: input, shape index: {}]
  %s1 = inlined_call_operand.hbm [shape: bf16[1024,128], index: 1, kind: input, shape index: {}]
  %s2 = inlined_call_operand.hbm [shape: bf16[128,1024], index: 2, kind: input, shape index: {}]
  %s3 = inlined_call_operand.vmem [shape: f32[1,1024], index: 3, kind: input, shape index: {}]
  %s4 = inlined_call_operand.vmem [shape: f32[256,1024], index: 4, kind: output, shape index: {}]
  %s5 = sld [smem:[#allocation0]]
  $region57: #{cbow_forward_prepared.1} parent=0
    _
  %s7 = ssub.s32 1, %s5
  %s8 = scalar_select 0, %s7, %s5
  $region1: #{cbow_forward_prepared.1} parent=0
    #allocation2 [shape = 'u8[262144]{0}', space=vmem, size = 0x40000, scoped, tag = 'input window, operand 1, single buffered']
    #allocation3 [shape = 's32[2]{0}', space=sflag, size = 0x8, scoped, tag = 'scoped memory for cbow_forward_prepared.1']
    #allocation4 [shape = 'u8[262144]{0}', space=vmem, size = 0x40000, scoped, tag = 'input window, operand 2, single buffered']
    #allocation5 [shape = 's32[1]{0}', space=sflag, size = 0x4, scoped, tag = 'scoped memory for cbow_forward_prepared.1']
    %9 = vsyncpa [#allocation3], 0
    %10 = vsyncpa [#allocation5], 0
    loop: start=0, step=1, limit=4
    $region2: #{cbow_forward_prepared.1} parent=1 // loop_pre_header
      _
    $region3: #{cbow_forward_prepared.1} parent=1 // loop_header
      %s12 = sphi 0, %s16
      %p13 = scmp.ge.s32.totalorder %s12, 4
      %s22 = sphi 0, %s24
      %s25 = sphi 0, %s22
      %s26 = sphi 0, %s25
      %s42 = sphi 0, %s26
      %s46 = sphi 0, %s46
      %s48 = sphi 0, %s46
      %s49 = sphi 0, %s48
      %s63 = sphi 0, %s49
      %s67 = sphi 0, %s67
      %s69 = sphi 0, %s67
      %s70 = sphi 0, %s69
      %s84 = sphi 0, %s70
      %s88 = sphi 0, %s88
      %s90 = sphi 0, %s88
      %s91 = sphi 0, %s90
      %s105 = sphi 0, %s91
      %s111 = sphi 0, %s113
      %s114 = sphi 0, %s111
      %s115 = sphi 0, %s114
      %s131 = sphi 0, %s115
    $region4: #{cbow_forward_prepared.1} parent=1 // loop_header_branch
      %15 = sbr.rel (%p13) target = $region8
    $region5: #{cbow_forward_prepared.1} parent=1 // loop_body
      %s17 = ssub.s32 %s12, 1
      %s18 = ssub.s32 %s12, 2
      %s19 = sadd.s32 %s12, 1
      %s20 = ssub.s32 %s12, %s19
      %p21 = scmp.eq.s32.totalorder %s20, 0
      %s23 = sadd.s32 %s22, 1
      %s24 = scalar_select %p21, %s22, %s23
      %p27 = pneg %p21
      %p28 = scmp.eq.s32.totalorder %s12, 1
      %p29 = por %p27, %p28
      %p30 = scmp.ne.s32.totalorder %s22, %s25
      %p31 = scmp.eq.s32.totalorder %s12, 0
      %p32 = por %p30, %p31
      %p33 = scmp.ne.s32.totalorder %s22, %s25
      %p34 = scmp.eq.s32.totalorder %s17, 1
      %p35 = por %p33, %p34
      %p36 = scmp.ne.s32.totalorder %s25, %s26
      %p37 = scmp.eq.s32.totalorder %s17, 0
      %p38 = por %p36, %p37
      %p39 = scmp.ne.s32.totalorder %s25, %s26
      %p40 = scmp.eq.s32.totalorder %s18, 1
      %p41 = por %p39, %p40
      %p43 = scmp.ne.s32.totalorder %s26, %s42
      %p44 = scmp.eq.s32.totalorder %s18, 0
      %p45 = por %p43, %p44
      %s47 = sadd.s32 %s46, 1
      %p50 = scmp.eq.s32.totalorder %s12, 1
      %p51 = scmp.ne.s32.totalorder %s46, %s48
      %p52 = scmp.eq.s32.totalorder %s12, 0
      %p53 = por %p51, %p52
      %p54 = scmp.ne.s32.totalorder %s46, %s48
      %p55 = scmp.eq.s32.totalorder %s17, 1
      %p56 = por %p54, %p55
      %p57 = scmp.ne.s32.totalorder %s48, %s49
      %p58 = scmp.eq.s32.totalorder %s17, 0
      %p59 = por %p57, %p58
      %p60 = scmp.ne.s32.totalorder %s48, %s49
      %p61 = scmp.eq.s32.totalorder %s18, 1
      %p62 = por %p60, %p61
      %p64 = scmp.ne.s32.totalorder %s49, %s63
      %p65 = scmp.eq.s32.totalorder %s18, 0
      %p66 = por %p64, %p65
      %s68 = sadd.s32 %s67, 1
      %p71 = scmp.eq.s32.totalorder %s12, 1
      %p72 = scmp.ne.s32.totalorder %s67, %s69
      %p73 = scmp.eq.s32.totalorder %s12, 0
      %p74 = por %p72, %p73
      %p75 = scmp.ne.s32.totalorder %s67, %s69
      %p76 = scmp.eq.s32.totalorder %s17, 1
      %p77 = por %p75, %p76
      %p78 = scmp.ne.s32.totalorder %s69, %s70
      %p79 = scmp.eq.s32.totalorder %s17, 0
      %p80 = por %p78, %p79
      %p81 = scmp.ne.s32.totalorder %s69, %s70
      %p82 = scmp.eq.s32.totalorder %s18, 1
      %p83 = por %p81, %p82
      %p85 = scmp.ne.s32.totalorder %s70, %s84
      %p86 = scmp.eq.s32.totalorder %s18, 0
      %p87 = por %p85, %p86
      %s89 = sadd.s32 %s88, 1
      %p92 = scmp.eq.s32.totalorder %s12, 1
      %p93 = scmp.ne.s32.totalorder %s88, %s90
      %p94 = scmp.eq.s32.totalorder %s12, 0
      %p95 = por %p93, %p94
      %p96 = scmp.ne.s32.totalorder %s88, %s90
      %p97 = scmp.eq.s32.totalorder %s17, 1
      %p98 = por %p96, %p97
      %p99 = scmp.ne.s32.totalorder %s90, %s91
      %p100 = scmp.eq.s32.totalorder %s17, 0
      %p101 = por %p99, %p100
      %p102 = scmp.ne.s32.totalorder %s90, %s91
      %p103 = scmp.eq.s32.totalorder %s18, 1
      %p104 = por %p102, %p103
      %p106 = scmp.ne.s32.totalorder %s91, %s105
      %p107 = scmp.eq.s32.totalorder %s18, 0
      %p108 = por %p106, %p107
      %s109 = ssub.s32 %s12, %s19
      %p110 = scmp.eq.s32.totalorder %s109, 0
      %s112 = sadd.s32 %s111, 1
      %s113 = scalar_select %p110, %s111, %s112
      %p116 = pneg %p110
      %p117 = scmp.eq.s32.totalorder %s12, 1
      %p118 = por %p116, %p117
      %p119 = scmp.ne.s32.totalorder %s111, %s114
      %p120 = scmp.eq.s32.totalorder %s12, 0
      %p121 = por %p119, %p120
      %p122 = scmp.ne.s32.totalorder %s111, %s114
      %p123 = scmp.eq.s32.totalorder %s17, 1
      %p124 = por %p122, %p123
      %p125 = scmp.ne.s32.totalorder %s114, %s115
      %p126 = scmp.eq.s32.totalorder %s17, 0
      %p127 = por %p125, %p126
      %p128 = scmp.ne.s32.totalorder %s114, %s115
      %p129 = scmp.eq.s32.totalorder %s18, 1
      %p130 = por %p128, %p129
      %p132 = scmp.ne.s32.totalorder %s115, %s131
      %p133 = scmp.eq.s32.totalorder %s18, 0
      %p134 = por %p132, %p133
      %p135 = scmp.le.s32.totalorder 1, %s12
      %p136 = scmp.lt.s32.totalorder %s12, 3
      %p137 = pnand %p135, %p136
      %p138 = pneg %p137
      // Predicated region
      $region9: #{cbow_forward_prepared.1} parent=5 // pred_check
        _
      $region10: #{cbow_forward_prepared.1} parent=5 // pred_check_branch
        %140 = sbr.rel (%p137) target = $region12
      $region11: #{cbow_forward_prepared.1} parent=5 // pred_region
        %s141 = ssub.s32 %s12, 1
        // Predicated region
        $region13: #{cbow_forward_prepared.1} parent=11 // pred_check
          %p142 = pneg %p59
        $region14: #{cbow_forward_prepared.1} parent=11 // pred_check_branch
          %144 = sbr.rel (%p142) target = $region16
        $region15: #{cbow_forward_prepared.1} parent=11 // pred_region
          %s146 = ssub.s32 8192, 8192
          %147 = vsyncadd [#allocation3], %s146
          %s148 = sshll.u32 [#allocation2], 4
          %s149 = int_to_ptr.vmem [resolvable:$true] %s148
          %154 = dma.hbm_to_vmem [thread:$0]  %s1, 8192, %s149, [#allocation3], 64, 64, 4
        $region16: #{cbow_forward_prepared.1} parent=11 // pred_fallthru
          _
        // Predicated region
        $region17: #{cbow_forward_prepared.1} parent=11 // pred_check
          %p155 = pneg %p80
        $region18: #{cbow_forward_prepared.1} parent=11 // pred_check_branch
          %157 = sbr.rel (%p155) target = $region20
        $region19: #{cbow_forward_prepared.1} parent=11 // pred_region
          %s159 = ssub.s32 8192, 8192
          %160 = vsyncadd [#allocation5], %s159
          %s161 = sshll.u32 [#allocation4], 4
          %s162 = int_to_ptr.vmem [resolvable:$true] %s161
          %167 = dma.hbm_to_vmem [thread:$0]  %s2, 8192, %s162, [#allocation5], 512, 512, 32
        $region20: #{cbow_forward_prepared.1} parent=11 // pred_fallthru
          _
        // Predicated region
        $region21: #{cbow_forward_prepared.1} parent=11 // pred_check
          %p168 = pneg %p101
        $region22: #{cbow_forward_prepared.1} parent=11 // pred_check_branch
          %170 = sbr.rel (%p168) target = $region24
        $region23: #{cbow_forward_prepared.1} parent=11 // pred_region
          _
        $region24: #{cbow_forward_prepared.1} parent=11 // pred_fallthru
          _
      $region12: #{cbow_forward_prepared.1} parent=5 // pred_fallthru
        _
      %p171 = scmp.lt.s32.totalorder %s12, 2
      // Predicated region
      $region25: #{cbow_forward_prepared.1} parent=5 // pred_check
        %p172 = pneg %p171
      $region26: #{cbow_forward_prepared.1} parent=5 // pred_check_branch
        %174 = sbr.rel (%p172) target = $region28
      $region27: #{cbow_forward_prepared.1} parent=5 // pred_region
        // Predicated region
        $region29: #{cbow_forward_prepared.1} parent=27 // pred_check
          %p175 = pneg %p32
        $region30: #{cbow_forward_prepared.1} parent=27 // pred_check_branch
          %177 = sbr.rel (%p175) target = $region32
        $region31: #{cbow_forward_prepared.1} parent=27 // pred_region
          %s178 = smul.u32 16, %s12
          %p179 = scmp.lt.s32.totalorder %s178, 31
          %s180 = scalar_select %p179, %s178, 31
          %s181 = smul.addr %s180, 8
          %s182 = scalar_lea.vmem %s0, %s181
          %s183 = smul.u32 16, %s12
        $region32: #{cbow_forward_prepared.1} parent=27 // pred_fallthru
          _
      $region28: #{cbow_forward_prepared.1} parent=5 // pred_fallthru
        _
      %p184 = scmp.le.s32.totalorder 1, %s12
      %p185 = scmp.lt.s32.totalorder %s12, 3
      %p186 = pnand %p184, %p185
      %p187 = pneg %p186
      // Predicated region
      $region33: #{cbow_forward_prepared.1} parent=5 // pred_check
        _
      $region34: #{cbow_forward_prepared.1} parent=5 // pred_check_branch
        %189 = sbr.rel (%p186) target = $region36
      $region35: #{cbow_forward_prepared.1} parent=5 // pred_region
        %s190 = ssub.s32 %s12, 1
        // Predicated region
        $region37: #{cbow_forward_prepared.1} parent=35 // pred_check
          %p191 = pneg %p59
        $region38: #{cbow_forward_prepared.1} parent=35 // pred_check_branch
          %193 = sbr.rel (%p191) target = $region40
        $region39: #{cbow_forward_prepared.1} parent=35 // pred_region
          %194 = dma.done [#allocation3], 8192
        $region40: #{cbow_forward_prepared.1} parent=35 // pred_fallthru
          _
        // Predicated region
        $region41: #{cbow_forward_prepared.1} parent=35 // pred_check
          %p195 = pneg %p80
        $region42: #{cbow_forward_prepared.1} parent=35 // pred_check_branch
          %197 = sbr.rel (%p195) target = $region44
        $region43: #{cbow_forward_prepared.1} parent=35 // pred_region
          %198 = dma.done [#allocation5], 8192
        $region44: #{cbow_forward_prepared.1} parent=35 // pred_fallthru
          _
        %s199 = smul.u32 16, %s17
        %p200 = scmp.lt.s32.totalorder %s199, 31
        %s201 = scalar_select %p200, %s199, 31
        %s202 = smul.addr %s201, 8
        %s203 = scalar_lea.vmem %s0, %s202
        %p204 = pneg %p38
        %p205 = pneg %p35
        %p206 = pneg %p59
        %p207 = pneg %p56
        %p208 = pneg %p80
        %p209 = pneg %p77
        %p210 = pneg %p101
        %p211 = pneg %p98
        %p212 = pneg %p127
        %p213 = pneg %p124
        %s214 = smul.u32 16, %s17
        %p215 = scmp.lt.s32.totalorder %s214, 31
        %s216 = scalar_select %p215, %s214, 31
        %s217 = smul.addr %s216, 8
        %s218 = smul.addr %s217, 8
        %s219 = scalar_lea.vmem %s4, %s218
        %s220 = smul.u32 16, %s17
        %p221 = scmp.lt.s32.totalorder %s220, 31
        %s222 = scalar_select %p221, %s220, 31
        %s223 = smul.addr %s222, 8
        %s224 = scalar_lea.vmem %s0, %s223
        %s225 = smul.u32 16, %s17
        %s226 = smul.u32 16, %s17
        %p227 = scmp.lt.s32.totalorder %s226, 31
        %s228 = scalar_select %p227, %s226, 31
        %s229 = smul.addr %s228, 8
        %s230 = smul.addr %s229, 8
        %s231 = scalar_lea.vmem %s4, %s230
        %s232 = smul.u32 16, %s17
        %v234 = vld [vmem:[%s224] sm:$0xff]
        %v235 = vld [vmem:[%s224 + $0x8] sm:$0xff]
        %v236 = vld [vmem:[%s224 + $0x10] sm:$0xff]
        %v237 = vld [vmem:[%s224 + $0x18] sm:$0xff]
        %v238 = vld [vmem:[%s224 + $0x20] sm:$0xff]
        %v239 = vld [vmem:[%s224 + $0x28] sm:$0xff]
        %v240 = vld [vmem:[%s224 + $0x30] sm:$0xff]
        %v241 = vld [vmem:[%s224 + $0x38] sm:$0xff]
        %v242 = vld [vmem:[%s224 + $0x40] sm:$0xff]
        %v243 = vld [vmem:[%s224 + $0x48] sm:$0xff]
        %v244 = vld [vmem:[%s224 + $0x50] sm:$0xff]
        %v245 = vld [vmem:[%s224 + $0x58] sm:$0xff]
        %v246 = vld [vmem:[%s224 + $0x60] sm:$0xff]
        %v247 = vld [vmem:[%s224 + $0x68] sm:$0xff]
        %v248 = vld [vmem:[%s224 + $0x70] sm:$0xff]
        %v249 = vld [vmem:[%s224 + $0x78] sm:$0xff]
        %v250 = vlaneseq
        %v251 = vand.u32 %v250, 127
        %v252 = vadd.s32 %v251, 128
        %v253 = vadd.s32 %v251, 256
        %v254 = vadd.s32 %v251, 384
        %v255 = vadd.s32 %v251, 512
        %v256 = vadd.s32 %v251, 640
        %v257 = vadd.s32 %v251, 768
        %v258 = vadd.s32 %v251, 896
        %259 = vset.pattern.permute.xlu0 0
        %260 = vperm.xlu0 %259, %v234
        %v261 = vpop.permute.xlu0 %260
        %262 = vset.pattern.permute.xlu0 0
        %263 = vperm.xlu0 %262, %v235
        %v264 = vpop.permute.xlu0 %263
        %265 = vset.pattern.permute.xlu0 0
        %266 = vperm.xlu0 %265, %v236
        %v267 = vpop.permute.xlu0 %266
        %268 = vset.pattern.permute.xlu0 0
        %269 = vperm.xlu0 %268, %v237
        %v270 = vpop.permute.xlu0 %269
        %271 = vset.pattern.permute.xlu0 0
        %272 = vperm.xlu0 %271, %v238
        %v273 = vpop.permute.xlu0 %272
        %274 = vset.pattern.permute.xlu0 0
        %275 = vperm.xlu0 %274, %v239
        %v276 = vpop.permute.xlu0 %275
        %277 = vset.pattern.permute.xlu0 0
        %278 = vperm.xlu0 %277, %v240
        %v279 = vpop.permute.xlu0 %278
        %280 = vset.pattern.permute.xlu0 0
        %281 = vperm.xlu0 %280, %v241
        %v282 = vpop.permute.xlu0 %281
        %283 = vset.pattern.permute.xlu0 0
        %284 = vperm.xlu0 %283, %v242
        %v285 = vpop.permute.xlu0 %284
        %286 = vset.pattern.permute.xlu0 0
        %287 = vperm.xlu0 %286, %v243
        %v288 = vpop.permute.xlu0 %287
        %289 = vset.pattern.permute.xlu0 0
        %290 = vperm.xlu0 %289, %v244
        %v291 = vpop.permute.xlu0 %290
        %292 = vset.pattern.permute.xlu0 0
        %293 = vperm.xlu0 %292, %v245
        %v294 = vpop.permute.xlu0 %293
        %295 = vset.pattern.permute.xlu0 0
        %296 = vperm.xlu0 %295, %v246
        %v297 = vpop.permute.xlu0 %296
        %298 = vset.pattern.permute.xlu0 0
        %299 = vperm.xlu0 %298, %v247
        %v300 = vpop.permute.xlu0 %299
        %301 = vset.pattern.permute.xlu0 0
        %302 = vperm.xlu0 %301, %v248
        %v303 = vpop.permute.xlu0 %302
        %304 = vset.pattern.permute.xlu0 0
        %305 = vperm.xlu0 %304, %v249
        %v306 = vpop.permute.xlu0 %305
        %vm307 = vcmp.eq.s32.totalorder %v261, %v251
        %vm308 = vcmp.eq.s32.totalorder %v261, %v252
        %vm309 = vcmp.eq.s32.totalorder %v261, %v253
        %vm310 = vcmp.eq.s32.totalorder %v261, %v254
        %vm311 = vcmp.eq.s32.totalorder %v261, %v255
        %vm312 = vcmp.eq.s32.totalorder %v261, %v256
        %vm313 = vcmp.eq.s32.totalorder %v261, %v257
        %vm314 = vcmp.eq.s32.totalorder %v261, %v258
        %vm315 = vcmp.eq.s32.totalorder %v264, %v251
        %vm316 = vcmp.eq.s32.totalorder %v264, %v252
        %vm317 = vcmp.eq.s32.totalorder %v264, %v253
        %vm318 = vcmp.eq.s32.totalorder %v264, %v254
        %vm319 = vcmp.eq.s32.totalorder %v264, %v255
        %vm320 = vcmp.eq.s32.totalorder %v264, %v256
        %vm321 = vcmp.eq.s32.totalorder %v264, %v257
        %vm322 = vcmp.eq.s32.totalorder %v264, %v258
        %vm323 = vcmp.eq.s32.totalorder %v267, %v251
        %vm324 = vcmp.eq.s32.totalorder %v267, %v252
        %vm325 = vcmp.eq.s32.totalorder %v267, %v253
        %vm326 = vcmp.eq.s32.totalorder %v267, %v254
        %vm327 = vcmp.eq.s32.totalorder %v267, %v255
        %vm328 = vcmp.eq.s32.totalorder %v267, %v256
        %vm329 = vcmp.eq.s32.totalorder %v267, %v257
        %vm330 = vcmp.eq.s32.totalorder %v267, %v258
        %vm331 = vcmp.eq.s32.totalorder %v270, %v251
        %vm332 = vcmp.eq.s32.totalorder %v270, %v252
        %vm333 = vcmp.eq.s32.totalorder %v270, %v253
        %vm334 = vcmp.eq.s32.totalorder %v270, %v254
        %vm335 = vcmp.eq.s32.totalorder %v270, %v255
        %vm336 = vcmp.eq.s32.totalorder %v270, %v256
        %vm337 = vcmp.eq.s32.totalorder %v270, %v257
        %vm338 = vcmp.eq.s32.totalorder %v270, %v258
        %vm339 = vcmp.eq.s32.totalorder %v273, %v251
        %vm340 = vcmp.eq.s32.totalorder %v273, %v252
        %vm341 = vcmp.eq.s32.totalorder %v273, %v253
        %vm342 = vcmp.eq.s32.totalorder %v273, %v254
        %vm343 = vcmp.eq.s32.totalorder %v273, %v255
        %vm344 = vcmp.eq.s32.totalorder %v273, %v256
        %vm345 = vcmp.eq.s32.totalorder %v273, %v257
        %vm346 = vcmp.eq.s32.totalorder %v273, %v258
        %vm347 = vcmp.eq.s32.totalorder %v276, %v251
        %vm348 = vcmp.eq.s32.totalorder %v276, %v252
        %vm349 = vcmp.eq.s32.totalorder %v276, %v253
        %vm350 = vcmp.eq.s32.totalorder %v276, %v254
        %vm351 = vcmp.eq.s32.totalorder %v276, %v255
        %vm352 = vcmp.eq.s32.totalorder %v276, %v256
        %vm353 = vcmp.eq.s32.totalorder %v276, %v257
        %vm354 = vcmp.eq.s32.totalorder %v276, %v258
        %vm355 = vcmp.eq.s32.totalorder %v279, %v251
        %vm356 = vcmp.eq.s32.totalorder %v279, %v252
        %vm357 = vcmp.eq.s32.totalorder %v279, %v253
        %vm358 = vcmp.eq.s32.totalorder %v279, %v254
        %vm359 = vcmp.eq.s32.totalorder %v279, %v255
        %vm360 = vcmp.eq.s32.totalorder %v279, %v256
        %vm361 = vcmp.eq.s32.totalorder %v279, %v257
        %vm362 = vcmp.eq.s32.totalorder %v279, %v258
        %vm363 = vcmp.eq.s32.totalorder %v282, %v251
        %vm364 = vcmp.eq.s32.totalorder %v282, %v252
        %vm365 = vcmp.eq.s32.totalorder %v282, %v253
        %vm366 = vcmp.eq.s32.totalorder %v282, %v254
        %vm367 = vcmp.eq.s32.totalorder %v282, %v255
        %vm368 = vcmp.eq.s32.totalorder %v282, %v256
        %vm369 = vcmp.eq.s32.totalorder %v282, %v257
        %vm370 = vcmp.eq.s32.totalorder %v282, %v258
        %vm371 = vcmp.eq.s32.totalorder %v285, %v251
        %vm372 = vcmp.eq.s32.totalorder %v285, %v252
        %vm373 = vcmp.eq.s32.totalorder %v285, %v253
        %vm374 = vcmp.eq.s32.totalorder %v285, %v254
        %vm375 = vcmp.eq.s32.totalorder %v285, %v255
        %vm376 = vcmp.eq.s32.totalorder %v285, %v256
        %vm377 = vcmp.eq.s32.totalorder %v285, %v257
        %vm378 = vcmp.eq.s32.totalorder %v285, %v258
        %vm379 = vcmp.eq.s32.totalorder %v288, %v251
        %vm380 = vcmp.eq.s32.totalorder %v288, %v252
        %vm381 = vcmp.eq.s32.totalorder %v288, %v253
        %vm382 = vcmp.eq.s32.totalorder %v288, %v254
        %vm383 = vcmp.eq.s32.totalorder %v288, %v255
        %vm384 = vcmp.eq.s32.totalorder %v288, %v256
        %vm385 = vcmp.eq.s32.totalorder %v288, %v257
        %vm386 = vcmp.eq.s32.totalorder %v288, %v258
        %vm387 = vcmp.eq.s32.totalorder %v291, %v251
        %vm388 = vcmp.eq.s32.totalorder %v291, %v252
        %vm389 = vcmp.eq.s32.totalorder %v291, %v253
        %vm390 = vcmp.eq.s32.totalorder %v291, %v254
        %vm391 = vcmp.eq.s32.totalorder %v291, %v255
        %vm392 = vcmp.eq.s32.totalorder %v291, %v256
        %vm393 = vcmp.eq.s32.totalorder %v291, %v257
        %vm394 = vcmp.eq.s32.totalorder %v291, %v258
        %vm395 = vcmp.eq.s32.totalorder %v294, %v251
        %vm396 = vcmp.eq.s32.totalorder %v294, %v252
        %vm397 = vcmp.eq.s32.totalorder %v294, %v253
        %vm398 = vcmp.eq.s32.totalorder %v294, %v254
        %vm399 = vcmp.eq.s32.totalorder %v294, %v255
        %vm400 = vcmp.eq.s32.totalorder %v294, %v256
        %vm401 = vcmp.eq.s32.totalorder %v294, %v257
        %vm402 = vcmp.eq.s32.totalorder %v294, %v258
        %vm403 = vcmp.eq.s32.totalorder %v297, %v251
        %vm404 = vcmp.eq.s32.totalorder %v297, %v252
        %vm405 = vcmp.eq.s32.totalorder %v297, %v253
        %vm406 = vcmp.eq.s32.totalorder %v297, %v254
        %vm407 = vcmp.eq.s32.totalorder %v297, %v255
        %vm408 = vcmp.eq.s32.totalorder %v297, %v256
        %vm409 = vcmp.eq.s32.totalorder %v297, %v257
        %vm410 = vcmp.eq.s32.totalorder %v297, %v258
        %vm411 = vcmp.eq.s32.totalorder %v300, %v251
        %vm412 = vcmp.eq.s32.totalorder %v300, %v252
        %vm413 = vcmp.eq.s32.totalorder %v300, %v253
        %vm414 = vcmp.eq.s32.totalorder %v300, %v254
        %vm415 = vcmp.eq.s32.totalorder %v300, %v255
        %vm416 = vcmp.eq.s32.totalorder %v300, %v256
        %vm417 = vcmp.eq.s32.totalorder %v300, %v257
        %vm418 = vcmp.eq.s32.totalorder %v300, %v258
        %vm419 = vcmp.eq.s32.totalorder %v303, %v251
        %vm420 = vcmp.eq.s32.totalorder %v303, %v252
        %vm421 = vcmp.eq.s32.totalorder %v303, %v253
        %vm422 = vcmp.eq.s32.totalorder %v303, %v254
        %vm423 = vcmp.eq.s32.totalorder %v303, %v255
        %vm424 = vcmp.eq.s32.totalorder %v303, %v256
        %vm425 = vcmp.eq.s32.totalorder %v303, %v257
        %vm426 = vcmp.eq.s32.totalorder %v303, %v258
        %vm427 = vcmp.eq.s32.totalorder %v306, %v251
        %vm428 = vcmp.eq.s32.totalorder %v306, %v252
        %vm429 = vcmp.eq.s32.totalorder %v306, %v253
        %vm430 = vcmp.eq.s32.totalorder %v306, %v254
        %vm431 = vcmp.eq.s32.totalorder %v306, %v255
        %vm432 = vcmp.eq.s32.totalorder %v306, %v256
        %vm433 = vcmp.eq.s32.totalorder %v306, %v257
        %vm434 = vcmp.eq.s32.totalorder %v306, %v258
        %v435 = vsel %vm307, 1, 0
        %v436 = vsel %vm308, 1, 0
        %v437 = vsel %vm309, 1, 0
        %v438 = vsel %vm310, 1, 0
        %v439 = vsel %vm311, 1, 0
        %v440 = vsel %vm312, 1, 0
        %v441 = vsel %vm313, 1, 0
        %v442 = vsel %vm314, 1, 0
        %v443 = vsel %vm315, 1, 0
        %v444 = vsel %vm316, 1, 0
        %v445 = vsel %vm317, 1, 0
        %v446 = vsel %vm318, 1, 0
        %v447 = vsel %vm319, 1, 0
        %v448 = vsel %vm320, 1, 0
        %v449 = vsel %vm321, 1, 0
        %v450 = vsel %vm322, 1, 0
        %v451 = vsel %vm323, 1, 0
        %v452 = vsel %vm324, 1, 0
        %v453 = vsel %vm325, 1, 0
        %v454 = vsel %vm326, 1, 0
        %v455 = vsel %vm327, 1, 0
        %v456 = vsel %vm328, 1, 0
        %v457 = vsel %vm329, 1, 0
        %v458 = vsel %vm330, 1, 0
        %v459 = vsel %vm331, 1, 0
        %v460 = vsel %vm332, 1, 0
        %v461 = vsel %vm333, 1, 0
        %v462 = vsel %vm334, 1, 0
        %v463 = vsel %vm335, 1, 0
        %v464 = vsel %vm336, 1, 0
        %v465 = vsel %vm337, 1, 0
        %v466 = vsel %vm338, 1, 0
        %v467 = vsel %vm339, 1, 0
        %v468 = vsel %vm340, 1, 0
        %v469 = vsel %vm341, 1, 0
        %v470 = vsel %vm342, 1, 0
        %v471 = vsel %vm343, 1, 0
        %v472 = vsel %vm344, 1, 0
        %v473 = vsel %vm345, 1, 0
        %v474 = vsel %vm346, 1, 0
        %v475 = vsel %vm347, 1, 0
        %v476 = vsel %vm348, 1, 0
        %v477 = vsel %vm349, 1, 0
        %v478 = vsel %vm350, 1, 0
        %v479 = vsel %vm351, 1, 0
        %v480 = vsel %vm352, 1, 0
        %v481 = vsel %vm353, 1, 0
        %v482 = vsel %vm354, 1, 0
        %v483 = vsel %vm355, 1, 0
        %v484 = vsel %vm356, 1, 0
        %v485 = vsel %vm357, 1, 0
        %v486 = vsel %vm358, 1, 0
        %v487 = vsel %vm359, 1, 0
        %v488 = vsel %vm360, 1, 0
        %v489 = vsel %vm361, 1, 0
        %v490 = vsel %vm362, 1, 0
        %v491 = vsel %vm363, 1, 0
        %v492 = vsel %vm364, 1, 0
        %v493 = vsel %vm365, 1, 0
        %v494 = vsel %vm366, 1, 0
        %v495 = vsel %vm367, 1, 0
        %v496 = vsel %vm368, 1, 0
        %v497 = vsel %vm369, 1, 0
        %v498 = vsel %vm370, 1, 0
        %v499 = vsel %vm371, 1, 0
        %v500 = vsel %vm372, 1, 0
        %v501 = vsel %vm373, 1, 0
        %v502 = vsel %vm374, 1, 0
        %v503 = vsel %vm375, 1, 0
        %v504 = vsel %vm376, 1, 0
        %v505 = vsel %vm377, 1, 0
        %v506 = vsel %vm378, 1, 0
        %v507 = vsel %vm379, 1, 0
        %v508 = vsel %vm380, 1, 0
        %v509 = vsel %vm381, 1, 0
        %v510 = vsel %vm382, 1, 0
        %v511 = vsel %vm383, 1, 0
        %v512 = vsel %vm384, 1, 0
        %v513 = vsel %vm385, 1, 0
        %v514 = vsel %vm386, 1, 0
        %v515 = vsel %vm387, 1, 0
        %v516 = vsel %vm388, 1, 0
        %v517 = vsel %vm389, 1, 0
        %v518 = vsel %vm390, 1, 0
        %v519 = vsel %vm391, 1, 0
        %v520 = vsel %vm392, 1, 0
        %v521 = vsel %vm393, 1, 0
        %v522 = vsel %vm394, 1, 0
        %v523 = vsel %vm395, 1, 0
        %v524 = vsel %vm396, 1, 0
        %v525 = vsel %vm397, 1, 0
        %v526 = vsel %vm398, 1, 0
        %v527 = vsel %vm399, 1, 0
        %v528 = vsel %vm400, 1, 0
        %v529 = vsel %vm401, 1, 0
        %v530 = vsel %vm402, 1, 0
        %v531 = vsel %vm403, 1, 0
        %v532 = vsel %vm404, 1, 0
        %v533 = vsel %vm405, 1, 0
        %v534 = vsel %vm406, 1, 0
        %v535 = vsel %vm407, 1, 0
        %v536 = vsel %vm408, 1, 0
        %v537 = vsel %vm409, 1, 0
        %v538 = vsel %vm410, 1, 0
        %v539 = vsel %vm411, 1, 0
        %v540 = vsel %vm412, 1, 0
        %v541 = vsel %vm413, 1, 0
        %v542 = vsel %vm414, 1, 0
        %v543 = vsel %vm415, 1, 0
        %v544 = vsel %vm416, 1, 0
        %v545 = vsel %vm417, 1, 0
        %v546 = vsel %vm418, 1, 0
        %v547 = vsel %vm419, 1, 0
        %v548 = vsel %vm420, 1, 0
        %v549 = vsel %vm421, 1, 0
        %v550 = vsel %vm422, 1, 0
        %v551 = vsel %vm423, 1, 0
        %v552 = vsel %vm424, 1, 0
        %v553 = vsel %vm425, 1, 0
        %v554 = vsel %vm426, 1, 0
        %v555 = vsel %vm427, 1, 0
        %v556 = vsel %vm428, 1, 0
        %v557 = vsel %vm429, 1, 0
        %v558 = vsel %vm430, 1, 0
        %v559 = vsel %vm431, 1, 0
        %v560 = vsel %vm432, 1, 0
        %v561 = vsel %vm433, 1, 0
        %v562 = vsel %vm434, 1, 0
        %v563 = vcvt.s32.f32 %v435
        %v564 = vcvt.s32.f32 %v436
        %v565 = vcvt.s32.f32 %v437
        %v566 = vcvt.s32.f32 %v438
        %v567 = vcvt.s32.f32 %v439
        %v568 = vcvt.s32.f32 %v440
        %v569 = vcvt.s32.f32 %v441
        %v570 = vcvt.s32.f32 %v442
        %v571 = vcvt.s32.f32 %v443
        %v572 = vcvt.s32.f32 %v444
        %v573 = vcvt.s32.f32 %v445
        %v574 = vcvt.s32.f32 %v446
        %v575 = vcvt.s32.f32 %v447
        %v576 = vcvt.s32.f32 %v448
        %v577 = vcvt.s32.f32 %v449
        %v578 = vcvt.s32.f32 %v450
        %v579 = vcvt.s32.f32 %v451
        %v580 = vcvt.s32.f32 %v452
        %v581 = vcvt.s32.f32 %v453
        %v582 = vcvt.s32.f32 %v454
        %v583 = vcvt.s32.f32 %v455
        %v584 = vcvt.s32.f32 %v456
        %v585 = vcvt.s32.f32 %v457
        %v586 = vcvt.s32.f32 %v458
        %v587 = vcvt.s32.f32 %v459
        %v588 = vcvt.s32.f32 %v460
        %v589 = vcvt.s32.f32 %v461
        %v590 = vcvt.s32.f32 %v462
        %v591 = vcvt.s32.f32 %v463
        %v592 = vcvt.s32.f32 %v464
        %v593 = vcvt.s32.f32 %v465
        %v594 = vcvt.s32.f32 %v466
        %v595 = vcvt.s32.f32 %v467
        %v596 = vcvt.s32.f32 %v468
        %v597 = vcvt.s32.f32 %v469
        %v598 = vcvt.s32.f32 %v470
        %v599 = vcvt.s32.f32 %v471
        %v600 = vcvt.s32.f32 %v472
        %v601 = vcvt.s32.f32 %v473
        %v602 = vcvt.s32.f32 %v474
        %v603 = vcvt.s32.f32 %v475
        %v604 = vcvt.s32.f32 %v476
        %v605 = vcvt.s32.f32 %v477
        %v606 = vcvt.s32.f32 %v478
        %v607 = vcvt.s32.f32 %v479
        %v608 = vcvt.s32.f32 %v480
        %v609 = vcvt.s32.f32 %v481
        %v610 = vcvt.s32.f32 %v482
        %v611 = vcvt.s32.f32 %v483
        %v612 = vcvt.s32.f32 %v484
        %v613 = vcvt.s32.f32 %v485
        %v614 = vcvt.s32.f32 %v486
        %v615 = vcvt.s32.f32 %v487
        %v616 = vcvt.s32.f32 %v488
        %v617 = vcvt.s32.f32 %v489
        %v618 = vcvt.s32.f32 %v490
        %v619 = vcvt.s32.f32 %v491
        %v620 = vcvt.s32.f32 %v492
        %v621 = vcvt.s32.f32 %v493
        %v622 = vcvt.s32.f32 %v494
        %v623 = vcvt.s32.f32 %v495
        %v624 = vcvt.s32.f32 %v496
        %v625 = vcvt.s32.f32 %v497
        %v626 = vcvt.s32.f32 %v498
        %v627 = vcvt.s32.f32 %v499
        %v628 = vcvt.s32.f32 %v500
        %v629 = vcvt.s32.f32 %v501
        %v630 = vcvt.s32.f32 %v502
        %v631 = vcvt.s32.f32 %v503
        %v632 = vcvt.s32.f32 %v504
        %v633 = vcvt.s32.f32 %v505
        %v634 = vcvt.s32.f32 %v506
        %v635 = vcvt.s32.f32 %v507
        %v636 = vcvt.s32.f32 %v508
        %v637 = vcvt.s32.f32 %v509
        %v638 = vcvt.s32.f32 %v510
        %v639 = vcvt.s32.f32 %v511
        %v640 = vcvt.s32.f32 %v512
        %v641 = vcvt.s32.f32 %v513
        %v642 = vcvt.s32.f32 %v514
        %v643 = vcvt.s32.f32 %v515
        %v644 = vcvt.s32.f32 %v516
        %v645 = vcvt.s32.f32 %v517
        %v646 = vcvt.s32.f32 %v518
        %v647 = vcvt.s32.f32 %v519
        %v648 = vcvt.s32.f32 %v520
        %v649 = vcvt.s32.f32 %v521
        %v650 = vcvt.s32.f32 %v522
        %v651 = vcvt.s32.f32 %v523
        %v652 = vcvt.s32.f32 %v524
        %v653 = vcvt.s32.f32 %v525
        %v654 = vcvt.s32.f32 %v526
        %v655 = vcvt.s32.f32 %v527
        %v656 = vcvt.s32.f32 %v528
        %v657 = vcvt.s32.f32 %v529
        %v658 = vcvt.s32.f32 %v530
        %v659 = vcvt.s32.f32 %v531
        %v660 = vcvt.s32.f32 %v532
        %v661 = vcvt.s32.f32 %v533
        %v662 = vcvt.s32.f32 %v534
        %v663 = vcvt.s32.f32 %v535
        %v664 = vcvt.s32.f32 %v536
        %v665 = vcvt.s32.f32 %v537
        %v666 = vcvt.s32.f32 %v538
        %v667 = vcvt.s32.f32 %v539
        %v668 = vcvt.s32.f32 %v540
        %v669 = vcvt.s32.f32 %v541
        %v670 = vcvt.s32.f32 %v542
        %v671 = vcvt.s32.f32 %v543
        %v672 = vcvt.s32.f32 %v544
        %v673 = vcvt.s32.f32 %v545
        %v674 = vcvt.s32.f32 %v546
        %v675 = vcvt.s32.f32 %v547
        %v676 = vcvt.s32.f32 %v548
        %v677 = vcvt.s32.f32 %v549
        %v678 = vcvt.s32.f32 %v550
        %v679 = vcvt.s32.f32 %v551
        %v680 = vcvt.s32.f32 %v552
        %v681 = vcvt.s32.f32 %v553
        %v682 = vcvt.s32.f32 %v554
        %v683 = vcvt.s32.f32 %v555
        %v684 = vcvt.s32.f32 %v556
        %v685 = vcvt.s32.f32 %v557
        %v686 = vcvt.s32.f32 %v558
        %v687 = vcvt.s32.f32 %v559
        %v688 = vcvt.s32.f32 %v560
        %v689 = vcvt.s32.f32 %v561
        %v690 = vcvt.s32.f32 %v562
        %v691 = vadd.f32 %v563, 0.0
        %v692 = vadd.f32 %v564, 0.0
        %v693 = vadd.f32 %v565, 0.0
        %v694 = vadd.f32 %v566, 0.0
        %v695 = vadd.f32 %v567, 0.0
        %v696 = vadd.f32 %v568, 0.0
        %v697 = vadd.f32 %v569, 0.0
        %v698 = vadd.f32 %v570, 0.0
        %v699 = vadd.f32 %v571, 0.0
        %v700 = vadd.f32 %v572, 0.0
        %v701 = vadd.f32 %v573, 0.0
        %v702 = vadd.f32 %v574, 0.0
        %v703 = vadd.f32 %v575, 0.0
        %v704 = vadd.f32 %v576, 0.0
        %v705 = vadd.f32 %v577, 0.0
        %v706 = vadd.f32 %v578, 0.0
        %v707 = vadd.f32 %v579, 0.0
        %v708 = vadd.f32 %v580, 0.0
        %v709 = vadd.f32 %v581, 0.0
        %v710 = vadd.f32 %v582, 0.0
        %v711 = vadd.f32 %v583, 0.0
        %v712 = vadd.f32 %v584, 0.0
        %v713 = vadd.f32 %v585, 0.0
        %v714 = vadd.f32 %v586, 0.0
        %v715 = vadd.f32 %v587, 0.0
        %v716 = vadd.f32 %v588, 0.0
        %v717 = vadd.f32 %v589, 0.0
        %v718 = vadd.f32 %v590, 0.0
        %v719 = vadd.f32 %v591, 0.0
        %v720 = vadd.f32 %v592, 0.0
        %v721 = vadd.f32 %v593, 0.0
        %v722 = vadd.f32 %v594, 0.0
        %v723 = vadd.f32 %v595, 0.0
        %v724 = vadd.f32 %v596, 0.0
        %v725 = vadd.f32 %v597, 0.0
        %v726 = vadd.f32 %v598, 0.0
        %v727 = vadd.f32 %v599, 0.0
        %v728 = vadd.f32 %v600, 0.0
        %v729 = vadd.f32 %v601, 0.0
        %v730 = vadd.f32 %v602, 0.0
        %v731 = vadd.f32 %v603, 0.0
        %v732 = vadd.f32 %v604, 0.0
        %v733 = vadd.f32 %v605, 0.0
        %v734 = vadd.f32 %v606, 0.0
        %v735 = vadd.f32 %v607, 0.0
        %v736 = vadd.f32 %v608, 0.0
        %v737 = vadd.f32 %v609, 0.0
        %v738 = vadd.f32 %v610, 0.0
        %v739 = vadd.f32 %v611, 0.0
        %v740 = vadd.f32 %v612, 0.0
        %v741 = vadd.f32 %v613, 0.0
        %v742 = vadd.f32 %v614, 0.0
        %v743 = vadd.f32 %v615, 0.0
        %v744 = vadd.f32 %v616, 0.0
        %v745 = vadd.f32 %v617, 0.0
        %v746 = vadd.f32 %v618, 0.0
        %v747 = vadd.f32 %v619, 0.0
        %v748 = vadd.f32 %v620, 0.0
        %v749 = vadd.f32 %v621, 0.0
        %v750 = vadd.f32 %v622, 0.0
        %v751 = vadd.f32 %v623, 0.0
        %v752 = vadd.f32 %v624, 0.0
        %v753 = vadd.f32 %v625, 0.0
        %v754 = vadd.f32 %v626, 0.0
        %v755 = vadd.f32 %v627, 0.0
        %v756 = vadd.f32 %v628, 0.0
        %v757 = vadd.f32 %v629, 0.0
        %v758 = vadd.f32 %v630, 0.0
        %v759 = vadd.f32 %v631, 0.0
        %v760 = vadd.f32 %v632, 0.0
        %v761 = vadd.f32 %v633, 0.0
        %v762 = vadd.f32 %v634, 0.0
        %v763 = vadd.f32 %v635, 0.0
        %v764 = vadd.f32 %v636, 0.0
        %v765 = vadd.f32 %v637, 0.0
        %v766 = vadd.f32 %v638, 0.0
        %v767 = vadd.f32 %v639, 0.0
        %v768 = vadd.f32 %v640, 0.0
        %v769 = vadd.f32 %v641, 0.0
        %v770 = vadd.f32 %v642, 0.0
        %v771 = vadd.f32 %v643, 0.0
        %v772 = vadd.f32 %v644, 0.0
        %v773 = vadd.f32 %v645, 0.0
        %v774 = vadd.f32 %v646, 0.0
        %v775 = vadd.f32 %v647, 0.0
        %v776 = vadd.f32 %v648, 0.0
        %v777 = vadd.f32 %v649, 0.0
        %v778 = vadd.f32 %v650, 0.0
        %v779 = vadd.f32 %v651, 0.0
        %v780 = vadd.f32 %v652, 0.0
        %v781 = vadd.f32 %v653, 0.0
        %v782 = vadd.f32 %v654, 0.0
        %v783 = vadd.f32 %v655, 0.0
        %v784 = vadd.f32 %v656, 0.0
        %v785 = vadd.f32 %v657, 0.0
        %v786 = vadd.f32 %v658, 0.0
        %v787 = vadd.f32 %v659, 0.0
        %v788 = vadd.f32 %v660, 0.0
        %v789 = vadd.f32 %v661, 0.0
        %v790 = vadd.f32 %v662, 0.0
        %v791 = vadd.f32 %v663, 0.0
        %v792 = vadd.f32 %v664, 0.0
        %v793 = vadd.f32 %v665, 0.0
        %v794 = vadd.f32 %v666, 0.0
        %v795 = vadd.f32 %v667, 0.0
        %v796 = vadd.f32 %v668, 0.0
        %v797 = vadd.f32 %v669, 0.0
        %v798 = vadd.f32 %v670, 0.0
        %v799 = vadd.f32 %v671, 0.0
        %v800 = vadd.f32 %v672, 0.0
        %v801 = vadd.f32 %v673, 0.0
        %v802 = vadd.f32 %v674, 0.0
        %v803 = vadd.f32 %v675, 0.0
        %v804 = vadd.f32 %v676, 0.0
        %v805 = vadd.f32 %v677, 0.0
        %v806 = vadd.f32 %v678, 0.0
        %v807 = vadd.f32 %v679, 0.0
        %v808 = vadd.f32 %v680, 0.0
        %v809 = vadd.f32 %v681, 0.0
        %v810 = vadd.f32 %v682, 0.0
        %v811 = vadd.f32 %v683, 0.0
        %v812 = vadd.f32 %v684, 0.0
        %v813 = vadd.f32 %v685, 0.0
        %v814 = vadd.f32 %v686, 0.0
        %v815 = vadd.f32 %v687, 0.0
        %v816 = vadd.f32 %v688, 0.0
        %v817 = vadd.f32 %v689, 0.0
        %v818 = vadd.f32 %v690, 0.0
        %819 = vset.pattern.permute.xlu0 1
        %820 = vperm.xlu0 %819, %v234
        %v821 = vpop.permute.xlu0 %820
        %822 = vset.pattern.permute.xlu0 1
        %823 = vperm.xlu0 %822, %v235
        %v824 = vpop.permute.xlu0 %823
        %825 = vset.pattern.permute.xlu0 1
        %826 = vperm.xlu0 %825, %v236
        %v827 = vpop.permute.xlu0 %826
        %828 = vset.pattern.permute.xlu0 1
        %829 = vperm.xlu0 %828, %v237
        %v830 = vpop.permute.xlu0 %829
        %831 = vset.pattern.permute.xlu0 1
        %832 = vperm.xlu0 %831, %v238
        %v833 = vpop.permute.xlu0 %832
        %834 = vset.pattern.permute.xlu0 1
        %835 = vperm.xlu0 %834, %v239
        %v836 = vpop.permute.xlu0 %835
        %837 = vset.pattern.permute.xlu0 1
        %838 = vperm.xlu0 %837, %v240
        %v839 = vpop.permute.xlu0 %838
        %840 = vset.pattern.permute.xlu0 1
        %841 = vperm.xlu0 %840, %v241
        %v842 = vpop.permute.xlu0 %841
        %843 = vset.pattern.permute.xlu0 1
        %844 = vperm.xlu0 %843, %v242
        %v845 = vpop.permute.xlu0 %844
        %846 = vset.pattern.permute.xlu0 1
        %847 = vperm.xlu0 %846, %v243
        %v848 = vpop.permute.xlu0 %847
        %849 = vset.pattern.permute.xlu0 1
        %850 = vperm.xlu0 %849, %v244
        %v851 = vpop.permute.xlu0 %850
        %852 = vset.pattern.permute.xlu0 1
        %853 = vperm.xlu0 %852, %v245
        %v854 = vpop.permute.xlu0 %853
        %855 = vset.pattern.permute.xlu0 1
        %856 = vperm.xlu0 %855, %v246
        %v857 = vpop.permute.xlu0 %856
        %858 = vset.pattern.permute.xlu0 1
        %859 = vperm.xlu0 %858, %v247
        %v860 = vpop.permute.xlu0 %859
        %861 = vset.pattern.permute.xlu0 1
        %862 = vperm.xlu0 %861, %v248
        %v863 = vpop.permute.xlu0 %862
        %864 = vset.pattern.permute.xlu0 1
        %865 = vperm.xlu0 %864, %v249
        %v866 = vpop.permute.xlu0 %865
        %vm867 = vcmp.eq.s32.totalorder %v821, %v251
        %vm868 = vcmp.eq.s32.totalorder %v821, %v252
        %vm869 = vcmp.eq.s32.totalorder %v821, %v253
        %vm870 = vcmp.eq.s32.totalorder %v821, %v254
        %vm871 = vcmp.eq.s32.totalorder %v821, %v255
        %vm872 = vcmp.eq.s32.totalorder %v821, %v256
        %vm873 = vcmp.eq.s32.totalorder %v821, %v257
        %vm874 = vcmp.eq.s32.totalorder %v821, %v258
        %vm875 = vcmp.eq.s32.totalorder %v824, %v251
        %vm876 = vcmp.eq.s32.totalorder %v824, %v252
        %vm877 = vcmp.eq.s32.totalorder %v824, %v253
        %vm878 = vcmp.eq.s32.totalorder %v824, %v254
        %vm879 = vcmp.eq.s32.totalorder %v824, %v255
        %vm880 = vcmp.eq.s32.totalorder %v824, %v256
        %vm881 = vcmp.eq.s32.totalorder %v824, %v257
        %vm882 = vcmp.eq.s32.totalorder %v824, %v258
        %vm883 = vcmp.eq.s32.totalorder %v827, %v251
        %vm884 = vcmp.eq.s32.totalorder %v827, %v252
        %vm885 = vcmp.eq.s32.totalorder %v827, %v253
        %vm886 = vcmp.eq.s32.totalorder %v827, %v254
        %vm887 = vcmp.eq.s32.totalorder %v827, %v255
        %vm888 = vcmp.eq.s32.totalorder %v827, %v256
        %vm889 = vcmp.eq.s32.totalorder %v827, %v257
        %vm890 = vcmp.eq.s32.totalorder %v827, %v258
        %vm891 = vcmp.eq.s32.totalorder %v830, %v251
        %vm892 = vcmp.eq.s32.totalorder %v830, %v252
        %vm893 = vcmp.eq.s32.totalorder %v830, %v253
        %vm894 = vcmp.eq.s32.totalorder %v830, %v254
        %vm895 = vcmp.eq.s32.totalorder %v830, %v255
        %vm896 = vcmp.eq.s32.totalorder %v830, %v256
        %vm897 = vcmp.eq.s32.totalorder %v830, %v257
        %vm898 = vcmp.eq.s32.totalorder %v830, %v258
        %vm899 = vcmp.eq.s32.totalorder %v833, %v251
        %vm900 = vcmp.eq.s32.totalorder %v833, %v252
        %vm901 = vcmp.eq.s32.totalorder %v833, %v253
        %vm902 = vcmp.eq.s32.totalorder %v833, %v254
        %vm903 = vcmp.eq.s32.totalorder %v833, %v255
        %vm904 = vcmp.eq.s32.totalorder %v833, %v256
        %vm905 = vcmp.eq.s32.totalorder %v833, %v257
        %vm906 = vcmp.eq.s32.totalorder %v833, %v258
        %vm907 = vcmp.eq.s32.totalorder %v836, %v251
        %vm908 = vcmp.eq.s32.totalorder %v836, %v252
        %vm909 = vcmp.eq.s32.totalorder %v836, %v253
        %vm910 = vcmp.eq.s32.totalorder %v836, %v254
        %vm911 = vcmp.eq.s32.totalorder %v836, %v255
        %vm912 = vcmp.eq.s32.totalorder %v836, %v256
        %vm913 = vcmp.eq.s32.totalorder %v836, %v257
        %vm914 = vcmp.eq.s32.totalorder %v836, %v258
        %vm915 = vcmp.eq.s32.totalorder %v839, %v251
        %vm916 = vcmp.eq.s32.totalorder %v839, %v252
        %vm917 = vcmp.eq.s32.totalorder %v839, %v253
        %vm918 = vcmp.eq.s32.totalorder %v839, %v254
        %vm919 = vcmp.eq.s32.totalorder %v839, %v255
        %vm920 = vcmp.eq.s32.totalorder %v839, %v256
        %vm921 = vcmp.eq.s32.totalorder %v839, %v257
        %vm922 = vcmp.eq.s32.totalorder %v839, %v258
        %vm923 = vcmp.eq.s32.totalorder %v842, %v251
        %vm924 = vcmp.eq.s32.totalorder %v842, %v252
        %vm925 = vcmp.eq.s32.totalorder %v842, %v253
        %vm926 = vcmp.eq.s32.totalorder %v842, %v254
        %vm927 = vcmp.eq.s32.totalorder %v842, %v255
        %vm928 = vcmp.eq.s32.totalorder %v842, %v256
        %vm929 = vcmp.eq.s32.totalorder %v842, %v257
        %vm930 = vcmp.eq.s32.totalorder %v842, %v258
        %vm931 = vcmp.eq.s32.totalorder %v845, %v251
        %vm932 = vcmp.eq.s32.totalorder %v845, %v252
        %vm933 = vcmp.eq.s32.totalorder %v845, %v253
        %vm934 = vcmp.eq.s32.totalorder %v845, %v254
        %vm935 = vcmp.eq.s32.totalorder %v845, %v255
        %vm936 = vcmp.eq.s32.totalorder %v845, %v256
        %vm937 = vcmp.eq.s32.totalorder %v845, %v257
        %vm938 = vcmp.eq.s32.totalorder %v845, %v258
        %vm939 = vcmp.eq.s32.totalorder %v848, %v251
        %vm940 = vcmp.eq.s32.totalorder %v848, %v252
        %vm941 = vcmp.eq.s32.totalorder %v848, %v253
        %vm942 = vcmp.eq.s32.totalorder %v848, %v254
        %vm943 = vcmp.eq.s32.totalorder %v848, %v255
        %vm944 = vcmp.eq.s32.totalorder %v848, %v256
        %vm945 = vcmp.eq.s32.totalorder %v848, %v257
        %vm946 = vcmp.eq.s32.totalorder %v848, %v258
        %vm947 = vcmp.eq.s32.totalorder %v851, %v251
        %vm948 = vcmp.eq.s32.totalorder %v851, %v252
        %vm949 = vcmp.eq.s32.totalorder %v851, %v253
        %vm950 = vcmp.eq.s32.totalorder %v851, %v254
        %vm951 = vcmp.eq.s32.totalorder %v851, %v255
        %vm952 = vcmp.eq.s32.totalorder %v851, %v256
        %vm953 = vcmp.eq.s32.totalorder %v851, %v257
        %vm954 = vcmp.eq.s32.totalorder %v851, %v258
        %vm955 = vcmp.eq.s32.totalorder %v854, %v251
        %vm956 = vcmp.eq.s32.totalorder %v854, %v252
        %vm957 = vcmp.eq.s32.totalorder %v854, %v253
        %vm958 = vcmp.eq.s32.totalorder %v854, %v254
        %vm959 = vcmp.eq.s32.totalorder %v854, %v255
        %vm960 = vcmp.eq.s32.totalorder %v854, %v256
        %vm961 = vcmp.eq.s32.totalorder %v854, %v257
        %vm962 = vcmp.eq.s32.totalorder %v854, %v258
        %vm963 = vcmp.eq.s32.totalorder %v857, %v251
        %vm964 = vcmp.eq.s32.totalorder %v857, %v252
        %vm965 = vcmp.eq.s32.totalorder %v857, %v253
        %vm966 = vcmp.eq.s32.totalorder %v857, %v254
        %vm967 = vcmp.eq.s32.totalorder %v857, %v255
        %vm968 = vcmp.eq.s32.totalorder %v857, %v256
        %vm969 = vcmp.eq.s32.totalorder %v857, %v257
        %vm970 = vcmp.eq.s32.totalorder %v857, %v258
        %vm971 = vcmp.eq.s32.totalorder %v860, %v251
        %vm972 = vcmp.eq.s32.totalorder %v860, %v252
        %vm973 = vcmp.eq.s32.totalorder %v860, %v253
        %vm974 = vcmp.eq.s32.totalorder %v860, %v254
        %vm975 = vcmp.eq.s32.totalorder %v860, %v255
        %vm976 = vcmp.eq.s32.totalorder %v860, %v256
        %vm977 = vcmp.eq.s32.totalorder %v860, %v257
        %vm978 = vcmp.eq.s32.totalorder %v860, %v258
        %vm979 = vcmp.eq.s32.totalorder %v863, %v251
        %vm980 = vcmp.eq.s32.totalorder %v863, %v252
        %vm981 = vcmp.eq.s32.totalorder %v863, %v253
        %vm982 = vcmp.eq.s32.totalorder %v863, %v254
        %vm983 = vcmp.eq.s32.totalorder %v863, %v255
        %vm984 = vcmp.eq.s32.totalorder %v863, %v256
        %vm985 = vcmp.eq.s32.totalorder %v863, %v257
        %vm986 = vcmp.eq.s32.totalorder %v863, %v258
        %vm987 = vcmp.eq.s32.totalorder %v866, %v251
        %vm988 = vcmp.eq.s32.totalorder %v866, %v252
        %vm989 = vcmp.eq.s32.totalorder %v866, %v253
        %vm990 = vcmp.eq.s32.totalorder %v866, %v254
        %vm991 = vcmp.eq.s32.totalorder %v866, %v255
        %vm992 = vcmp.eq.s32.totalorder %v866, %v256
        %vm993 = vcmp.eq.s32.totalorder %v866, %v257
        %vm994 = vcmp.eq.s32.totalorder %v866, %v258
        %v995 = vsel %vm867, 1, 0
        %v996 = vsel %vm868, 1, 0
        %v997 = vsel %vm869, 1, 0
        %v998 = vsel %vm870, 1, 0
        %v999 = vsel %vm871, 1, 0
        %v1000 = vsel %vm872, 1, 0
        %v1001 = vsel %vm873, 1, 0
        %v1002 = vsel %vm874, 1, 0
        %v1003 = vsel %vm875, 1, 0
        %v1004 = vsel %vm876, 1, 0
        %v1005 = vsel %vm877, 1, 0
        %v1006 = vsel %vm878, 1, 0
        %v1007 = vsel %vm879, 1, 0
        %v1008 = vsel %vm880, 1, 0
        %v1009 = vsel %vm881, 1, 0
        %v1010 = vsel %vm882, 1, 0
        %v1011 = vsel %vm883, 1, 0
        %v1012 = vsel %vm884, 1, 0
        %v1013 = vsel %vm885, 1, 0
        %v1014 = vsel %vm886, 1, 0
        %v1015 = vsel %vm887, 1, 0
        %v1016 = vsel %vm888, 1, 0
        %v1017 = vsel %vm889, 1, 0
        %v1018 = vsel %vm890, 1, 0
        %v1019 = vsel %vm891, 1, 0
        %v1020 = vsel %vm892, 1, 0
        %v1021 = vsel %vm893, 1, 0
        %v1022 = vsel %vm894, 1, 0
        %v1023 = vsel %vm895, 1, 0
        %v1024 = vsel %vm896, 1, 0
        %v1025 = vsel %vm897, 1, 0
        %v1026 = vsel %vm898, 1, 0
        %v1027 = vsel %vm899, 1, 0
        %v1028 = vsel %vm900, 1, 0
        %v1029 = vsel %vm901, 1, 0
        %v1030 = vsel %vm902, 1, 0
        %v1031 = vsel %vm903, 1, 0
        %v1032 = vsel %vm904, 1, 0
        %v1033 = vsel %vm905, 1, 0
        %v1034 = vsel %vm906, 1, 0
        %v1035 = vsel %vm907, 1, 0
        %v1036 = vsel %vm908, 1, 0
        %v1037 = vsel %vm909, 1, 0
        %v1038 = vsel %vm910, 1, 0
        %v1039 = vsel %vm911, 1, 0
        %v1040 = vsel %vm912, 1, 0
        %v1041 = vsel %vm913, 1, 0
        %v1042 = vsel %vm914, 1, 0
        %v1043 = vsel %vm915, 1, 0
        %v1044 = vsel %vm916, 1, 0
        %v1045 = vsel %vm917, 1, 0
        %v1046 = vsel %vm918, 1, 0
        %v1047 = vsel %vm919, 1, 0
        %v1048 = vsel %vm920, 1, 0
        %v1049 = vsel %vm921, 1, 0
        %v1050 = vsel %vm922, 1, 0
        %v1051 = vsel %vm923, 1, 0
        %v1052 = vsel %vm924, 1, 0
        %v1053 = vsel %vm925, 1, 0
        %v1054 = vsel %vm926, 1, 0
        %v1055 = vsel %vm927, 1, 0
        %v1056 = vsel %vm928, 1, 0
        %v1057 = vsel %vm929, 1, 0
        %v1058 = vsel %vm930, 1, 0
        %v1059 = vsel %vm931, 1, 0
        %v1060 = vsel %vm932, 1, 0
        %v1061 = vsel %vm933, 1, 0
        %v1062 = vsel %vm934, 1, 0
        %v1063 = vsel %vm935, 1, 0
        %v1064 = vsel %vm936, 1, 0
        %v1065 = vsel %vm937, 1, 0
        %v1066 = vsel %vm938, 1, 0
        %v1067 = vsel %vm939, 1, 0
        %v1068 = vsel %vm940, 1, 0
        %v1069 = vsel %vm941, 1, 0
        %v1070 = vsel %vm942, 1, 0
        %v1071 = vsel %vm943, 1, 0
        %v1072 = vsel %vm944, 1, 0
        %v1073 = vsel %vm945, 1, 0
        %v1074 = vsel %vm946, 1, 0
        %v1075 = vsel %vm947, 1, 0
        %v1076 = vsel %vm948, 1, 0
        %v1077 = vsel %vm949, 1, 0
        %v1078 = vsel %vm950, 1, 0
        %v1079 = vsel %vm951, 1, 0
        %v1080 = vsel %vm952, 1, 0
        %v1081 = vsel %vm953, 1, 0
        %v1082 = vsel %vm954, 1, 0
        %v1083 = vsel %vm955, 1, 0
        %v1084 = vsel %vm956, 1, 0
        %v1085 = vsel %vm957, 1, 0
        %v1086 = vsel %vm958, 1, 0
        %v1087 = vsel %vm959, 1, 0
        %v1088 = vsel %vm960, 1, 0
        %v1089 = vsel %vm961, 1, 0
        %v1090 = vsel %vm962, 1, 0
        %v1091 = vsel %vm963, 1, 0
        %v1092 = vsel %vm964, 1, 0
        %v1093 = vsel %vm965, 1, 0
        %v1094 = vsel %vm966, 1, 0
        %v1095 = vsel %vm967, 1, 0
        %v1096 = vsel %vm968, 1, 0
        %v1097 = vsel %vm969, 1, 0
        %v1098 = vsel %vm970, 1, 0
        %v1099 = vsel %vm971, 1, 0
        %v1100 = vsel %vm972, 1, 0
        %v1101 = vsel %vm973, 1, 0
        %v1102 = vsel %vm974, 1, 0
        %v1103 = vsel %vm975, 1, 0
        %v1104 = vsel %vm976, 1, 0
        %v1105 = vsel %vm977, 1, 0
        %v1106 = vsel %vm978, 1, 0
        %v1107 = vsel %vm979, 1, 0
        %v1108 = vsel %vm980, 1, 0
        %v1109 = vsel %vm981, 1, 0
        %v1110 = vsel %vm982, 1, 0
        %v1111 = vsel %vm983, 1, 0
        %v1112 = vsel %vm984, 1, 0
        %v1113 = vsel %vm985, 1, 0
        %v1114 = vsel %vm986, 1, 0
        %v1115 = vsel %vm987, 1, 0
        %v1116 = vsel %vm988, 1, 0
        %v1117 = vsel %vm989, 1, 0
        %v1118 = vsel %vm990, 1, 0
        %v1119 = vsel %vm991, 1, 0
        %v1120 = vsel %vm992, 1, 0
        %v1121 = vsel %vm993, 1, 0
        %v1122 = vsel %vm994, 1, 0
        %v1123 = vcvt.s32.f32 %v995
        %v1124 = vcvt.s32.f32 %v996
        %v1125 = vcvt.s32.f32 %v997
        %v1126 = vcvt.s32.f32 %v998
        %v1127 = vcvt.s32.f32 %v999
        %v1128 = vcvt.s32.f32 %v1000
        %v1129 = vcvt.s32.f32 %v1001
        %v1130 = vcvt.s32.f32 %v1002
        %v1131 = vcvt.s32.f32 %v1003
        %v1132 = vcvt.s32.f32 %v1004
        %v1133 = vcvt.s32.f32 %v1005
        %v1134 = vcvt.s32.f32 %v1006
        %v1135 = vcvt.s32.f32 %v1007
        %v1136 = vcvt.s32.f32 %v1008
        %v1137 = vcvt.s32.f32 %v1009
        %v1138 = vcvt.s32.f32 %v1010
        %v1139 = vcvt.s32.f32 %v1011
        %v1140 = vcvt.s32.f32 %v1012
        %v1141 = vcvt.s32.f32 %v1013
        %v1142 = vcvt.s32.f32 %v1014
        %v1143 = vcvt.s32.f32 %v1015
        %v1144 = vcvt.s32.f32 %v1016
        %v1145 = vcvt.s32.f32 %v1017
        %v1146 = vcvt.s32.f32 %v1018
        %v1147 = vcvt.s32.f32 %v1019
        %v1148 = vcvt.s32.f32 %v1020
        %v1149 = vcvt.s32.f32 %v1021
        %v1150 = vcvt.s32.f32 %v1022
        %v1151 = vcvt.s32.f32 %v1023
        %v1152 = vcvt.s32.f32 %v1024
        %v1153 = vcvt.s32.f32 %v1025
        %v1154 = vcvt.s32.f32 %v1026
        %v1155 = vcvt.s32.f32 %v1027
        %v1156 = vcvt.s32.f32 %v1028
        %v1157 = vcvt.s32.f32 %v1029
        %v1158 = vcvt.s32.f32 %v1030
        %v1159 = vcvt.s32.f32 %v1031
        %v1160 = vcvt.s32.f32 %v1032
        %v1161 = vcvt.s32.f32 %v1033
        %v1162 = vcvt.s32.f32 %v1034
        %v1163 = vcvt.s32.f32 %v1035
        %v1164 = vcvt.s32.f32 %v1036
        %v1165 = vcvt.s32.f32 %v1037
        %v1166 = vcvt.s32.f32 %v1038
        %v1167 = vcvt.s32.f32 %v1039
        %v1168 = vcvt.s32.f32 %v1040
        %v1169 = vcvt.s32.f32 %v1041
        %v1170 = vcvt.s32.f32 %v1042
        %v1171 = vcvt.s32.f32 %v1043
        %v1172 = vcvt.s32.f32 %v1044
        %v1173 = vcvt.s32.f32 %v1045
        %v1174 = vcvt.s32.f32 %v1046
        %v1175 = vcvt.s32.f32 %v1047
        %v1176 = vcvt.s32.f32 %v1048
        %v1177 = vcvt.s32.f32 %v1049
        %v1178 = vcvt.s32.f32 %v1050
        %v1179 = vcvt.s32.f32 %v1051
        %v1180 = vcvt.s32.f32 %v1052
        %v1181 = vcvt.s32.f32 %v1053
        %v1182 = vcvt.s32.f32 %v1054
        %v1183 = vcvt.s32.f32 %v1055
        %v1184 = vcvt.s32.f32 %v1056
        %v1185 = vcvt.s32.f32 %v1057
        %v1186 = vcvt.s32.f32 %v1058
        %v1187 = vcvt.s32.f32 %v1059
        %v1188 = vcvt.s32.f32 %v1060
        %v1189 = vcvt.s32.f32 %v1061
        %v1190 = vcvt.s32.f32 %v1062
        %v1191 = vcvt.s32.f32 %v1063
        %v1192 = vcvt.s32.f32 %v1064
        %v1193 = vcvt.s32.f32 %v1065
        %v1194 = vcvt.s32.f32 %v1066
        %v1195 = vcvt.s32.f32 %v1067
        %v1196 = vcvt.s32.f32 %v1068
        %v1197 = vcvt.s32.f32 %v1069
        %v1198 = vcvt.s32.f32 %v1070
        %v1199 = vcvt.s32.f32 %v1071
        %v1200 = vcvt.s32.f32 %v1072
        %v1201 = vcvt.s32.f32 %v1073
        %v1202 = vcvt.s32.f32 %v1074
        %v1203 = vcvt.s32.f32 %v1075
        %v1204 = vcvt.s32.f32 %v1076
        %v1205 = vcvt.s32.f32 %v1077
        %v1206 = vcvt.s32.f32 %v1078
        %v1207 = vcvt.s32.f32 %v1079
        %v1208 = vcvt.s32.f32 %v1080
        %v1209 = vcvt.s32.f32 %v1081
        %v1210 = vcvt.s32.f32 %v1082
        %v1211 = vcvt.s32.f32 %v1083
        %v1212 = vcvt.s32.f32 %v1084
        %v1213 = vcvt.s32.f32 %v1085
        %v1214 = vcvt.s32.f32 %v1086
        %v1215 = vcvt.s32.f32 %v1087
        %v1216 = vcvt.s32.f32 %v1088
        %v1217 = vcvt.s32.f32 %v1089
        %v1218 = vcvt.s32.f32 %v1090
        %v1219 = vcvt.s32.f32 %v1091
        %v1220 = vcvt.s32.f32 %v1092
        %v1221 = vcvt.s32.f32 %v1093
        %v1222 = vcvt.s32.f32 %v1094
        %v1223 = vcvt.s32.f32 %v1095
        %v1224 = vcvt.s32.f32 %v1096
        %v1225 = vcvt.s32.f32 %v1097
        %v1226 = vcvt.s32.f32 %v1098
        %v1227 = vcvt.s32.f32 %v1099
        %v1228 = vcvt.s32.f32 %v1100
        %v1229 = vcvt.s32.f32 %v1101
        %v1230 = vcvt.s32.f32 %v1102
        %v1231 = vcvt.s32.f32 %v1103
        %v1232 = vcvt.s32.f32 %v1104
        %v1233 = vcvt.s32.f32 %v1105
        %v1234 = vcvt.s32.f32 %v1106
        %v1235 = vcvt.s32.f32 %v1107
        %v1236 = vcvt.s32.f32 %v1108
        %v1237 = vcvt.s32.f32 %v1109
        %v1238 = vcvt.s32.f32 %v1110
        %v1239 = vcvt.s32.f32 %v1111
        %v1240 = vcvt.s32.f32 %v1112
        %v1241 = vcvt.s32.f32 %v1113
        %v1242 = vcvt.s32.f32 %v1114
        %v1243 = vcvt.s32.f32 %v1115
        %v1244 = vcvt.s32.f32 %v1116
        %v1245 = vcvt.s32.f32 %v1117
        %v1246 = vcvt.s32.f32 %v1118
        %v1247 = vcvt.s32.f32 %v1119
        %v1248 = vcvt.s32.f32 %v1120
        %v1249 = vcvt.s32.f32 %v1121
        %v1250 = vcvt.s32.f32 %v1122
        %v1251 = vadd.f32 %v691, %v1123
        %v1252 = vadd.f32 %v692, %v1124
        %v1253 = vadd.f32 %v693, %v1125
        %v1254 = vadd.f32 %v694, %v1126
        %v1255 = vadd.f32 %v695, %v1127
        %v1256 = vadd.f32 %v696, %v1128
        %v1257 = vadd.f32 %v697, %v1129
        %v1258 = vadd.f32 %v698, %v1130
        %v1259 = vadd.f32 %v699, %v1131
        %v1260 = vadd.f32 %v700, %v1132
        %v1261 = vadd.f32 %v701, %v1133
        %v1262 = vadd.f32 %v702, %v1134
        %v1263 = vadd.f32 %v703, %v1135
        %v1264 = vadd.f32 %v704, %v1136
        %v1265 = vadd.f32 %v705, %v1137
        %v1266 = vadd.f32 %v706, %v1138
        %v1267 = vadd.f32 %v707, %v1139
        %v1268 = vadd.f32 %v708, %v1140
        %v1269 = vadd.f32 %v709, %v1141
        %v1270 = vadd.f32 %v710, %v1142
        %v1271 = vadd.f32 %v711, %v1143
        %v1272 = vadd.f32 %v712, %v1144
        %v1273 = vadd.f32 %v713, %v1145
        %v1274 = vadd.f32 %v714, %v1146
        %v1275 = vadd.f32 %v715, %v1147
        %v1276 = vadd.f32 %v716, %v1148
        %v1277 = vadd.f32 %v717, %v1149
        %v1278 = vadd.f32 %v718, %v1150
        %v1279 = vadd.f32 %v719, %v1151
        %v1280 = vadd.f32 %v720, %v1152
        %v1281 = vadd.f32 %v721, %v1153
        %v1282 = vadd.f32 %v722, %v1154
        %v1283 = vadd.f32 %v723, %v1155
        %v1284 = vadd.f32 %v724, %v1156
        %v1285 = vadd.f32 %v725, %v1157
        %v1286 = vadd.f32 %v726, %v1158
        %v1287 = vadd.f32 %v727, %v1159
        %v1288 = vadd.f32 %v728, %v1160
        %v1289 = vadd.f32 %v729, %v1161
        %v1290 = vadd.f32 %v730, %v1162
        %v1291 = vadd.f32 %v731, %v1163
        %v1292 = vadd.f32 %v732, %v1164
        %v1293 = vadd.f32 %v733, %v1165
        %v1294 = vadd.f32 %v734, %v1166
        %v1295 = vadd.f32 %v735, %v1167
        %v1296 = vadd.f32 %v736, %v1168
        %v1297 = vadd.f32 %v737, %v1169
        %v1298 = vadd.f32 %v738, %v1170
        %v1299 = vadd.f32 %v739, %v1171
        %v1300 = vadd.f32 %v740, %v1172
        %v1301 = vadd.f32 %v741, %v1173
        %v1302 = vadd.f32 %v742, %v1174
        %v1303 = vadd.f32 %v743, %v1175
        %v1304 = vadd.f32 %v744, %v1176
        %v1305 = vadd.f32 %v745, %v1177
        %v1306 = vadd.f32 %v746, %v1178
        %v1307 = vadd.f32 %v747, %v1179
        %v1308 = vadd.f32 %v748, %v1180
        %v1309 = vadd.f32 %v749, %v1181
        %v1310 = vadd.f32 %v750, %v1182
        %v1311 = vadd.f32 %v751, %v1183
        %v1312 = vadd.f32 %v752, %v1184
        %v1313 = vadd.f32 %v753, %v1185
        %v1314 = vadd.f32 %v754, %v1186
        %v1315 = vadd.f32 %v755, %v1187
        %v1316 = vadd.f32 %v756, %v1188
        %v1317 = vadd.f32 %v757, %v1189
        %v1318 = vadd.f32 %v758, %v1190
        %v1319 = vadd.f32 %v759, %v1191
        %v1320 = vadd.f32 %v760, %v1192
        %v1321 = vadd.f32 %v761, %v1193
        %v1322 = vadd.f32 %v762, %v1194
        %v1323 = vadd.f32 %v763, %v1195
        %v1324 = vadd.f32 %v764, %v1196
        %v1325 = vadd.f32 %v765, %v1197
        %v1326 = vadd.f32 %v766, %v1198
        %v1327 = vadd.f32 %v767, %v1199
        %v1328 = vadd.f32 %v768, %v1200
        %v1329 = vadd.f32 %v769, %v1201
        %v1330 = vadd.f32 %v770, %v1202
        %v1331 = vadd.f32 %v771, %v1203
        %v1332 = vadd.f32 %v772, %v1204
        %v1333 = vadd.f32 %v773, %v1205
        %v1334 = vadd.f32 %v774, %v1206
        %v1335 = vadd.f32 %v775, %v1207
        %v1336 = vadd.f32 %v776, %v1208
        %v1337 = vadd.f32 %v777, %v1209
        %v1338 = vadd.f32 %v778, %v1210
        %v1339 = vadd.f32 %v779, %v1211
        %v1340 = vadd.f32 %v780, %v1212
        %v1341 = vadd.f32 %v781, %v1213
        %v1342 = vadd.f32 %v782, %v1214
        %v1343 = vadd.f32 %v783, %v1215
        %v1344 = vadd.f32 %v784, %v1216
        %v1345 = vadd.f32 %v785, %v1217
        %v1346 = vadd.f32 %v786, %v1218
        %v1347 = vadd.f32 %v787, %v1219
        %v1348 = vadd.f32 %v788, %v1220
        %v1349 = vadd.f32 %v789, %v1221
        %v1350 = vadd.f32 %v790, %v1222
        %v1351 = vadd.f32 %v791, %v1223
        %v1352 = vadd.f32 %v792, %v1224
        %v1353 = vadd.f32 %v793, %v1225
        %v1354 = vadd.f32 %v794, %v1226
        %v1355 = vadd.f32 %v795, %v1227
        %v1356 = vadd.f32 %v796, %v1228
        %v1357 = vadd.f32 %v797, %v1229
        %v1358 = vadd.f32 %v798, %v1230
        %v1359 = vadd.f32 %v799, %v1231
        %v1360 = vadd.f32 %v800, %v1232
        %v1361 = vadd.f32 %v801, %v1233
        %v1362 = vadd.f32 %v802, %v1234
        %v1363 = vadd.f32 %v803, %v1235
        %v1364 = vadd.f32 %v804, %v1236
        %v1365 = vadd.f32 %v805, %v1237
        %v1366 = vadd.f32 %v806, %v1238
        %v1367 = vadd.f32 %v807, %v1239
        %v1368 = vadd.f32 %v808, %v1240
        %v1369 = vadd.f32 %v809, %v1241
        %v1370 = vadd.f32 %v810, %v1242
        %v1371 = vadd.f32 %v811, %v1243
        %v1372 = vadd.f32 %v812, %v1244
        %v1373 = vadd.f32 %v813, %v1245
        %v1374 = vadd.f32 %v814, %v1246
        %v1375 = vadd.f32 %v815, %v1247
        %v1376 = vadd.f32 %v816, %v1248
        %v1377 = vadd.f32 %v817, %v1249
        %v1378 = vadd.f32 %v818, %v1250
        %1379 = vset.pattern.permute.xlu0 2
        %1380 = vperm.xlu0 %1379, %v234
        %v1381 = vpop.permute.xlu0 %1380
        %1382 = vset.pattern.permute.xlu0 2
        %1383 = vperm.xlu0 %1382, %v235
        %v1384 = vpop.permute.xlu0 %1383
        %1385 = vset.pattern.permute.xlu0 2
        %1386 = vperm.xlu0 %1385, %v236
        %v1387 = vpop.permute.xlu0 %1386
        %1388 = vset.pattern.permute.xlu0 2
        %1389 = vperm.xlu0 %1388, %v237
        %v1390 = vpop.permute.xlu0 %1389
        %1391 = vset.pattern.permute.xlu0 2
        %1392 = vperm.xlu0 %1391, %v238
        %v1393 = vpop.permute.xlu0 %1392
        %1394 = vset.pattern.permute.xlu0 2
        %1395 = vperm.xlu0 %1394, %v239
        %v1396 = vpop.permute.xlu0 %1395
        %1397 = vset.pattern.permute.xlu0 2
        %1398 = vperm.xlu0 %1397, %v240
        %v1399 = vpop.permute.xlu0 %1398
        %1400 = vset.pattern.permute.xlu0 2
        %1401 = vperm.xlu0 %1400, %v241
        %v1402 = vpop.permute.xlu0 %1401
        %1403 = vset.pattern.permute.xlu0 2
        %1404 = vperm.xlu0 %1403, %v242
        %v1405 = vpop.permute.xlu0 %1404
        %1406 = vset.pattern.permute.xlu0 2
        %1407 = vperm.xlu0 %1406, %v243
        %v1408 = vpop.permute.xlu0 %1407
        %1409 = vset.pattern.permute.xlu0 2
        %1410 = vperm.xlu0 %1409, %v244
        %v1411 = vpop.permute.xlu0 %1410
        %1412 = vset.pattern.permute.xlu0 2
        %1413 = vperm.xlu0 %1412, %v245
        %v1414 = vpop.permute.xlu0 %1413
        %1415 = vset.pattern.permute.xlu0 2
        %1416 = vperm.xlu0 %1415, %v246
        %v1417 = vpop.permute.xlu0 %1416
        %1418 = vset.pattern.permute.xlu0 2
        %1419 = vperm.xlu0 %1418, %v247
        %v1420 = vpop.permute.xlu0 %1419
        %1421 = vset.pattern.permute.xlu0 2
        %1422 = vperm.xlu0 %1421, %v248
        %v1423 = vpop.permute.xlu0 %1422
        %1424 = vset.pattern.permute.xlu0 2
        %1425 = vperm.xlu0 %1424, %v249
        %v1426 = vpop.permute.xlu0 %1425
        %vm1427 = vcmp.eq.s32.totalorder %v1381, %v251
        %vm1428 = vcmp.eq.s32.totalorder %v1381, %v252
        %vm1429 = vcmp.eq.s32.totalorder %v1381, %v253
        %vm1430 = vcmp.eq.s32.totalorder %v1381, %v254
        %vm1431 = vcmp.eq.s32.totalorder %v1381, %v255
        %vm1432 = vcmp.eq.s32.totalorder %v1381, %v256
        %vm1433 = vcmp.eq.s32.totalorder %v1381, %v257
        %vm1434 = vcmp.eq.s32.totalorder %v1381, %v258
        %vm1435 = vcmp.eq.s32.totalorder %v1384, %v251
        %vm1436 = vcmp.eq.s32.totalorder %v1384, %v252
        %vm1437 = vcmp.eq.s32.totalorder %v1384, %v253
        %vm1438 = vcmp.eq.s32.totalorder %v1384, %v254
        %vm1439 = vcmp.eq.s32.totalorder %v1384, %v255
        %vm1440 = vcmp.eq.s32.totalorder %v1384, %v256
        %vm1441 = vcmp.eq.s32.totalorder %v1384, %v257
        %vm1442 = vcmp.eq.s32.totalorder %v1384, %v258
        %vm1443 = vcmp.eq.s32.totalorder %v1387, %v251
        %vm1444 = vcmp.eq.s32.totalorder %v1387, %v252
        %vm1445 = vcmp.eq.s32.totalorder %v1387, %v253
        %vm1446 = vcmp.eq.s32.totalorder %v1387, %v254
        %vm1447 = vcmp.eq.s32.totalorder %v1387, %v255
        %vm1448 = vcmp.eq.s32.totalorder %v1387, %v256
        %vm1449 = vcmp.eq.s32.totalorder %v1387, %v257
        %vm1450 = vcmp.eq.s32.totalorder %v1387, %v258
        %vm1451 = vcmp.eq.s32.totalorder %v1390, %v251
        %vm1452 = vcmp.eq.s32.totalorder %v1390, %v252
        %vm1453 = vcmp.eq.s32.totalorder %v1390, %v253
        %vm1454 = vcmp.eq.s32.totalorder %v1390, %v254
        %vm1455 = vcmp.eq.s32.totalorder %v1390, %v255
        %vm1456 = vcmp.eq.s32.totalorder %v1390, %v256
        %vm1457 = vcmp.eq.s32.totalorder %v1390, %v257
        %vm1458 = vcmp.eq.s32.totalorder %v1390, %v258
        %vm1459 = vcmp.eq.s32.totalorder %v1393, %v251
        %vm1460 = vcmp.eq.s32.totalorder %v1393, %v252
        %vm1461 = vcmp.eq.s32.totalorder %v1393, %v253
        %vm1462 = vcmp.eq.s32.totalorder %v1393, %v254
        %vm1463 = vcmp.eq.s32.totalorder %v1393, %v255
        %vm1464 = vcmp.eq.s32.totalorder %v1393, %v256
        %vm1465 = vcmp.eq.s32.totalorder %v1393, %v257
        %vm1466 = vcmp.eq.s32.totalorder %v1393, %v258
        %vm1467 = vcmp.eq.s32.totalorder %v1396, %v251
        %vm1468 = vcmp.eq.s32.totalorder %v1396, %v252
        %vm1469 = vcmp.eq.s32.totalorder %v1396, %v253
        %vm1470 = vcmp.eq.s32.totalorder %v1396, %v254
        %vm1471 = vcmp.eq.s32.totalorder %v1396, %v255
        %vm1472 = vcmp.eq.s32.totalorder %v1396, %v256
        %vm1473 = vcmp.eq.s32.totalorder %v1396, %v257
        %vm1474 = vcmp.eq.s32.totalorder %v1396, %v258
        %vm1475 = vcmp.eq.s32.totalorder %v1399, %v251
        %vm1476 = vcmp.eq.s32.totalorder %v1399, %v252
        %vm1477 = vcmp.eq.s32.totalorder %v1399, %v253
        %vm1478 = vcmp.eq.s32.totalorder %v1399, %v254
        %vm1479 = vcmp.eq.s32.totalorder %v1399, %v255
        %vm1480 = vcmp.eq.s32.totalorder %v1399, %v256
        %vm1481 = vcmp.eq.s32.totalorder %v1399, %v257
        %vm1482 = vcmp.eq.s32.totalorder %v1399, %v258
        %vm1483 = vcmp.eq.s32.totalorder %v1402, %v251
        %vm1484 = vcmp.eq.s32.totalorder %v1402, %v252
        %vm1485 = vcmp.eq.s32.totalorder %v1402, %v253
        %vm1486 = vcmp.eq.s32.totalorder %v1402, %v254
        %vm1487 = vcmp.eq.s32.totalorder %v1402, %v255
        %vm1488 = vcmp.eq.s32.totalorder %v1402, %v256
        %vm1489 = vcmp.eq.s32.totalorder %v1402, %v257
        %vm1490 = vcmp.eq.s32.totalorder %v1402, %v258
        %vm1491 = vcmp.eq.s32.totalorder %v1405, %v251
        %vm1492 = vcmp.eq.s32.totalorder %v1405, %v252
        %vm1493 = vcmp.eq.s32.totalorder %v1405, %v253
        %vm1494 = vcmp.eq.s32.totalorder %v1405, %v254
        %vm1495 = vcmp.eq.s32.totalorder %v1405, %v255
        %vm1496 = vcmp.eq.s32.totalorder %v1405, %v256
        %vm1497 = vcmp.eq.s32.totalorder %v1405, %v257
        %vm1498 = vcmp.eq.s32.totalorder %v1405, %v258
        %vm1499 = vcmp.eq.s32.totalorder %v1408, %v251
        %vm1500 = vcmp.eq.s32.totalorder %v1408, %v252
        %vm1501 = vcmp.eq.s32.totalorder %v1408, %v253
        %vm1502 = vcmp.eq.s32.totalorder %v1408, %v254
        %vm1503 = vcmp.eq.s32.totalorder %v1408, %v255
        %vm1504 = vcmp.eq.s32.totalorder %v1408, %v256
        %vm1505 = vcmp.eq.s32.totalorder %v1408, %v257
        %vm1506 = vcmp.eq.s32.totalorder %v1408, %v258
        %vm1507 = vcmp.eq.s32.totalorder %v1411, %v251
        %vm1508 = vcmp.eq.s32.totalorder %v1411, %v252
        %vm1509 = vcmp.eq.s32.totalorder %v1411, %v253
        %vm1510 = vcmp.eq.s32.totalorder %v1411, %v254
        %vm1511 = vcmp.eq.s32.totalorder %v1411, %v255
        %vm1512 = vcmp.eq.s32.totalorder %v1411, %v256
        %vm1513 = vcmp.eq.s32.totalorder %v1411, %v257
        %vm1514 = vcmp.eq.s32.totalorder %v1411, %v258
        %vm1515 = vcmp.eq.s32.totalorder %v1414, %v251
        %vm1516 = vcmp.eq.s32.totalorder %v1414, %v252
        %vm1517 = vcmp.eq.s32.totalorder %v1414, %v253
        %vm1518 = vcmp.eq.s32.totalorder %v1414, %v254
        %vm1519 = vcmp.eq.s32.totalorder %v1414, %v255
        %vm1520 = vcmp.eq.s32.totalorder %v1414, %v256
        %vm1521 = vcmp.eq.s32.totalorder %v1414, %v257
        %vm1522 = vcmp.eq.s32.totalorder %v1414, %v258
        %vm1523 = vcmp.eq.s32.totalorder %v1417, %v251
        %vm1524 = vcmp.eq.s32.totalorder %v1417, %v252
        %vm1525 = vcmp.eq.s32.totalorder %v1417, %v253
        %vm1526 = vcmp.eq.s32.totalorder %v1417, %v254
        %vm1527 = vcmp.eq.s32.totalorder %v1417, %v255
        %vm1528 = vcmp.eq.s32.totalorder %v1417, %v256
        %vm1529 = vcmp.eq.s32.totalorder %v1417, %v257
        %vm1530 = vcmp.eq.s32.totalorder %v1417, %v258
        %vm1531 = vcmp.eq.s32.totalorder %v1420, %v251
        %vm1532 = vcmp.eq.s32.totalorder %v1420, %v252
        %vm1533 = vcmp.eq.s32.totalorder %v1420, %v253
        %vm1534 = vcmp.eq.s32.totalorder %v1420, %v254
        %vm1535 = vcmp.eq.s32.totalorder %v1420, %v255
        %vm1536 = vcmp.eq.s32.totalorder %v1420, %v256
        %vm1537 = vcmp.eq.s32.totalorder %v1420, %v257
        %vm1538 = vcmp.eq.s32.totalorder %v1420, %v258
        %vm1539 = vcmp.eq.s32.totalorder %v1423, %v251
        %vm1540 = vcmp.eq.s32.totalorder %v1423, %v252
        %vm1541 = vcmp.eq.s32.totalorder %v1423, %v253
        %vm1542 = vcmp.eq.s32.totalorder %v1423, %v254
        %vm1543 = vcmp.eq.s32.totalorder %v1423, %v255
        %vm1544 = vcmp.eq.s32.totalorder %v1423, %v256
        %vm1545 = vcmp.eq.s32.totalorder %v1423, %v257
        %vm1546 = vcmp.eq.s32.totalorder %v1423, %v258
        %vm1547 = vcmp.eq.s32.totalorder %v1426, %v251
        %vm1548 = vcmp.eq.s32.totalorder %v1426, %v252
        %vm1549 = vcmp.eq.s32.totalorder %v1426, %v253
        %vm1550 = vcmp.eq.s32.totalorder %v1426, %v254
        %vm1551 = vcmp.eq.s32.totalorder %v1426, %v255
        %vm1552 = vcmp.eq.s32.totalorder %v1426, %v256
        %vm1553 = vcmp.eq.s32.totalorder %v1426, %v257
        %vm1554 = vcmp.eq.s32.totalorder %v1426, %v258
        %v1555 = vsel %vm1427, 1, 0
        %v1556 = vsel %vm1428, 1, 0
        %v1557 = vsel %vm1429, 1, 0
        %v1558 = vsel %vm1430, 1, 0
        %v1559 = vsel %vm1431, 1, 0
        %v1560 = vsel %vm1432, 1, 0
        %v1561 = vsel %vm1433, 1, 0
        %v1562 = vsel %vm1434, 1, 0
        %v1563 = vsel %vm1435, 1, 0
        %v1564 = vsel %vm1436, 1, 0
        %v1565 = vsel %vm1437, 1, 0
        %v1566 = vsel %vm1438, 1, 0
        %v1567 = vsel %vm1439, 1, 0
        %v1568 = vsel %vm1440, 1, 0
        %v1569 = vsel %vm1441, 1, 0
        %v1570 = vsel %vm1442, 1, 0
        %v1571 = vsel %vm1443, 1, 0
        %v1572 = vsel %vm1444, 1, 0
        %v1573 = vsel %vm1445, 1, 0
        %v1574 = vsel %vm1446, 1, 0
        %v1575 = vsel %vm1447, 1, 0
        %v1576 = vsel %vm1448, 1, 0
        %v1577 = vsel %vm1449, 1, 0
        %v1578 = vsel %vm1450, 1, 0
        %v1579 = vsel %vm1451, 1, 0
        %v1580 = vsel %vm1452, 1, 0
        %v1581 = vsel %vm1453, 1, 0
        %v1582 = vsel %vm1454, 1, 0
        %v1583 = vsel %vm1455, 1, 0
        %v1584 = vsel %vm1456, 1, 0
        %v1585 = vsel %vm1457, 1, 0
        %v1586 = vsel %vm1458, 1, 0
        %v1587 = vsel %vm1459, 1, 0
        %v1588 = vsel %vm1460, 1, 0
        %v1589 = vsel %vm1461, 1, 0
        %v1590 = vsel %vm1462, 1, 0
        %v1591 = vsel %vm1463, 1, 0
        %v1592 = vsel %vm1464, 1, 0
        %v1593 = vsel %vm1465, 1, 0
        %v1594 = vsel %vm1466, 1, 0
        %v1595 = vsel %vm1467, 1, 0
        %v1596 = vsel %vm1468, 1, 0
        %v1597 = vsel %vm1469, 1, 0
        %v1598 = vsel %vm1470, 1, 0
        %v1599 = vsel %vm1471, 1, 0
        %v1600 = vsel %vm1472, 1, 0
        %v1601 = vsel %vm1473, 1, 0
        %v1602 = vsel %vm1474, 1, 0
        %v1603 = vsel %vm1475, 1, 0
        %v1604 = vsel %vm1476, 1, 0
        %v1605 = vsel %vm1477, 1, 0
        %v1606 = vsel %vm1478, 1, 0
        %v1607 = vsel %vm1479, 1, 0
        %v1608 = vsel %vm1480, 1, 0
        %v1609 = vsel %vm1481, 1, 0
        %v1610 = vsel %vm1482, 1, 0
        %v1611 = vsel %vm1483, 1, 0
        %v1612 = vsel %vm1484, 1, 0
        %v1613 = vsel %vm1485, 1, 0
        %v1614 = vsel %vm1486, 1, 0
        %v1615 = vsel %vm1487, 1, 0
        %v1616 = vsel %vm1488, 1, 0
        %v1617 = vsel %vm1489, 1, 0
        %v1618 = vsel %vm1490, 1, 0
        %v1619 = vsel %vm1491, 1, 0
        %v1620 = vsel %vm1492, 1, 0
        %v1621 = vsel %vm1493, 1, 0
        %v1622 = vsel %vm1494, 1, 0
        %v1623 = vsel %vm1495, 1, 0
        %v1624 = vsel %vm1496, 1, 0
        %v1625 = vsel %vm1497, 1, 0
        %v1626 = vsel %vm1498, 1, 0
        %v1627 = vsel %vm1499, 1, 0
        %v1628 = vsel %vm1500, 1, 0
        %v1629 = vsel %vm1501, 1, 0
        %v1630 = vsel %vm1502, 1, 0
        %v1631 = vsel %vm1503, 1, 0
        %v1632 = vsel %vm1504, 1, 0
        %v1633 = vsel %vm1505, 1, 0
        %v1634 = vsel %vm1506, 1, 0
        %v1635 = vsel %vm1507, 1, 0
        %v1636 = vsel %vm1508, 1, 0
        %v1637 = vsel %vm1509, 1, 0
        %v1638 = vsel %vm1510, 1, 0
        %v1639 = vsel %vm1511, 1, 0
        %v1640 = vsel %vm1512, 1, 0
        %v1641 = vsel %vm1513, 1, 0
        %v1642 = vsel %vm1514, 1, 0
        %v1643 = vsel %vm1515, 1, 0
        %v1644 = vsel %vm1516, 1, 0
        %v1645 = vsel %vm1517, 1, 0
        %v1646 = vsel %vm1518, 1, 0
        %v1647 = vsel %vm1519, 1, 0
        %v1648 = vsel %vm1520, 1, 0
        %v1649 = vsel %vm1521, 1, 0
        %v1650 = vsel %vm1522, 1, 0
        %v1651 = vsel %vm1523, 1, 0
        %v1652 = vsel %vm1524, 1, 0
        %v1653 = vsel %vm1525, 1, 0
        %v1654 = vsel %vm1526, 1, 0
        %v1655 = vsel %vm1527, 1, 0
        %v1656 = vsel %vm1528, 1, 0
        %v1657 = vsel %vm1529, 1, 0
        %v1658 = vsel %vm1530, 1, 0
        %v1659 = vsel %vm1531, 1, 0
        %v1660 = vsel %vm1532, 1, 0
        %v1661 = vsel %vm1533, 1, 0
        %v1662 = vsel %vm1534, 1, 0
        %v1663 = vsel %vm1535, 1, 0
        %v1664 = vsel %vm1536, 1, 0
        %v1665 = vsel %vm1537, 1, 0
        %v1666 = vsel %vm1538, 1, 0
        %v1667 = vsel %vm1539, 1, 0
        %v1668 = vsel %vm1540, 1, 0
        %v1669 = vsel %vm1541, 1, 0
        %v1670 = vsel %vm1542, 1, 0
        %v1671 = vsel %vm1543, 1, 0
        %v1672 = vsel %vm1544, 1, 0
        %v1673 = vsel %vm1545, 1, 0
        %v1674 = vsel %vm1546, 1, 0
        %v1675 = vsel %vm1547, 1, 0
        %v1676 = vsel %vm1548, 1, 0
        %v1677 = vsel %vm1549, 1, 0
        %v1678 = vsel %vm1550, 1, 0
        %v1679 = vsel %vm1551, 1, 0
        %v1680 = vsel %vm1552, 1, 0
        %v1681 = vsel %vm1553, 1, 0
        %v1682 = vsel %vm1554, 1, 0
        %v1683 = vcvt.s32.f32 %v1555
        %v1684 = vcvt.s32.f32 %v1556
        %v1685 = vcvt.s32.f32 %v1557
        %v1686 = vcvt.s32.f32 %v1558
        %v1687 = vcvt.s32.f32 %v1559
        %v1688 = vcvt.s32.f32 %v1560
        %v1689 = vcvt.s32.f32 %v1561
        %v1690 = vcvt.s32.f32 %v1562
        %v1691 = vcvt.s32.f32 %v1563
        %v1692 = vcvt.s32.f32 %v1564
        %v1693 = vcvt.s32.f32 %v1565
        %v1694 = vcvt.s32.f32 %v1566
        %v1695 = vcvt.s32.f32 %v1567
        %v1696 = vcvt.s32.f32 %v1568
        %v1697 = vcvt.s32.f32 %v1569
        %v1698 = vcvt.s32.f32 %v1570
        %v1699 = vcvt.s32.f32 %v1571
        %v1700 = vcvt.s32.f32 %v1572
        %v1701 = vcvt.s32.f32 %v1573
        %v1702 = vcvt.s32.f32 %v1574
        %v1703 = vcvt.s32.f32 %v1575
        %v1704 = vcvt.s32.f32 %v1576
        %v1705 = vcvt.s32.f32 %v1577
        %v1706 = vcvt.s32.f32 %v1578
        %v1707 = vcvt.s32.f32 %v1579
        %v1708 = vcvt.s32.f32 %v1580
        %v1709 = vcvt.s32.f32 %v1581
        %v1710 = vcvt.s32.f32 %v1582
        %v1711 = vcvt.s32.f32 %v1583
        %v1712 = vcvt.s32.f32 %v1584
        %v1713 = vcvt.s32.f32 %v1585
        %v1714 = vcvt.s32.f32 %v1586
        %v1715 = vcvt.s32.f32 %v1587
        %v1716 = vcvt.s32.f32 %v1588
        %v1717 = vcvt.s32.f32 %v1589
        %v1718 = vcvt.s32.f32 %v1590
        %v1719 = vcvt.s32.f32 %v1591
        %v1720 = vcvt.s32.f32 %v1592
        %v1721 = vcvt.s32.f32 %v1593
        %v1722 = vcvt.s32.f32 %v1594
        %v1723 = vcvt.s32.f32 %v1595
        %v1724 = vcvt.s32.f32 %v1596
        %v1725 = vcvt.s32.f32 %v1597
        %v1726 = vcvt.s32.f32 %v1598
        %v1727 = vcvt.s32.f32 %v1599
        %v1728 = vcvt.s32.f32 %v1600
        %v1729 = vcvt.s32.f32 %v1601
        %v1730 = vcvt.s32.f32 %v1602
        %v1731 = vcvt.s32.f32 %v1603
        %v1732 = vcvt.s32.f32 %v1604
        %v1733 = vcvt.s32.f32 %v1605
        %v1734 = vcvt.s32.f32 %v1606
        %v1735 = vcvt.s32.f32 %v1607
        %v1736 = vcvt.s32.f32 %v1608
        %v1737 = vcvt.s32.f32 %v1609
        %v1738 = vcvt.s32.f32 %v1610
        %v1739 = vcvt.s32.f32 %v1611
        %v1740 = vcvt.s32.f32 %v1612
        %v1741 = vcvt.s32.f32 %v1613
        %v1742 = vcvt.s32.f32 %v1614
        %v1743 = vcvt.s32.f32 %v1615
        %v1744 = vcvt.s32.f32 %v1616
        %v1745 = vcvt.s32.f32 %v1617
        %v1746 = vcvt.s32.f32 %v1618
        %v1747 = vcvt.s32.f32 %v1619
        %v1748 = vcvt.s32.f32 %v1620
        %v1749 = vcvt.s32.f32 %v1621
        %v1750 = vcvt.s32.f32 %v1622
        %v1751 = vcvt.s32.f32 %v1623
        %v1752 = vcvt.s32.f32 %v1624
        %v1753 = vcvt.s32.f32 %v1625
        %v1754 = vcvt.s32.f32 %v1626
        %v1755 = vcvt.s32.f32 %v1627
        %v1756 = vcvt.s32.f32 %v1628
        %v1757 = vcvt.s32.f32 %v1629
        %v1758 = vcvt.s32.f32 %v1630
        %v1759 = vcvt.s32.f32 %v1631
        %v1760 = vcvt.s32.f32 %v1632
        %v1761 = vcvt.s32.f32 %v1633
        %v1762 = vcvt.s32.f32 %v1634
        %v1763 = vcvt.s32.f32 %v1635
        %v1764 = vcvt.s32.f32 %v1636
        %v1765 = vcvt.s32.f32 %v1637
        %v1766 = vcvt.s32.f32 %v1638
        %v1767 = vcvt.s32.f32 %v1639
        %v1768 = vcvt.s32.f32 %v1640
        %v1769 = vcvt.s32.f32 %v1641
        %v1770 = vcvt.s32.f32 %v1642
        %v1771 = vcvt.s32.f32 %v1643
        %v1772 = vcvt.s32.f32 %v1644
        %v1773 = vcvt.s32.f32 %v1645
        %v1774 = vcvt.s32.f32 %v1646
        %v1775 = vcvt.s32.f32 %v1647
        %v1776 = vcvt.s32.f32 %v1648
        %v1777 = vcvt.s32.f32 %v1649
        %v1778 = vcvt.s32.f32 %v1650
        %v1779 = vcvt.s32.f32 %v1651
        %v1780 = vcvt.s32.f32 %v1652
        %v1781 = vcvt.s32.f32 %v1653
        %v1782 = vcvt.s32.f32 %v1654
        %v1783 = vcvt.s32.f32 %v1655
        %v1784 = vcvt.s32.f32 %v1656
        %v1785 = vcvt.s32.f32 %v1657
        %v1786 = vcvt.s32.f32 %v1658
        %v1787 = vcvt.s32.f32 %v1659
        %v1788 = vcvt.s32.f32 %v1660
        %v1789 = vcvt.s32.f32 %v1661
        %v1790 = vcvt.s32.f32 %v1662
        %v1791 = vcvt.s32.f32 %v1663
        %v1792 = vcvt.s32.f32 %v1664
        %v1793 = vcvt.s32.f32 %v1665
        %v1794 = vcvt.s32.f32 %v1666
        %v1795 = vcvt.s32.f32 %v1667
        %v1796 = vcvt.s32.f32 %v1668
        %v1797 = vcvt.s32.f32 %v1669
        %v1798 = vcvt.s32.f32 %v1670
        %v1799 = vcvt.s32.f32 %v1671
        %v1800 = vcvt.s32.f32 %v1672
        %v1801 = vcvt.s32.f32 %v1673
        %v1802 = vcvt.s32.f32 %v1674
        %v1803 = vcvt.s32.f32 %v1675
        %v1804 = vcvt.s32.f32 %v1676
        %v1805 = vcvt.s32.f32 %v1677
        %v1806 = vcvt.s32.f32 %v1678
        %v1807 = vcvt.s32.f32 %v1679
        %v1808 = vcvt.s32.f32 %v1680
        %v1809 = vcvt.s32.f32 %v1681
        %v1810 = vcvt.s32.f32 %v1682
        %v1811 = vadd.f32 %v1251, %v1683
        %v1812 = vadd.f32 %v1252, %v1684
        %v1813 = vadd.f32 %v1253, %v1685
        %v1814 = vadd.f32 %v1254, %v1686
        %v1815 = vadd.f32 %v1255, %v1687
        %v1816 = vadd.f32 %v1256, %v1688
        %v1817 = vadd.f32 %v1257, %v1689
        %v1818 = vadd.f32 %v1258, %v1690
        %v1819 = vadd.f32 %v1259, %v1691
        %v1820 = vadd.f32 %v1260, %v1692
        %v1821 = vadd.f32 %v1261, %v1693
        %v1822 = vadd.f32 %v1262, %v1694
        %v1823 = vadd.f32 %v1263, %v1695
        %v1824 = vadd.f32 %v1264, %v1696
        %v1825 = vadd.f32 %v1265, %v1697
        %v1826 = vadd.f32 %v1266, %v1698
        %v1827 = vadd.f32 %v1267, %v1699
        %v1828 = vadd.f32 %v1268, %v1700
        %v1829 = vadd.f32 %v1269, %v1701
        %v1830 = vadd.f32 %v1270, %v1702
        %v1831 = vadd.f32 %v1271, %v1703
        %v1832 = vadd.f32 %v1272, %v1704
        %v1833 = vadd.f32 %v1273, %v1705
        %v1834 = vadd.f32 %v1274, %v1706
        %v1835 = vadd.f32 %v1275, %v1707
        %v1836 = vadd.f32 %v1276, %v1708
        %v1837 = vadd.f32 %v1277, %v1709
        %v1838 = vadd.f32 %v1278, %v1710
        %v1839 = vadd.f32 %v1279, %v1711
        %v1840 = vadd.f32 %v1280, %v1712
        %v1841 = vadd.f32 %v1281, %v1713
        %v1842 = vadd.f32 %v1282, %v1714
        %v1843 = vadd.f32 %v1283, %v1715
        %v1844 = vadd.f32 %v1284, %v1716
        %v1845 = vadd.f32 %v1285, %v1717
        %v1846 = vadd.f32 %v1286, %v1718
        %v1847 = vadd.f32 %v1287, %v1719
        %v1848 = vadd.f32 %v1288, %v1720
        %v1849 = vadd.f32 %v1289, %v1721
        %v1850 = vadd.f32 %v1290, %v1722
        %v1851 = vadd.f32 %v1291, %v1723
        %v1852 = vadd.f32 %v1292, %v1724
        %v1853 = vadd.f32 %v1293, %v1725
        %v1854 = vadd.f32 %v1294, %v1726
        %v1855 = vadd.f32 %v1295, %v1727
        %v1856 = vadd.f32 %v1296, %v1728
        %v1857 = vadd.f32 %v1297, %v1729
        %v1858 = vadd.f32 %v1298, %v1730
        %v1859 = vadd.f32 %v1299, %v1731
        %v1860 = vadd.f32 %v1300, %v1732
        %v1861 = vadd.f32 %v1301, %v1733
        %v1862 = vadd.f32 %v1302, %v1734
        %v1863 = vadd.f32 %v1303, %v1735
        %v1864 = vadd.f32 %v1304, %v1736
        %v1865 = vadd.f32 %v1305, %v1737
        %v1866 = vadd.f32 %v1306, %v1738
        %v1867 = vadd.f32 %v1307, %v1739
        %v1868 = vadd.f32 %v1308, %v1740
        %v1869 = vadd.f32 %v1309, %v1741
        %v1870 = vadd.f32 %v1310, %v1742
        %v1871 = vadd.f32 %v1311, %v1743
        %v1872 = vadd.f32 %v1312, %v1744
        %v1873 = vadd.f32 %v1313, %v1745
        %v1874 = vadd.f32 %v1314, %v1746
        %v1875 = vadd.f32 %v1315, %v1747
        %v1876 = vadd.f32 %v1316, %v1748
        %v1877 = vadd.f32 %v1317, %v1749
        %v1878 = vadd.f32 %v1318, %v1750
        %v1879 = vadd.f32 %v1319, %v1751
        %v1880 = vadd.f32 %v1320, %v1752
        %v1881 = vadd.f32 %v1321, %v1753
        %v1882 = vadd.f32 %v1322, %v1754
        %v1883 = vadd.f32 %v1323, %v1755
        %v1884 = vadd.f32 %v1324, %v1756
        %v1885 = vadd.f32 %v1325, %v1757
        %v1886 = vadd.f32 %v1326, %v1758
        %v1887 = vadd.f32 %v1327, %v1759
        %v1888 = vadd.f32 %v1328, %v1760
        %v1889 = vadd.f32 %v1329, %v1761
        %v1890 = vadd.f32 %v1330, %v1762
        %v1891 = vadd.f32 %v1331, %v1763
        %v1892 = vadd.f32 %v1332, %v1764
        %v1893 = vadd.f32 %v1333, %v1765
        %v1894 = vadd.f32 %v1334, %v1766
        %v1895 = vadd.f32 %v1335, %v1767
        %v1896 = vadd.f32 %v1336, %v1768
        %v1897 = vadd.f32 %v1337, %v1769
        %v1898 = vadd.f32 %v1338, %v1770
        %v1899 = vadd.f32 %v1339, %v1771
        %v1900 = vadd.f32 %v1340, %v1772
        %v1901 = vadd.f32 %v1341, %v1773
        %v1902 = vadd.f32 %v1342, %v1774
        %v1903 = vadd.f32 %v1343, %v1775
        %v1904 = vadd.f32 %v1344, %v1776
        %v1905 = vadd.f32 %v1345, %v1777
        %v1906 = vadd.f32 %v1346, %v1778
        %v1907 = vadd.f32 %v1347, %v1779
        %v1908 = vadd.f32 %v1348, %v1780
        %v1909 = vadd.f32 %v1349, %v1781
        %v1910 = vadd.f32 %v1350, %v1782
        %v1911 = vadd.f32 %v1351, %v1783
        %v1912 = vadd.f32 %v1352, %v1784
        %v1913 = vadd.f32 %v1353, %v1785
        %v1914 = vadd.f32 %v1354, %v1786
        %v1915 = vadd.f32 %v1355, %v1787
        %v1916 = vadd.f32 %v1356, %v1788
        %v1917 = vadd.f32 %v1357, %v1789
        %v1918 = vadd.f32 %v1358, %v1790
        %v1919 = vadd.f32 %v1359, %v1791
        %v1920 = vadd.f32 %v1360, %v1792
        %v1921 = vadd.f32 %v1361, %v1793
        %v1922 = vadd.f32 %v1362, %v1794
        %v1923 = vadd.f32 %v1363, %v1795
        %v1924 = vadd.f32 %v1364, %v1796
        %v1925 = vadd.f32 %v1365, %v1797
        %v1926 = vadd.f32 %v1366, %v1798
        %v1927 = vadd.f32 %v1367, %v1799
        %v1928 = vadd.f32 %v1368, %v1800
        %v1929 = vadd.f32 %v1369, %v1801
        %v1930 = vadd.f32 %v1370, %v1802
        %v1931 = vadd.f32 %v1371, %v1803
        %v1932 = vadd.f32 %v1372, %v1804
        %v1933 = vadd.f32 %v1373, %v1805
        %v1934 = vadd.f32 %v1374, %v1806
        %v1935 = vadd.f32 %v1375, %v1807
        %v1936 = vadd.f32 %v1376, %v1808
        %v1937 = vadd.f32 %v1377, %v1809
        %v1938 = vadd.f32 %v1378, %v1810
        %1939 = vset.pattern.permute.xlu0 3
        %1940 = vperm.xlu0 %1939, %v234
        %v1941 = vpop.permute.xlu0 %1940
        %1942 = vset.pattern.permute.xlu0 3
        %1943 = vperm.xlu0 %1942, %v235
        %v1944 = vpop.permute.xlu0 %1943
        %1945 = vset.pattern.permute.xlu0 3
        %1946 = vperm.xlu0 %1945, %v236
        %v1947 = vpop.permute.xlu0 %1946
        %1948 = vset.pattern.permute.xlu0 3
        %1949 = vperm.xlu0 %1948, %v237
        %v1950 = vpop.permute.xlu0 %1949
        %1951 = vset.pattern.permute.xlu0 3
        %1952 = vperm.xlu0 %1951, %v238
        %v1953 = vpop.permute.xlu0 %1952
        %1954 = vset.pattern.permute.xlu0 3
        %1955 = vperm.xlu0 %1954, %v239
        %v1956 = vpop.permute.xlu0 %1955
        %1957 = vset.pattern.permute.xlu0 3
        %1958 = vperm.xlu0 %1957, %v240
        %v1959 = vpop.permute.xlu0 %1958
        %1960 = vset.pattern.permute.xlu0 3
        %1961 = vperm.xlu0 %1960, %v241
        %v1962 = vpop.permute.xlu0 %1961
        %1963 = vset.pattern.permute.xlu0 3
        %1964 = vperm.xlu0 %1963, %v242
        %v1965 = vpop.permute.xlu0 %1964
        %1966 = vset.pattern.permute.xlu0 3
        %1967 = vperm.xlu0 %1966, %v243
        %v1968 = vpop.permute.xlu0 %1967
        %1969 = vset.pattern.permute.xlu0 3
        %1970 = vperm.xlu0 %1969, %v244
        %v1971 = vpop.permute.xlu0 %1970
        %1972 = vset.pattern.permute.xlu0 3
        %1973 = vperm.xlu0 %1972, %v245
        %v1974 = vpop.permute.xlu0 %1973
        %1975 = vset.pattern.permute.xlu0 3
        %1976 = vperm.xlu0 %1975, %v246
        %v1977 = vpop.permute.xlu0 %1976
        %1978 = vset.pattern.permute.xlu0 3
        %1979 = vperm.xlu0 %1978, %v247
        %v1980 = vpop.permute.xlu0 %1979
        %1981 = vset.pattern.permute.xlu0 3
        %1982 = vperm.xlu0 %1981, %v248
        %v1983 = vpop.permute.xlu0 %1982
        %1984 = vset.pattern.permute.xlu0 3
        %1985 = vperm.xlu0 %1984, %v249
        %v1986 = vpop.permute.xlu0 %1985
        %vm1987 = vcmp.eq.s32.totalorder %v1941, %v251
        %vm1988 = vcmp.eq.s32.totalorder %v1941, %v252
        %vm1989 = vcmp.eq.s32.totalorder %v1941, %v253
        %vm1990 = vcmp.eq.s32.totalorder %v1941, %v254
        %vm1991 = vcmp.eq.s32.totalorder %v1941, %v255
        %vm1992 = vcmp.eq.s32.totalorder %v1941, %v256
        %vm1993 = vcmp.eq.s32.totalorder %v1941, %v257
        %vm1994 = vcmp.eq.s32.totalorder %v1941, %v258
        %vm1995 = vcmp.eq.s32.totalorder %v1944, %v251
        %vm1996 = vcmp.eq.s32.totalorder %v1944, %v252
        %vm1997 = vcmp.eq.s32.totalorder %v1944, %v253
        %vm1998 = vcmp.eq.s32.totalorder %v1944, %v254
        %vm1999 = vcmp.eq.s32.totalorder %v1944, %v255
        %vm2000 = vcmp.eq.s32.totalorder %v1944, %v256
        %vm2001 = vcmp.eq.s32.totalorder %v1944, %v257
        %vm2002 = vcmp.eq.s32.totalorder %v1944, %v258
        %vm2003 = vcmp.eq.s32.totalorder %v1947, %v251
        %vm2004 = vcmp.eq.s32.totalorder %v1947, %v252
        %vm2005 = vcmp.eq.s32.totalorder %v1947, %v253
        %vm2006 = vcmp.eq.s32.totalorder %v1947, %v254
        %vm2007 = vcmp.eq.s32.totalorder %v1947, %v255
        %vm2008 = vcmp.eq.s32.totalorder %v1947, %v256
        %vm2009 = vcmp.eq.s32.totalorder %v1947, %v257
        %vm2010 = vcmp.eq.s32.totalorder %v1947, %v258
        %vm2011 = vcmp.eq.s32.totalorder %v1950, %v251
        %vm2012 = vcmp.eq.s32.totalorder %v1950, %v252
        %vm2013 = vcmp.eq.s32.totalorder %v1950, %v253
        %vm2014 = vcmp.eq.s32.totalorder %v1950, %v254
        %vm2015 = vcmp.eq.s32.totalorder %v1950, %v255
        %vm2016 = vcmp.eq.s32.totalorder %v1950, %v256
        %vm2017 = vcmp.eq.s32.totalorder %v1950, %v257
        %vm2018 = vcmp.eq.s32.totalorder %v1950, %v258
        %vm2019 = vcmp.eq.s32.totalorder %v1953, %v251
        %vm2020 = vcmp.eq.s32.totalorder %v1953, %v252
        %vm2021 = vcmp.eq.s32.totalorder %v1953, %v253
        %vm2022 = vcmp.eq.s32.totalorder %v1953, %v254
        %vm2023 = vcmp.eq.s32.totalorder %v1953, %v255
        %vm2024 = vcmp.eq.s32.totalorder %v1953, %v256
        %vm2025 = vcmp.eq.s32.totalorder %v1953, %v257
        %vm2026 = vcmp.eq.s32.totalorder %v1953, %v258
        %vm2027 = vcmp.eq.s32.totalorder %v1956, %v251
        %vm2028 = vcmp.eq.s32.totalorder %v1956, %v252
        %vm2029 = vcmp.eq.s32.totalorder %v1956, %v253
        %vm2030 = vcmp.eq.s32.totalorder %v1956, %v254
        %vm2031 = vcmp.eq.s32.totalorder %v1956, %v255
        %vm2032 = vcmp.eq.s32.totalorder %v1956, %v256
        %vm2033 = vcmp.eq.s32.totalorder %v1956, %v257
        %vm2034 = vcmp.eq.s32.totalorder %v1956, %v258
        %vm2035 = vcmp.eq.s32.totalorder %v1959, %v251
        %vm2036 = vcmp.eq.s32.totalorder %v1959, %v252
        %vm2037 = vcmp.eq.s32.totalorder %v1959, %v253
        %vm2038 = vcmp.eq.s32.totalorder %v1959, %v254
        %vm2039 = vcmp.eq.s32.totalorder %v1959, %v255
        %vm2040 = vcmp.eq.s32.totalorder %v1959, %v256
        %vm2041 = vcmp.eq.s32.totalorder %v1959, %v257
        %vm2042 = vcmp.eq.s32.totalorder %v1959, %v258
        %vm2043 = vcmp.eq.s32.totalorder %v1962, %v251
        %vm2044 = vcmp.eq.s32.totalorder %v1962, %v252
        %vm2045 = vcmp.eq.s32.totalorder %v1962, %v253
        %vm2046 = vcmp.eq.s32.totalorder %v1962, %v254
        %vm2047 = vcmp.eq.s32.totalorder %v1962, %v255
        %vm2048 = vcmp.eq.s32.totalorder %v1962, %v256
        %vm2049 = vcmp.eq.s32.totalorder %v1962, %v257
        %vm2050 = vcmp.eq.s32.totalorder %v1962, %v258
        %vm2051 = vcmp.eq.s32.totalorder %v1965, %v251
        %vm2052 = vcmp.eq.s32.totalorder %v1965, %v252
        %vm2053 = vcmp.eq.s32.totalorder %v1965, %v253
        %vm2054 = vcmp.eq.s32.totalorder %v1965, %v254
        %vm2055 = vcmp.eq.s32.totalorder %v1965, %v255
        %vm2056 = vcmp.eq.s32.totalorder %v1965, %v256
        %vm2057 = vcmp.eq.s32.totalorder %v1965, %v257
        %vm2058 = vcmp.eq.s32.totalorder %v1965, %v258
        %vm2059 = vcmp.eq.s32.totalorder %v1968, %v251
        %vm2060 = vcmp.eq.s32.totalorder %v1968, %v252
        %vm2061 = vcmp.eq.s32.totalorder %v1968, %v253
        %vm2062 = vcmp.eq.s32.totalorder %v1968, %v254
        %vm2063 = vcmp.eq.s32.totalorder %v1968, %v255
        %vm2064 = vcmp.eq.s32.totalorder %v1968, %v256
        %vm2065 = vcmp.eq.s32.totalorder %v1968, %v257
        %vm2066 = vcmp.eq.s32.totalorder %v1968, %v258
        %vm2067 = vcmp.eq.s32.totalorder %v1971, %v251
        %vm2068 = vcmp.eq.s32.totalorder %v1971, %v252
        %vm2069 = vcmp.eq.s32.totalorder %v1971, %v253
        %vm2070 = vcmp.eq.s32.totalorder %v1971, %v254
        %vm2071 = vcmp.eq.s32.totalorder %v1971, %v255
        %vm2072 = vcmp.eq.s32.totalorder %v1971, %v256
        %vm2073 = vcmp.eq.s32.totalorder %v1971, %v257
        %vm2074 = vcmp.eq.s32.totalorder %v1971, %v258
        %vm2075 = vcmp.eq.s32.totalorder %v1974, %v251
        %vm2076 = vcmp.eq.s32.totalorder %v1974, %v252
        %vm2077 = vcmp.eq.s32.totalorder %v1974, %v253
        %vm2078 = vcmp.eq.s32.totalorder %v1974, %v254
        %vm2079 = vcmp.eq.s32.totalorder %v1974, %v255
        %vm2080 = vcmp.eq.s32.totalorder %v1974, %v256
        %vm2081 = vcmp.eq.s32.totalorder %v1974, %v257
        %vm2082 = vcmp.eq.s32.totalorder %v1974, %v258
        %vm2083 = vcmp.eq.s32.totalorder %v1977, %v251
        %vm2084 = vcmp.eq.s32.totalorder %v1977, %v252
        %vm2085 = vcmp.eq.s32.totalorder %v1977, %v253
        %vm2086 = vcmp.eq.s32.totalorder %v1977, %v254
        %vm2087 = vcmp.eq.s32.totalorder %v1977, %v255
        %vm2088 = vcmp.eq.s32.totalorder %v1977, %v256
        %vm2089 = vcmp.eq.s32.totalorder %v1977, %v257
        %vm2090 = vcmp.eq.s32.totalorder %v1977, %v258
        %vm2091 = vcmp.eq.s32.totalorder %v1980, %v251
        %vm2092 = vcmp.eq.s32.totalorder %v1980, %v252
        %vm2093 = vcmp.eq.s32.totalorder %v1980, %v253
        %vm2094 = vcmp.eq.s32.totalorder %v1980, %v254
        %vm2095 = vcmp.eq.s32.totalorder %v1980, %v255
        %vm2096 = vcmp.eq.s32.totalorder %v1980, %v256
        %vm2097 = vcmp.eq.s32.totalorder %v1980, %v257
        %vm2098 = vcmp.eq.s32.totalorder %v1980, %v258
        %vm2099 = vcmp.eq.s32.totalorder %v1983, %v251
        %vm2100 = vcmp.eq.s32.totalorder %v1983, %v252
        %vm2101 = vcmp.eq.s32.totalorder %v1983, %v253
        %vm2102 = vcmp.eq.s32.totalorder %v1983, %v254
        %vm2103 = vcmp.eq.s32.totalorder %v1983, %v255
        %vm2104 = vcmp.eq.s32.totalorder %v1983, %v256
        %vm2105 = vcmp.eq.s32.totalorder %v1983, %v257
        %vm2106 = vcmp.eq.s32.totalorder %v1983, %v258
        %vm2107 = vcmp.eq.s32.totalorder %v1986, %v251
        %vm2108 = vcmp.eq.s32.totalorder %v1986, %v252
        %vm2109 = vcmp.eq.s32.totalorder %v1986, %v253
        %vm2110 = vcmp.eq.s32.totalorder %v1986, %v254
        %vm2111 = vcmp.eq.s32.totalorder %v1986, %v255
        %vm2112 = vcmp.eq.s32.totalorder %v1986, %v256
        %vm2113 = vcmp.eq.s32.totalorder %v1986, %v257
        %vm2114 = vcmp.eq.s32.totalorder %v1986, %v258
        %v2115 = vsel %vm1987, 1, 0
        %v2116 = vsel %vm1988, 1, 0
        %v2117 = vsel %vm1989, 1, 0
        %v2118 = vsel %vm1990, 1, 0
        %v2119 = vsel %vm1991, 1, 0
        %v2120 = vsel %vm1992, 1, 0
        %v2121 = vsel %vm1993, 1, 0
        %v2122 = vsel %vm1994, 1, 0
        %v2123 = vsel %vm1995, 1, 0
        %v2124 = vsel %vm1996, 1, 0
        %v2125 = vsel %vm1997, 1, 0
        %v2126 = vsel %vm1998, 1, 0
        %v2127 = vsel %vm1999, 1, 0
        %v2128 = vsel %vm2000, 1, 0
        %v2129 = vsel %vm2001, 1, 0
        %v2130 = vsel %vm2002, 1, 0
        %v2131 = vsel %vm2003, 1, 0
        %v2132 = vsel %vm2004, 1, 0
        %v2133 = vsel %vm2005, 1, 0
        %v2134 = vsel %vm2006, 1, 0
        %v2135 = vsel %vm2007, 1, 0
        %v2136 = vsel %vm2008, 1, 0
        %v2137 = vsel %vm2009, 1, 0
        %v2138 = vsel %vm2010, 1, 0
        %v2139 = vsel %vm2011, 1, 0
        %v2140 = vsel %vm2012, 1, 0
        %v2141 = vsel %vm2013, 1, 0
        %v2142 = vsel %vm2014, 1, 0
        %v2143 = vsel %vm2015, 1, 0
        %v2144 = vsel %vm2016, 1, 0
        %v2145 = vsel %vm2017, 1, 0
        %v2146 = vsel %vm2018, 1, 0
        %v2147 = vsel %vm2019, 1, 0
        %v2148 = vsel %vm2020, 1, 0
        %v2149 = vsel %vm2021, 1, 0
        %v2150 = vsel %vm2022, 1, 0
        %v2151 = vsel %vm2023, 1, 0
        %v2152 = vsel %vm2024, 1, 0
        %v2153 = vsel %vm2025, 1, 0
        %v2154 = vsel %vm2026, 1, 0
        %v2155 = vsel %vm2027, 1, 0
        %v2156 = vsel %vm2028, 1, 0
        %v2157 = vsel %vm2029, 1, 0
        %v2158 = vsel %vm2030, 1, 0
        %v2159 = vsel %vm2031, 1, 0
        %v2160 = vsel %vm2032, 1, 0
        %v2161 = vsel %vm2033, 1, 0
        %v2162 = vsel %vm2034, 1, 0
        %v2163 = vsel %vm2035, 1, 0
        %v2164 = vsel %vm2036, 1, 0
        %v2165 = vsel %vm2037, 1, 0
        %v2166 = vsel %vm2038, 1, 0
        %v2167 = vsel %vm2039, 1, 0
        %v2168 = vsel %vm2040, 1, 0
        %v2169 = vsel %vm2041, 1, 0
        %v2170 = vsel %vm2042, 1, 0
        %v2171 = vsel %vm2043, 1, 0
        %v2172 = vsel %vm2044, 1, 0
        %v2173 = vsel %vm2045, 1, 0
        %v2174 = vsel %vm2046, 1, 0
        %v2175 = vsel %vm2047, 1, 0
        %v2176 = vsel %vm2048, 1, 0
        %v2177 = vsel %vm2049, 1, 0
        %v2178 = vsel %vm2050, 1, 0
        %v2179 = vsel %vm2051, 1, 0
        %v2180 = vsel %vm2052, 1, 0
        %v2181 = vsel %vm2053, 1, 0
        %v2182 = vsel %vm2054, 1, 0
        %v2183 = vsel %vm2055, 1, 0
        %v2184 = vsel %vm2056, 1, 0
        %v2185 = vsel %vm2057, 1, 0
        %v2186 = vsel %vm2058, 1, 0
        %v2187 = vsel %vm2059, 1, 0
        %v2188 = vsel %vm2060, 1, 0
        %v2189 = vsel %vm2061, 1, 0
        %v2190 = vsel %vm2062, 1, 0
        %v2191 = vsel %vm2063, 1, 0
        %v2192 = vsel %vm2064, 1, 0
        %v2193 = vsel %vm2065, 1, 0
        %v2194 = vsel %vm2066, 1, 0
        %v2195 = vsel %vm2067, 1, 0
        %v2196 = vsel %vm2068, 1, 0
        %v2197 = vsel %vm2069, 1, 0
        %v2198 = vsel %vm2070, 1, 0
        %v2199 = vsel %vm2071, 1, 0
        %v2200 = vsel %vm2072, 1, 0
        %v2201 = vsel %vm2073, 1, 0
        %v2202 = vsel %vm2074, 1, 0
        %v2203 = vsel %vm2075, 1, 0
        %v2204 = vsel %vm2076, 1, 0
        %v2205 = vsel %vm2077, 1, 0
        %v2206 = vsel %vm2078, 1, 0
        %v2207 = vsel %vm2079, 1, 0
        %v2208 = vsel %vm2080, 1, 0
        %v2209 = vsel %vm2081, 1, 0
        %v2210 = vsel %vm2082, 1, 0
        %v2211 = vsel %vm2083, 1, 0
        %v2212 = vsel %vm2084, 1, 0
        %v2213 = vsel %vm2085, 1, 0
        %v2214 = vsel %vm2086, 1, 0
        %v2215 = vsel %vm2087, 1, 0
        %v2216 = vsel %vm2088, 1, 0
        %v2217 = vsel %vm2089, 1, 0
        %v2218 = vsel %vm2090, 1, 0
        %v2219 = vsel %vm2091, 1, 0
        %v2220 = vsel %vm2092, 1, 0
        %v2221 = vsel %vm2093, 1, 0
        %v2222 = vsel %vm2094, 1, 0
        %v2223 = vsel %vm2095, 1, 0
        %v2224 = vsel %vm2096, 1, 0
        %v2225 = vsel %vm2097, 1, 0
        %v2226 = vsel %vm2098, 1, 0
        %v2227 = vsel %vm2099, 1, 0
        %v2228 = vsel %vm2100, 1, 0
        %v2229 = vsel %vm2101, 1, 0
        %v2230 = vsel %vm2102, 1, 0
        %v2231 = vsel %vm2103, 1, 0
        %v2232 = vsel %vm2104, 1, 0
        %v2233 = vsel %vm2105, 1, 0
        %v2234 = vsel %vm2106, 1, 0
        %v2235 = vsel %vm2107, 1, 0
        %v2236 = vsel %vm2108, 1, 0
        %v2237 = vsel %vm2109, 1, 0
        %v2238 = vsel %vm2110, 1, 0
        %v2239 = vsel %vm2111, 1, 0
        %v2240 = vsel %vm2112, 1, 0
        %v2241 = vsel %vm2113, 1, 0
        %v2242 = vsel %vm2114, 1, 0
        %v2243 = vcvt.s32.f32 %v2115
        %v2244 = vcvt.s32.f32 %v2116
        %v2245 = vcvt.s32.f32 %v2117
        %v2246 = vcvt.s32.f32 %v2118
        %v2247 = vcvt.s32.f32 %v2119
        %v2248 = vcvt.s32.f32 %v2120
        %v2249 = vcvt.s32.f32 %v2121
        %v2250 = vcvt.s32.f32 %v2122
        %v2251 = vcvt.s32.f32 %v2123
        %v2252 = vcvt.s32.f32 %v2124
        %v2253 = vcvt.s32.f32 %v2125
        %v2254 = vcvt.s32.f32 %v2126
        %v2255 = vcvt.s32.f32 %v2127
        %v2256 = vcvt.s32.f32 %v2128
        %v2257 = vcvt.s32.f32 %v2129
        %v2258 = vcvt.s32.f32 %v2130
        %v2259 = vcvt.s32.f32 %v2131
        %v2260 = vcvt.s32.f32 %v2132
        %v2261 = vcvt.s32.f32 %v2133
        %v2262 = vcvt.s32.f32 %v2134
        %v2263 = vcvt.s32.f32 %v2135
        %v2264 = vcvt.s32.f32 %v2136
        %v2265 = vcvt.s32.f32 %v2137
        %v2266 = vcvt.s32.f32 %v2138
        %v2267 = vcvt.s32.f32 %v2139
        %v2268 = vcvt.s32.f32 %v2140
        %v2269 = vcvt.s32.f32 %v2141
        %v2270 = vcvt.s32.f32 %v2142
        %v2271 = vcvt.s32.f32 %v2143
        %v2272 = vcvt.s32.f32 %v2144
        %v2273 = vcvt.s32.f32 %v2145
        %v2274 = vcvt.s32.f32 %v2146
        %v2275 = vcvt.s32.f32 %v2147
        %v2276 = vcvt.s32.f32 %v2148
        %v2277 = vcvt.s32.f32 %v2149
        %v2278 = vcvt.s32.f32 %v2150
        %v2279 = vcvt.s32.f32 %v2151
        %v2280 = vcvt.s32.f32 %v2152
        %v2281 = vcvt.s32.f32 %v2153
        %v2282 = vcvt.s32.f32 %v2154
        %v2283 = vcvt.s32.f32 %v2155
        %v2284 = vcvt.s32.f32 %v2156
        %v2285 = vcvt.s32.f32 %v2157
        %v2286 = vcvt.s32.f32 %v2158
        %v2287 = vcvt.s32.f32 %v2159
        %v2288 = vcvt.s32.f32 %v2160
        %v2289 = vcvt.s32.f32 %v2161
        %v2290 = vcvt.s32.f32 %v2162
        %v2291 = vcvt.s32.f32 %v2163
        %v2292 = vcvt.s32.f32 %v2164
        %v2293 = vcvt.s32.f32 %v2165
        %v2294 = vcvt.s32.f32 %v2166
        %v2295 = vcvt.s32.f32 %v2167
        %v2296 = vcvt.s32.f32 %v2168
        %v2297 = vcvt.s32.f32 %v2169
        %v2298 = vcvt.s32.f32 %v2170
        %v2299 = vcvt.s32.f32 %v2171
        %v2300 = vcvt.s32.f32 %v2172
        %v2301 = vcvt.s32.f32 %v2173
        %v2302 = vcvt.s32.f32 %v2174
        %v2303 = vcvt.s32.f32 %v2175
        %v2304 = vcvt.s32.f32 %v2176
        %v2305 = vcvt.s32.f32 %v2177
        %v2306 = vcvt.s32.f32 %v2178
        %v2307 = vcvt.s32.f32 %v2179
        %v2308 = vcvt.s32.f32 %v2180
        %v2309 = vcvt.s32.f32 %v2181
        %v2310 = vcvt.s32.f32 %v2182
        %v2311 = vcvt.s32.f32 %v2183
        %v2312 = vcvt.s32.f32 %v2184
        %v2313 = vcvt.s32.f32 %v2185
        %v2314 = vcvt.s32.f32 %v2186
        %v2315 = vcvt.s32.f32 %v2187
        %v2316 = vcvt.s32.f32 %v2188
        %v2317 = vcvt.s32.f32 %v2189
        %v2318 = vcvt.s32.f32 %v2190
        %v2319 = vcvt.s32.f32 %v2191
        %v2320 = vcvt.s32.f32 %v2192
        %v2321 = vcvt.s32.f32 %v2193
        %v2322 = vcvt.s32.f32 %v2194
        %v2323 = vcvt.s32.f32 %v2195
        %v2324 = vcvt.s32.f32 %v2196
        %v2325 = vcvt.s32.f32 %v2197
        %v2326 = vcvt.s32.f32 %v2198
        %v2327 = vcvt.s32.f32 %v2199
        %v2328 = vcvt.s32.f32 %v2200
        %v2329 = vcvt.s32.f32 %v2201
        %v2330 = vcvt.s32.f32 %v2202
        %v2331 = vcvt.s32.f32 %v2203
        %v2332 = vcvt.s32.f32 %v2204
        %v2333 = vcvt.s32.f32 %v2205
        %v2334 = vcvt.s32.f32 %v2206
        %v2335 = vcvt.s32.f32 %v2207
        %v2336 = vcvt.s32.f32 %v2208
        %v2337 = vcvt.s32.f32 %v2209
        %v2338 = vcvt.s32.f32 %v2210
        %v2339 = vcvt.s32.f32 %v2211
        %v2340 = vcvt.s32.f32 %v2212
        %v2341 = vcvt.s32.f32 %v2213
        %v2342 = vcvt.s32.f32 %v2214
        %v2343 = vcvt.s32.f32 %v2215
        %v2344 = vcvt.s32.f32 %v2216
        %v2345 = vcvt.s32.f32 %v2217
        %v2346 = vcvt.s32.f32 %v2218
        %v2347 = vcvt.s32.f32 %v2219
        %v2348 = vcvt.s32.f32 %v2220
        %v2349 = vcvt.s32.f32 %v2221
        %v2350 = vcvt.s32.f32 %v2222
        %v2351 = vcvt.s32.f32 %v2223
        %v2352 = vcvt.s32.f32 %v2224
        %v2353 = vcvt.s32.f32 %v2225
        %v2354 = vcvt.s32.f32 %v2226
        %v2355 = vcvt.s32.f32 %v2227
        %v2356 = vcvt.s32.f32 %v2228
        %v2357 = vcvt.s32.f32 %v2229
        %v2358 = vcvt.s32.f32 %v2230
        %v2359 = vcvt.s32.f32 %v2231
        %v2360 = vcvt.s32.f32 %v2232
        %v2361 = vcvt.s32.f32 %v2233
        %v2362 = vcvt.s32.f32 %v2234
        %v2363 = vcvt.s32.f32 %v2235
        %v2364 = vcvt.s32.f32 %v2236
        %v2365 = vcvt.s32.f32 %v2237
        %v2366 = vcvt.s32.f32 %v2238
        %v2367 = vcvt.s32.f32 %v2239
        %v2368 = vcvt.s32.f32 %v2240
        %v2369 = vcvt.s32.f32 %v2241
        %v2370 = vcvt.s32.f32 %v2242
        %v2371 = vadd.f32 %v1811, %v2243
        %v2372 = vadd.f32 %v1812, %v2244
        %v2373 = vadd.f32 %v1813, %v2245
        %v2374 = vadd.f32 %v1814, %v2246
        %v2375 = vadd.f32 %v1815, %v2247
        %v2376 = vadd.f32 %v1816, %v2248
        %v2377 = vadd.f32 %v1817, %v2249
        %v2378 = vadd.f32 %v1818, %v2250
        %v2379 = vadd.f32 %v1819, %v2251
        %v2380 = vadd.f32 %v1820, %v2252
        %v2381 = vadd.f32 %v1821, %v2253
        %v2382 = vadd.f32 %v1822, %v2254
        %v2383 = vadd.f32 %v1823, %v2255
        %v2384 = vadd.f32 %v1824, %v2256
        %v2385 = vadd.f32 %v1825, %v2257
        %v2386 = vadd.f32 %v1826, %v2258
        %v2387 = vadd.f32 %v1827, %v2259
        %v2388 = vadd.f32 %v1828, %v2260
        %v2389 = vadd.f32 %v1829, %v2261
        %v2390 = vadd.f32 %v1830, %v2262
        %v2391 = vadd.f32 %v1831, %v2263
        %v2392 = vadd.f32 %v1832, %v2264
        %v2393 = vadd.f32 %v1833, %v2265
        %v2394 = vadd.f32 %v1834, %v2266
        %v2395 = vadd.f32 %v1835, %v2267
        %v2396 = vadd.f32 %v1836, %v2268
        %v2397 = vadd.f32 %v1837, %v2269
        %v2398 = vadd.f32 %v1838, %v2270
        %v2399 = vadd.f32 %v1839, %v2271
        %v2400 = vadd.f32 %v1840, %v2272
        %v2401 = vadd.f32 %v1841, %v2273
        %v2402 = vadd.f32 %v1842, %v2274
        %v2403 = vadd.f32 %v1843, %v2275
        %v2404 = vadd.f32 %v1844, %v2276
        %v2405 = vadd.f32 %v1845, %v2277
        %v2406 = vadd.f32 %v1846, %v2278
        %v2407 = vadd.f32 %v1847, %v2279
        %v2408 = vadd.f32 %v1848, %v2280
        %v2409 = vadd.f32 %v1849, %v2281
        %v2410 = vadd.f32 %v1850, %v2282
        %v2411 = vadd.f32 %v1851, %v2283
        %v2412 = vadd.f32 %v1852, %v2284
        %v2413 = vadd.f32 %v1853, %v2285
        %v2414 = vadd.f32 %v1854, %v2286
        %v2415 = vadd.f32 %v1855, %v2287
        %v2416 = vadd.f32 %v1856, %v2288
        %v2417 = vadd.f32 %v1857, %v2289
        %v2418 = vadd.f32 %v1858, %v2290
        %v2419 = vadd.f32 %v1859, %v2291
        %v2420 = vadd.f32 %v1860, %v2292
        %v2421 = vadd.f32 %v1861, %v2293
        %v2422 = vadd.f32 %v1862, %v2294
        %v2423 = vadd.f32 %v1863, %v2295
        %v2424 = vadd.f32 %v1864, %v2296
        %v2425 = vadd.f32 %v1865, %v2297
        %v2426 = vadd.f32 %v1866, %v2298
        %v2427 = vadd.f32 %v1867, %v2299
        %v2428 = vadd.f32 %v1868, %v2300
        %v2429 = vadd.f32 %v1869, %v2301
        %v2430 = vadd.f32 %v1870, %v2302
        %v2431 = vadd.f32 %v1871, %v2303
        %v2432 = vadd.f32 %v1872, %v2304
        %v2433 = vadd.f32 %v1873, %v2305
        %v2434 = vadd.f32 %v1874, %v2306
        %v2435 = vadd.f32 %v1875, %v2307
        %v2436 = vadd.f32 %v1876, %v2308
        %v2437 = vadd.f32 %v1877, %v2309
        %v2438 = vadd.f32 %v1878, %v2310
        %v2439 = vadd.f32 %v1879, %v2311
        %v2440 = vadd.f32 %v1880, %v2312
        %v2441 = vadd.f32 %v1881, %v2313
        %v2442 = vadd.f32 %v1882, %v2314
        %v2443 = vadd.f32 %v1883, %v2315
        %v2444 = vadd.f32 %v1884, %v2316
        %v2445 = vadd.f32 %v1885, %v2317
        %v2446 = vadd.f32 %v1886, %v2318
        %v2447 = vadd.f32 %v1887, %v2319
        %v2448 = vadd.f32 %v1888, %v2320
        %v2449 = vadd.f32 %v1889, %v2321
        %v2450 = vadd.f32 %v1890, %v2322
        %v2451 = vadd.f32 %v1891, %v2323
        %v2452 = vadd.f32 %v1892, %v2324
        %v2453 = vadd.f32 %v1893, %v2325
        %v2454 = vadd.f32 %v1894, %v2326
        %v2455 = vadd.f32 %v1895, %v2327
        %v2456 = vadd.f32 %v1896, %v2328
        %v2457 = vadd.f32 %v1897, %v2329
        %v2458 = vadd.f32 %v1898, %v2330
        %v2459 = vadd.f32 %v1899, %v2331
        %v2460 = vadd.f32 %v1900, %v2332
        %v2461 = vadd.f32 %v1901, %v2333
        %v2462 = vadd.f32 %v1902, %v2334
        %v2463 = vadd.f32 %v1903, %v2335
        %v2464 = vadd.f32 %v1904, %v2336
        %v2465 = vadd.f32 %v1905, %v2337
        %v2466 = vadd.f32 %v1906, %v2338
        %v2467 = vadd.f32 %v1907, %v2339
        %v2468 = vadd.f32 %v1908, %v2340
        %v2469 = vadd.f32 %v1909, %v2341
        %v2470 = vadd.f32 %v1910, %v2342
        %v2471 = vadd.f32 %v1911, %v2343
        %v2472 = vadd.f32 %v1912, %v2344
        %v2473 = vadd.f32 %v1913, %v2345
        %v2474 = vadd.f32 %v1914, %v2346
        %v2475 = vadd.f32 %v1915, %v2347
        %v2476 = vadd.f32 %v1916, %v2348
        %v2477 = vadd.f32 %v1917, %v2349
        %v2478 = vadd.f32 %v1918, %v2350
        %v2479 = vadd.f32 %v1919, %v2351
        %v2480 = vadd.f32 %v1920, %v2352
        %v2481 = vadd.f32 %v1921, %v2353
        %v2482 = vadd.f32 %v1922, %v2354
        %v2483 = vadd.f32 %v1923, %v2355
        %v2484 = vadd.f32 %v1924, %v2356
        %v2485 = vadd.f32 %v1925, %v2357
        %v2486 = vadd.f32 %v1926, %v2358
        %v2487 = vadd.f32 %v1927, %v2359
        %v2488 = vadd.f32 %v1928, %v2360
        %v2489 = vadd.f32 %v1929, %v2361
        %v2490 = vadd.f32 %v1930, %v2362
        %v2491 = vadd.f32 %v1931, %v2363
        %v2492 = vadd.f32 %v1932, %v2364
        %v2493 = vadd.f32 %v1933, %v2365
        %v2494 = vadd.f32 %v1934, %v2366
        %v2495 = vadd.f32 %v1935, %v2367
        %v2496 = vadd.f32 %v1936, %v2368
        %v2497 = vadd.f32 %v1937, %v2369
        %v2498 = vadd.f32 %v1938, %v2370
        %v2499 = vpack.c.bf16 %v2379, %v2371
        %v2500 = vpack.c.bf16 %v2380, %v2372
        %v2501 = vpack.c.bf16 %v2381, %v2373
        %v2502 = vpack.c.bf16 %v2382, %v2374
        %v2503 = vpack.c.bf16 %v2383, %v2375
        %v2504 = vpack.c.bf16 %v2384, %v2376
        %v2505 = vpack.c.bf16 %v2385, %v2377
        %v2506 = vpack.c.bf16 %v2386, %v2378
        %v2507 = vpack.c.bf16 %v2395, %v2387
        %v2508 = vpack.c.bf16 %v2396, %v2388
        %v2509 = vpack.c.bf16 %v2397, %v2389
        %v2510 = vpack.c.bf16 %v2398, %v2390
        %v2511 = vpack.c.bf16 %v2399, %v2391
        %v2512 = vpack.c.bf16 %v2400, %v2392
        %v2513 = vpack.c.bf16 %v2401, %v2393
        %v2514 = vpack.c.bf16 %v2402, %v2394
        %v2515 = vpack.c.bf16 %v2411, %v2403
        %v2516 = vpack.c.bf16 %v2412, %v2404
        %v2517 = vpack.c.bf16 %v2413, %v2405
        %v2518 = vpack.c.bf16 %v2414, %v2406
        %v2519 = vpack.c.bf16 %v2415, %v2407
        %v2520 = vpack.c.bf16 %v2416, %v2408
        %v2521 = vpack.c.bf16 %v2417, %v2409
        %v2522 = vpack.c.bf16 %v2418, %v2410
        %v2523 = vpack.c.bf16 %v2427, %v2419
        %v2524 = vpack.c.bf16 %v2428, %v2420
        %v2525 = vpack.c.bf16 %v2429, %v2421
        %v2526 = vpack.c.bf16 %v2430, %v2422
        %v2527 = vpack.c.bf16 %v2431, %v2423
        %v2528 = vpack.c.bf16 %v2432, %v2424
        %v2529 = vpack.c.bf16 %v2433, %v2425
        %v2530 = vpack.c.bf16 %v2434, %v2426
        %v2531 = vpack.c.bf16 %v2443, %v2435
        %v2532 = vpack.c.bf16 %v2444, %v2436
        %v2533 = vpack.c.bf16 %v2445, %v2437
        %v2534 = vpack.c.bf16 %v2446, %v2438
        %v2535 = vpack.c.bf16 %v2447, %v2439
        %v2536 = vpack.c.bf16 %v2448, %v2440
        %v2537 = vpack.c.bf16 %v2449, %v2441
        %v2538 = vpack.c.bf16 %v2450, %v2442
        %v2539 = vpack.c.bf16 %v2459, %v2451
        %v2540 = vpack.c.bf16 %v2460, %v2452
        %v2541 = vpack.c.bf16 %v2461, %v2453
        %v2542 = vpack.c.bf16 %v2462, %v2454
        %v2543 = vpack.c.bf16 %v2463, %v2455
        %v2544 = vpack.c.bf16 %v2464, %v2456
        %v2545 = vpack.c.bf16 %v2465, %v2457
        %v2546 = vpack.c.bf16 %v2466, %v2458
        %v2547 = vpack.c.bf16 %v2475, %v2467
        %v2548 = vpack.c.bf16 %v2476, %v2468
        %v2549 = vpack.c.bf16 %v2477, %v2469
        %v2550 = vpack.c.bf16 %v2478, %v2470
        %v2551 = vpack.c.bf16 %v2479, %v2471
        %v2552 = vpack.c.bf16 %v2480, %v2472
        %v2553 = vpack.c.bf16 %v2481, %v2473
        %v2554 = vpack.c.bf16 %v2482, %v2474
        %v2555 = vpack.c.bf16 %v2491, %v2483
        %v2556 = vpack.c.bf16 %v2492, %v2484
        %v2557 = vpack.c.bf16 %v2493, %v2485
        %v2558 = vpack.c.bf16 %v2494, %v2486
        %v2559 = vpack.c.bf16 %v2495, %v2487
        %v2560 = vpack.c.bf16 %v2496, %v2488
        %v2561 = vpack.c.bf16 %v2497, %v2489
        %v2562 = vpack.c.bf16 %v2498, %v2490
        %v2563 = vld [vmem:[#allocation2] sm:$0xf]
        %v2564 = vld [vmem:[#allocation2 + $0x4] sm:$0xf]
        %v2565 = vld [vmem:[#allocation2 + $0x8] sm:$0xf]
        %v2566 = vld [vmem:[#allocation2 + $0xc] sm:$0xf]
        %v2567 = vld [vmem:[#allocation2 + $0x10] sm:$0xf]
        %v2568 = vld [vmem:[#allocation2 + $0x14] sm:$0xf]
        %v2569 = vld [vmem:[#allocation2 + $0x18] sm:$0xf]
        %v2570 = vld [vmem:[#allocation2 + $0x1c] sm:$0xf]
        %v2571 = vld [vmem:[#allocation2 + $0x20] sm:$0xf]
        %v2572 = vld [vmem:[#allocation2 + $0x24] sm:$0xf]
        %v2573 = vld [vmem:[#allocation2 + $0x28] sm:$0xf]
        %v2574 = vld [vmem:[#allocation2 + $0x2c] sm:$0xf]
        %v2575 = vld [vmem:[#allocation2 + $0x30] sm:$0xf]
        %v2576 = vld [vmem:[#allocation2 + $0x34] sm:$0xf]
        %v2577 = vld [vmem:[#allocation2 + $0x38] sm:$0xf]
        %v2578 = vld [vmem:[#allocation2 + $0x3c] sm:$0xf]
        %v2579 = vld [vmem:[#allocation2 + $0x40] sm:$0xf]
        %v2580 = vld [vmem:[#allocation2 + $0x44] sm:$0xf]
        %v2581 = vld [vmem:[#allocation2 + $0x48] sm:$0xf]
        %v2582 = vld [vmem:[#allocation2 + $0x4c] sm:$0xf]
        %v2583 = vld [vmem:[#allocation2 + $0x50] sm:$0xf]
        %v2584 = vld [vmem:[#allocation2 + $0x54] sm:$0xf]
        %v2585 = vld [vmem:[#allocation2 + $0x58] sm:$0xf]
        %v2586 = vld [vmem:[#allocation2 + $0x5c] sm:$0xf]
        %v2587 = vld [vmem:[#allocation2 + $0x60] sm:$0xf]
        %v2588 = vld [vmem:[#allocation2 + $0x64] sm:$0xf]
        %v2589 = vld [vmem:[#allocation2 + $0x68] sm:$0xf]
        %v2590 = vld [vmem:[#allocation2 + $0x6c] sm:$0xf]
        %v2591 = vld [vmem:[#allocation2 + $0x70] sm:$0xf]
        %v2592 = vld [vmem:[#allocation2 + $0x74] sm:$0xf]
        %v2593 = vld [vmem:[#allocation2 + $0x78] sm:$0xf]
        %v2594 = vld [vmem:[#allocation2 + $0x7c] sm:$0xf]
        %v2595 = vld [vmem:[#allocation2 + $0x80] sm:$0xf]
        %v2596 = vld [vmem:[#allocation2 + $0x84] sm:$0xf]
        %v2597 = vld [vmem:[#allocation2 + $0x88] sm:$0xf]
        %v2598 = vld [vmem:[#allocation2 + $0x8c] sm:$0xf]
        %v2599 = vld [vmem:[#allocation2 + $0x90] sm:$0xf]
        %v2600 = vld [vmem:[#allocation2 + $0x94] sm:$0xf]
        %v2601 = vld [vmem:[#allocation2 + $0x98] sm:$0xf]
        %v2602 = vld [vmem:[#allocation2 + $0x9c] sm:$0xf]
        %v2603 = vld [vmem:[#allocation2 + $0xa0] sm:$0xf]
        %v2604 = vld [vmem:[#allocation2 + $0xa4] sm:$0xf]
        %v2605 = vld [vmem:[#allocation2 + $0xa8] sm:$0xf]
        %v2606 = vld [vmem:[#allocation2 + $0xac] sm:$0xf]
        %v2607 = vld [vmem:[#allocation2 + $0xb0] sm:$0xf]
        %v2608 = vld [vmem:[#allocation2 + $0xb4] sm:$0xf]
        %v2609 = vld [vmem:[#allocation2 + $0xb8] sm:$0xf]
        %v2610 = vld [vmem:[#allocation2 + $0xbc] sm:$0xf]
        %v2611 = vld [vmem:[#allocation2 + $0xc0] sm:$0xf]
        %v2612 = vld [vmem:[#allocation2 + $0xc4] sm:$0xf]
        %v2613 = vld [vmem:[#allocation2 + $0xc8] sm:$0xf]
        %v2614 = vld [vmem:[#allocation2 + $0xcc] sm:$0xf]
        %v2615 = vld [vmem:[#allocation2 + $0xd0] sm:$0xf]
        %v2616 = vld [vmem:[#allocation2 + $0xd4] sm:$0xf]
        %v2617 = vld [vmem:[#allocation2 + $0xd8] sm:$0xf]
        %v2618 = vld [vmem:[#allocation2 + $0xdc] sm:$0xf]
        %v2619 = vld [vmem:[#allocation2 + $0xe0] sm:$0xf]
        %v2620 = vld [vmem:[#allocation2 + $0xe4] sm:$0xf]
        %v2621 = vld [vmem:[#allocation2 + $0xe8] sm:$0xf]
        %v2622 = vld [vmem:[#allocation2 + $0xec] sm:$0xf]
        %v2623 = vld [vmem:[#allocation2 + $0xf0] sm:$0xf]
        %v2624 = vld [vmem:[#allocation2 + $0xf4] sm:$0xf]
        %v2625 = vld [vmem:[#allocation2 + $0xf8] sm:$0xf]
        %v2626 = vld [vmem:[#allocation2 + $0xfc] sm:$0xf]
        %v2627 = vld [vmem:[#allocation2 + $0x100] sm:$0xf]
        %v2628 = vld [vmem:[#allocation2 + $0x104] sm:$0xf]
        %v2629 = vld [vmem:[#allocation2 + $0x108] sm:$0xf]
        %v2630 = vld [vmem:[#allocation2 + $0x10c] sm:$0xf]
        %v2631 = vld [vmem:[#allocation2 + $0x110] sm:$0xf]
        %v2632 = vld [vmem:[#allocation2 + $0x114] sm:$0xf]
        %v2633 = vld [vmem:[#allocation2 + $0x118] sm:$0xf]
        %v2634 = vld [vmem:[#allocation2 + $0x11c] sm:$0xf]
        %v2635 = vld [vmem:[#allocation2 + $0x120] sm:$0xf]
        %v2636 = vld [vmem:[#allocation2 + $0x124] sm:$0xf]
        %v2637 = vld [vmem:[#allocation2 + $0x128] sm:$0xf]
        %v2638 = vld [vmem:[#allocation2 + $0x12c] sm:$0xf]
        %v2639 = vld [vmem:[#allocation2 + $0x130] sm:$0xf]
        %v2640 = vld [vmem:[#allocation2 + $0x134] sm:$0xf]
        %v2641 = vld [vmem:[#allocation2 + $0x138] sm:$0xf]
        %v2642 = vld [vmem:[#allocation2 + $0x13c] sm:$0xf]
        %v2643 = vld [vmem:[#allocation2 + $0x140] sm:$0xf]
        %v2644 = vld [vmem:[#allocation2 + $0x144] sm:$0xf]
        %v2645 = vld [vmem:[#allocation2 + $0x148] sm:$0xf]
        %v2646 = vld [vmem:[#allocation2 + $0x14c] sm:$0xf]
        %v2647 = vld [vmem:[#allocation2 + $0x150] sm:$0xf]
        %v2648 = vld [vmem:[#allocation2 + $0x154] sm:$0xf]
        %v2649 = vld [vmem:[#allocation2 + $0x158] sm:$0xf]
        %v2650 = vld [vmem:[#allocation2 + $0x15c] sm:$0xf]
        %v2651 = vld [vmem:[#allocation2 + $0x160] sm:$0xf]
        %v2652 = vld [vmem:[#allocation2 + $0x164] sm:$0xf]
        %v2653 = vld [vmem:[#allocation2 + $0x168] sm:$0xf]
        %v2654 = vld [vmem:[#allocation2 + $0x16c] sm:$0xf]
        %v2655 = vld [vmem:[#allocation2 + $0x170] sm:$0xf]
        %v2656 = vld [vmem:[#allocation2 + $0x174] sm:$0xf]
        %v2657 = vld [vmem:[#allocation2 + $0x178] sm:$0xf]
        %v2658 = vld [vmem:[#allocation2 + $0x17c] sm:$0xf]
        %v2659 = vld [vmem:[#allocation2 + $0x180] sm:$0xf]
        %v2660 = vld [vmem:[#allocation2 + $0x184] sm:$0xf]
        %v2661 = vld [vmem:[#allocation2 + $0x188] sm:$0xf]
        %v2662 = vld [vmem:[#allocation2 + $0x18c] sm:$0xf]
        %v2663 = vld [vmem:[#allocation2 + $0x190] sm:$0xf]
        %v2664 = vld [vmem:[#allocation2 + $0x194] sm:$0xf]
        %v2665 = vld [vmem:[#allocation2 + $0x198] sm:$0xf]
        %v2666 = vld [vmem:[#allocation2 + $0x19c] sm:$0xf]
        %v2667 = vld [vmem:[#allocation2 + $0x1a0] sm:$0xf]
        %v2668 = vld [vmem:[#allocation2 + $0x1a4] sm:$0xf]
        %v2669 = vld [vmem:[#allocation2 + $0x1a8] sm:$0xf]
        %v2670 = vld [vmem:[#allocation2 + $0x1ac] sm:$0xf]
        %v2671 = vld [vmem:[#allocation2 + $0x1b0] sm:$0xf]
        %v2672 = vld [vmem:[#allocation2 + $0x1b4] sm:$0xf]
        %v2673 = vld [vmem:[#allocation2 + $0x1b8] sm:$0xf]
        %v2674 = vld [vmem:[#allocation2 + $0x1bc] sm:$0xf]
        %v2675 = vld [vmem:[#allocation2 + $0x1c0] sm:$0xf]
        %v2676 = vld [vmem:[#allocation2 + $0x1c4] sm:$0xf]
        %v2677 = vld [vmem:[#allocation2 + $0x1c8] sm:$0xf]
        %v2678 = vld [vmem:[#allocation2 + $0x1cc] sm:$0xf]
        %v2679 = vld [vmem:[#allocation2 + $0x1d0] sm:$0xf]
        %v2680 = vld [vmem:[#allocation2 + $0x1d4] sm:$0xf]
        %v2681 = vld [vmem:[#allocation2 + $0x1d8] sm:$0xf]
        %v2682 = vld [vmem:[#allocation2 + $0x1dc] sm:$0xf]
        %v2683 = vld [vmem:[#allocation2 + $0x1e0] sm:$0xf]
        %v2684 = vld [vmem:[#allocation2 + $0x1e4] sm:$0xf]
        %v2685 = vld [vmem:[#allocation2 + $0x1e8] sm:$0xf]
        %v2686 = vld [vmem:[#allocation2 + $0x1ec] sm:$0xf]
        %v2687 = vld [vmem:[#allocation2 + $0x1f0] sm:$0xf]
        %v2688 = vld [vmem:[#allocation2 + $0x1f4] sm:$0xf]
        %v2689 = vld [vmem:[#allocation2 + $0x1f8] sm:$0xf]
        %v2690 = vld [vmem:[#allocation2 + $0x1fc] sm:$0xf]
        %v2819 = vunpack.c.l.b16 %v2563
        %v2820 = vunpack.c.l.b16 %v2564
        %v2821 = vunpack.c.l.b16 %v2565
        %v2822 = vunpack.c.l.b16 %v2566
        %v2823 = vunpack.c.l.b16 %v2567
        %v2824 = vunpack.c.l.b16 %v2568
        %v2825 = vunpack.c.l.b16 %v2569
        %v2826 = vunpack.c.l.b16 %v2570
        %v2827 = vunpack.c.l.b16 %v2571
        %v2828 = vunpack.c.l.b16 %v2572
        %v2829 = vunpack.c.l.b16 %v2573
        %v2830 = vunpack.c.l.b16 %v2574
        %v2831 = vunpack.c.l.b16 %v2575
        %v2832 = vunpack.c.l.b16 %v2576
        %v2833 = vunpack.c.l.b16 %v2577
        %v2834 = vunpack.c.l.b16 %v2578
        %v2835 = vunpack.c.l.b16 %v2579
        %v2836 = vunpack.c.l.b16 %v2580
        %v2837 = vunpack.c.l.b16 %v2581
        %v2838 = vunpack.c.l.b16 %v2582
        %v2839 = vunpack.c.l.b16 %v2583
        %v2840 = vunpack.c.l.b16 %v2584
        %v2841 = vunpack.c.l.b16 %v2585
        %v2842 = vunpack.c.l.b16 %v2586
        %v2843 = vunpack.c.l.b16 %v2587
        %v2844 = vunpack.c.l.b16 %v2588
        %v2845 = vunpack.c.l.b16 %v2589
        %v2846 = vunpack.c.l.b16 %v2590
        %v2847 = vunpack.c.l.b16 %v2591
        %v2848 = vunpack.c.l.b16 %v2592
        %v2849 = vunpack.c.l.b16 %v2593
        %v2850 = vunpack.c.l.b16 %v2594
        %v2851 = vunpack.c.l.b16 %v2595
        %v2852 = vunpack.c.l.b16 %v2596
        %v2853 = vunpack.c.l.b16 %v2597
        %v2854 = vunpack.c.l.b16 %v2598
        %v2855 = vunpack.c.l.b16 %v2599
        %v2856 = vunpack.c.l.b16 %v2600
        %v2857 = vunpack.c.l.b16 %v2601
        %v2858 = vunpack.c.l.b16 %v2602
        %v2859 = vunpack.c.l.b16 %v2603
        %v2860 = vunpack.c.l.b16 %v2604
        %v2861 = vunpack.c.l.b16 %v2605
        %v2862 = vunpack.c.l.b16 %v2606
        %v2863 = vunpack.c.l.b16 %v2607
        %v2864 = vunpack.c.l.b16 %v2608
        %v2865 = vunpack.c.l.b16 %v2609
        %v2866 = vunpack.c.l.b16 %v2610
        %v2867 = vunpack.c.l.b16 %v2611
        %v2868 = vunpack.c.l.b16 %v2612
        %v2869 = vunpack.c.l.b16 %v2613
        %v2870 = vunpack.c.l.b16 %v2614
        %v2871 = vunpack.c.l.b16 %v2615
        %v2872 = vunpack.c.l.b16 %v2616
        %v2873 = vunpack.c.l.b16 %v2617
        %v2874 = vunpack.c.l.b16 %v2618
        %v2875 = vunpack.c.l.b16 %v2619
        %v2876 = vunpack.c.l.b16 %v2620
        %v2877 = vunpack.c.l.b16 %v2621
        %v2878 = vunpack.c.l.b16 %v2622
        %v2879 = vunpack.c.l.b16 %v2623
        %v2880 = vunpack.c.l.b16 %v2624
        %v2881 = vunpack.c.l.b16 %v2625
        %v2882 = vunpack.c.l.b16 %v2626
        %v2883 = vunpack.c.l.b16 %v2627
        %v2884 = vunpack.c.l.b16 %v2628
        %v2885 = vunpack.c.l.b16 %v2629
        %v2886 = vunpack.c.l.b16 %v2630
        %v2887 = vunpack.c.l.b16 %v2631
        %v2888 = vunpack.c.l.b16 %v2632
        %v2889 = vunpack.c.l.b16 %v2633
        %v2890 = vunpack.c.l.b16 %v2634
        %v2891 = vunpack.c.l.b16 %v2635
        %v2892 = vunpack.c.l.b16 %v2636
        %v2893 = vunpack.c.l.b16 %v2637
        %v2894 = vunpack.c.l.b16 %v2638
        %v2895 = vunpack.c.l.b16 %v2639
        %v2896 = vunpack.c.l.b16 %v2640
        %v2897 = vunpack.c.l.b16 %v2641
        %v2898 = vunpack.c.l.b16 %v2642
        %v2899 = vunpack.c.l.b16 %v2643
        %v2900 = vunpack.c.l.b16 %v2644
        %v2901 = vunpack.c.l.b16 %v2645
        %v2902 = vunpack.c.l.b16 %v2646
        %v2903 = vunpack.c.l.b16 %v2647
        %v2904 = vunpack.c.l.b16 %v2648
        %v2905 = vunpack.c.l.b16 %v2649
        %v2906 = vunpack.c.l.b16 %v2650
        %v2907 = vunpack.c.l.b16 %v2651
        %v2908 = vunpack.c.l.b16 %v2652
        %v2909 = vunpack.c.l.b16 %v2653
        %v2910 = vunpack.c.l.b16 %v2654
        %v2911 = vunpack.c.l.b16 %v2655
        %v2912 = vunpack.c.l.b16 %v2656
        %v2913 = vunpack.c.l.b16 %v2657
        %v2914 = vunpack.c.l.b16 %v2658
        %v2915 = vunpack.c.l.b16 %v2659
        %v2916 = vunpack.c.l.b16 %v2660
        %v2917 = vunpack.c.l.b16 %v2661
        %v2918 = vunpack.c.l.b16 %v2662
        %v2919 = vunpack.c.l.b16 %v2663
        %v2920 = vunpack.c.l.b16 %v2664
        %v2921 = vunpack.c.l.b16 %v2665
        %v2922 = vunpack.c.l.b16 %v2666
        %v2923 = vunpack.c.l.b16 %v2667
        %v2924 = vunpack.c.l.b16 %v2668
        %v2925 = vunpack.c.l.b16 %v2669
        %v2926 = vunpack.c.l.b16 %v2670
        %v2927 = vunpack.c.l.b16 %v2671
        %v2928 = vunpack.c.l.b16 %v2672
        %v2929 = vunpack.c.l.b16 %v2673
        %v2930 = vunpack.c.l.b16 %v2674
        %v2931 = vunpack.c.l.b16 %v2675
        %v2932 = vunpack.c.l.b16 %v2676
        %v2933 = vunpack.c.l.b16 %v2677
        %v2934 = vunpack.c.l.b16 %v2678
        %v2935 = vunpack.c.l.b16 %v2679
        %v2936 = vunpack.c.l.b16 %v2680
        %v2937 = vunpack.c.l.b16 %v2681
        %v2938 = vunpack.c.l.b16 %v2682
        %v2939 = vunpack.c.l.b16 %v2683
        %v2940 = vunpack.c.l.b16 %v2684
        %v2941 = vunpack.c.l.b16 %v2685
        %v2942 = vunpack.c.l.b16 %v2686
        %v2943 = vunpack.c.l.b16 %v2687
        %v2944 = vunpack.c.l.b16 %v2688
        %v2945 = vunpack.c.l.b16 %v2689
        %v2946 = vunpack.c.l.b16 %v2690
        %v2947 = vpack.c.b16 %v2820, %v2819
        %v2948 = vpack.c.b16 %v2822, %v2821
        %v2949 = vpack.c.b16 %v2824, %v2823
        %v2950 = vpack.c.b16 %v2826, %v2825
        %v2951 = vpack.c.b16 %v2828, %v2827
        %v2952 = vpack.c.b16 %v2830, %v2829
        %v2953 = vpack.c.b16 %v2832, %v2831
        %v2954 = vpack.c.b16 %v2834, %v2833
        %v2955 = vpack.c.b16 %v2836, %v2835
        %v2956 = vpack.c.b16 %v2838, %v2837
        %v2957 = vpack.c.b16 %v2840, %v2839
        %v2958 = vpack.c.b16 %v2842, %v2841
        %v2959 = vpack.c.b16 %v2844, %v2843
        %v2960 = vpack.c.b16 %v2846, %v2845
        %v2961 = vpack.c.b16 %v2848, %v2847
        %v2962 = vpack.c.b16 %v2850, %v2849
        %v2963 = vpack.c.b16 %v2852, %v2851
        %v2964 = vpack.c.b16 %v2854, %v2853
        %v2965 = vpack.c.b16 %v2856, %v2855
        %v2966 = vpack.c.b16 %v2858, %v2857
        %v2967 = vpack.c.b16 %v2860, %v2859
        %v2968 = vpack.c.b16 %v2862, %v2861
        %v2969 = vpack.c.b16 %v2864, %v2863
        %v2970 = vpack.c.b16 %v2866, %v2865
        %v2971 = vpack.c.b16 %v2868, %v2867
        %v2972 = vpack.c.b16 %v2870, %v2869
        %v2973 = vpack.c.b16 %v2872, %v2871
        %v2974 = vpack.c.b16 %v2874, %v2873
        %v2975 = vpack.c.b16 %v2876, %v2875
        %v2976 = vpack.c.b16 %v2878, %v2877
        %v2977 = vpack.c.b16 %v2880, %v2879
        %v2978 = vpack.c.b16 %v2882, %v2881
        %v2979 = vpack.c.b16 %v2884, %v2883
        %v2980 = vpack.c.b16 %v2886, %v2885
        %v2981 = vpack.c.b16 %v2888, %v2887
        %v2982 = vpack.c.b16 %v2890, %v2889
        %v2983 = vpack.c.b16 %v2892, %v2891
        %v2984 = vpack.c.b16 %v2894, %v2893
        %v2985 = vpack.c.b16 %v2896, %v2895
        %v2986 = vpack.c.b16 %v2898, %v2897
        %v2987 = vpack.c.b16 %v2900, %v2899
        %v2988 = vpack.c.b16 %v2902, %v2901
        %v2989 = vpack.c.b16 %v2904, %v2903
        %v2990 = vpack.c.b16 %v2906, %v2905
        %v2991 = vpack.c.b16 %v2908, %v2907
        %v2992 = vpack.c.b16 %v2910, %v2909
        %v2993 = vpack.c.b16 %v2912, %v2911
        %v2994 = vpack.c.b16 %v2914, %v2913
        %v2995 = vpack.c.b16 %v2916, %v2915
        %v2996 = vpack.c.b16 %v2918, %v2917
        %v2997 = vpack.c.b16 %v2920, %v2919
        %v2998 = vpack.c.b16 %v2922, %v2921
        %v2999 = vpack.c.b16 %v2924, %v2923
        %v3000 = vpack.c.b16 %v2926, %v2925
        %v3001 = vpack.c.b16 %v2928, %v2927
        %v3002 = vpack.c.b16 %v2930, %v2929
        %v3003 = vpack.c.b16 %v2932, %v2931
        %v3004 = vpack.c.b16 %v2934, %v2933
        %v3005 = vpack.c.b16 %v2936, %v2935
        %v3006 = vpack.c.b16 %v2938, %v2937
        %v3007 = vpack.c.b16 %v2940, %v2939
        %v3008 = vpack.c.b16 %v2942, %v2941
        %v3009 = vpack.c.b16 %v2944, %v2943
        %v3010 = vpack.c.b16 %v2946, %v2945
        %3075 = vmatprep.subr.bf16.mxu0 0
        %3076 = vmatpush1.bf16.msra.mxu0 %v2954
        %3077 = vmatprep.subr.bf16.mxu0 0
        %3078 = vmatpush1.bf16.msra.mxu0 %v2953
        %3079 = vmatprep.subr.bf16.mxu0 0
        %3080 = vmatpush1.bf16.msra.mxu0 %v2952
        %3081 = vmatprep.subr.bf16.mxu0 0
        %3082 = vmatpush1.bf16.msra.mxu0 %v2951
        %3083 = vmatprep.subr.bf16.mxu0 0
        %3084 = vmatpush1.bf16.msra.mxu0 %v2950
        %3085 = vmatprep.subr.bf16.mxu0 0
        %3086 = vmatpush1.bf16.msra.mxu0 %v2949
        %3087 = vmatprep.subr.bf16.mxu0 0
        %3088 = vmatpush1.bf16.msra.mxu0 %v2948
        %3089 = vmatprep.subr.bf16.mxu0 0
        %3090 = vmatpush1.bf16.msra.mxu0 %v2947
        %3091 = vmatprep.subr.bf16.mxu0 0
        %3092 = vmatpush2.bf16.msra.mxu0 %v2962
        %3093 = vmatprep.subr.bf16.mxu0 0
        %3094 = vmatpush2.bf16.msra.mxu0 %v2961
        %3095 = vmatprep.subr.bf16.mxu0 0
        %3096 = vmatpush2.bf16.msra.mxu0 %v2960
        %3097 = vmatprep.subr.bf16.mxu0 0
        %3098 = vmatpush2.bf16.msra.mxu0 %v2959
        %3099 = vmatprep.subr.bf16.mxu0 0
        %3100 = vmatpush2.bf16.msra.mxu0 %v2958
        %3101 = vmatprep.subr.bf16.mxu0 0
        %3102 = vmatpush2.bf16.msra.mxu0 %v2957
        %3103 = vmatprep.subr.bf16.mxu0 0
        %3104 = vmatpush2.bf16.msra.mxu0 %v2956
        %3105 = vmatprep.subr.bf16.mxu0 0
        %3106 = vmatpush2.bf16.msra.mxu0 %v2955
        %3107 = vmatprep.mubr.bf16.mxu0 %v2500
        %3108 = vmatmul.mubr.bf16.gmra.mxu0 %v2499
        %v3109 = vpop.f32.mrf.mxu0
        %v3110 = vadd.f32 0.0, %v3109
        %v3111 = vpop.f32.mrf.mxu0
        %v3112 = vpop.f32.mrf.mxu0
        %v3113 = vadd.f32 0.0, %v3112
        %v3114 = vpop.f32.mrf.mxu0
        %3115 = vmatprep.mubr.bf16.mxu0 %v2508
        %3116 = vmatmul.mubr.bf16.gmra.mxu0 %v2507
        %v3117 = vpop.f32.mrf.mxu0
        %v3118 = vadd.f32 0.0, %v3117
        %v3119 = vpop.f32.mrf.mxu0
        %v3120 = vpop.f32.mrf.mxu0
        %v3121 = vadd.f32 0.0, %v3120
        %v3122 = vpop.f32.mrf.mxu0
        %3123 = vmatprep.mubr.bf16.mxu0 %v2516
        %3124 = vmatmul.mubr.bf16.gmra.mxu0 %v2515
        %v3125 = vpop.f32.mrf.mxu0
        %v3126 = vadd.f32 0.0, %v3125
        %v3127 = vpop.f32.mrf.mxu0
        %v3128 = vpop.f32.mrf.mxu0
        %v3129 = vadd.f32 0.0, %v3128
        %v3130 = vpop.f32.mrf.mxu0
        %3131 = vmatprep.mubr.bf16.mxu0 %v2524
        %3132 = vmatmul.mubr.bf16.gmra.mxu0 %v2523
        %v3133 = vpop.f32.mrf.mxu0
        %v3134 = vadd.f32 0.0, %v3133
        %v3135 = vpop.f32.mrf.mxu0
        %v3136 = vpop.f32.mrf.mxu0
        %v3137 = vadd.f32 0.0, %v3136
        %v3138 = vpop.f32.mrf.mxu0
        %3139 = vmatprep.mubr.bf16.mxu0 %v2532
        %3140 = vmatmul.mubr.bf16.gmra.mxu0 %v2531
        %v3141 = vpop.f32.mrf.mxu0
        %v3142 = vadd.f32 0.0, %v3141
        %v3143 = vpop.f32.mrf.mxu0
        %v3144 = vpop.f32.mrf.mxu0
        %v3145 = vadd.f32 0.0, %v3144
        %v3146 = vpop.f32.mrf.mxu0
        %3147 = vmatprep.mubr.bf16.mxu0 %v2540
        %3148 = vmatmul.mubr.bf16.gmra.mxu0 %v2539
        %v3149 = vpop.f32.mrf.mxu0
        %v3150 = vadd.f32 0.0, %v3149
        %v3151 = vpop.f32.mrf.mxu0
        %v3152 = vpop.f32.mrf.mxu0
        %v3153 = vadd.f32 0.0, %v3152
        %v3154 = vpop.f32.mrf.mxu0
        %3155 = vmatprep.mubr.bf16.mxu0 %v2548
        %3156 = vmatmul.mubr.bf16.gmra.mxu0 %v2547
        %v3157 = vpop.f32.mrf.mxu0
        %v3158 = vadd.f32 0.0, %v3157
        %v3159 = vpop.f32.mrf.mxu0
        %v3160 = vpop.f32.mrf.mxu0
        %v3161 = vadd.f32 0.0, %v3160
        %v3162 = vpop.f32.mrf.mxu0
        %3163 = vmatprep.mubr.bf16.mxu0 %v2556
        %3164 = vmatmul.mubr.bf16.gmra.mxu0 %v2555
        %v3165 = vpop.f32.mrf.mxu0
        %v3166 = vadd.f32 0.0, %v3165
        %v3167 = vpop.f32.mrf.mxu0
        %v3168 = vpop.f32.mrf.mxu0
        %v3169 = vadd.f32 0.0, %v3168
        %v3170 = vpop.f32.mrf.mxu0
        %3171 = vdwg.mxu0
        %3172 = vmatprep.subr.bf16.mxu0 0
        %3173 = vmatpush1.bf16.msra.mxu0 %v2970
        %3174 = vmatprep.subr.bf16.mxu0 0
        %3175 = vmatpush1.bf16.msra.mxu0 %v2969
        %3176 = vmatprep.subr.bf16.mxu0 0
        %3177 = vmatpush1.bf16.msra.mxu0 %v2968
        %3178 = vmatprep.subr.bf16.mxu0 0
        %3179 = vmatpush1.bf16.msra.mxu0 %v2967
        %3180 = vmatprep.subr.bf16.mxu0 0
        %3181 = vmatpush1.bf16.msra.mxu0 %v2966
        %3182 = vmatprep.subr.bf16.mxu0 0
        %3183 = vmatpush1.bf16.msra.mxu0 %v2965
        %3184 = vmatprep.subr.bf16.mxu0 0
        %3185 = vmatpush1.bf16.msra.mxu0 %v2964
        %3186 = vmatprep.subr.bf16.mxu0 0
        %3187 = vmatpush1.bf16.msra.mxu0 %v2963
        %3188 = vmatprep.subr.bf16.mxu0 0
        %3189 = vmatpush2.bf16.msra.mxu0 %v2978
        %3190 = vmatprep.subr.bf16.mxu0 0
        %3191 = vmatpush2.bf16.msra.mxu0 %v2977
        %3192 = vmatprep.subr.bf16.mxu0 0
        %3193 = vmatpush2.bf16.msra.mxu0 %v2976
        %3194 = vmatprep.subr.bf16.mxu0 0
        %3195 = vmatpush2.bf16.msra.mxu0 %v2975
        %3196 = vmatprep.subr.bf16.mxu0 0
        %3197 = vmatpush2.bf16.msra.mxu0 %v2974
        %3198 = vmatprep.subr.bf16.mxu0 0
        %3199 = vmatpush2.bf16.msra.mxu0 %v2973
        %3200 = vmatprep.subr.bf16.mxu0 0
        %3201 = vmatpush2.bf16.msra.mxu0 %v2972
        %3202 = vmatprep.subr.bf16.mxu0 0
        %3203 = vmatpush2.bf16.msra.mxu0 %v2971
        %3204 = vmatprep.mubr.bf16.mxu0 %v2502
        %3205 = vmatmul.mubr.bf16.gmra.mxu0 %v2501
        %v3206 = vpop.f32.mrf.mxu0
        %v3207 = vadd.f32 %v3110, %v3206
        %v3208 = vpop.f32.mrf.mxu0
        %v3209 = vpop.f32.mrf.mxu0
        %v3210 = vadd.f32 %v3113, %v3209
        %v3211 = vpop.f32.mrf.mxu0
        %3212 = vmatprep.mubr.bf16.mxu0 %v2510
        %3213 = vmatmul.mubr.bf16.gmra.mxu0 %v2509
        %v3214 = vpop.f32.mrf.mxu0
        %v3215 = vadd.f32 %v3118, %v3214
        %v3216 = vpop.f32.mrf.mxu0
        %v3217 = vpop.f32.mrf.mxu0
        %v3218 = vadd.f32 %v3121, %v3217
        %v3219 = vpop.f32.mrf.mxu0
        %3220 = vmatprep.mubr.bf16.mxu0 %v2518
        %3221 = vmatmul.mubr.bf16.gmra.mxu0 %v2517
        %v3222 = vpop.f32.mrf.mxu0
        %v3223 = vadd.f32 %v3126, %v3222
        %v3224 = vpop.f32.mrf.mxu0
        %v3225 = vpop.f32.mrf.mxu0
        %v3226 = vadd.f32 %v3129, %v3225
        %v3227 = vpop.f32.mrf.mxu0
        %3228 = vmatprep.mubr.bf16.mxu0 %v2526
        %3229 = vmatmul.mubr.bf16.gmra.mxu0 %v2525
        %v3230 = vpop.f32.mrf.mxu0
        %v3231 = vadd.f32 %v3134, %v3230
        %v3232 = vpop.f32.mrf.mxu0
        %v3233 = vpop.f32.mrf.mxu0
        %v3234 = vadd.f32 %v3137, %v3233
        %v3235 = vpop.f32.mrf.mxu0
        %3236 = vmatprep.mubr.bf16.mxu0 %v2534
        %3237 = vmatmul.mubr.bf16.gmra.mxu0 %v2533
        %v3238 = vpop.f32.mrf.mxu0
        %v3239 = vadd.f32 %v3142, %v3238
        %v3240 = vpop.f32.mrf.mxu0
        %v3241 = vpop.f32.mrf.mxu0
        %v3242 = vadd.f32 %v3145, %v3241
        %v3243 = vpop.f32.mrf.mxu0
        %3244 = vmatprep.mubr.bf16.mxu0 %v2542
        %3245 = vmatmul.mubr.bf16.gmra.mxu0 %v2541
        %v3246 = vpop.f32.mrf.mxu0
        %v3247 = vadd.f32 %v3150, %v3246
        %v3248 = vpop.f32.mrf.mxu0
        %v3249 = vpop.f32.mrf.mxu0
        %v3250 = vadd.f32 %v3153, %v3249
        %v3251 = vpop.f32.mrf.mxu0
        %3252 = vmatprep.mubr.bf16.mxu0 %v2550
        %3253 = vmatmul.mubr.bf16.gmra.mxu0 %v2549
        %v3254 = vpop.f32.mrf.mxu0
        %v3255 = vadd.f32 %v3158, %v3254
        %v3256 = vpop.f32.mrf.mxu0
        %v3257 = vpop.f32.mrf.mxu0
        %v3258 = vadd.f32 %v3161, %v3257
        %v3259 = vpop.f32.mrf.mxu0
        %3260 = vmatprep.mubr.bf16.mxu0 %v2558
        %3261 = vmatmul.mubr.bf16.gmra.mxu0 %v2557
        %v3262 = vpop.f32.mrf.mxu0
        %v3263 = vadd.f32 %v3166, %v3262
        %v3264 = vpop.f32.mrf.mxu0
        %v3265 = vpop.f32.mrf.mxu0
        %v3266 = vadd.f32 %v3169, %v3265
        %v3267 = vpop.f32.mrf.mxu0
        %3268 = vdwg.mxu0
        %3269 = vmatprep.subr.bf16.mxu0 0
        %3270 = vmatpush1.bf16.msra.mxu0 %v2986
        %3271 = vmatprep.subr.bf16.mxu0 0
        %3272 = vmatpush1.bf16.msra.mxu0 %v2985
        %3273 = vmatprep.subr.bf16.mxu0 0
        %3274 = vmatpush1.bf16.msra.mxu0 %v2984
        %3275 = vmatprep.subr.bf16.mxu0 0
        %3276 = vmatpush1.bf16.msra.mxu0 %v2983
        %3277 = vmatprep.subr.bf16.mxu0 0
        %3278 = vmatpush1.bf16.msra.mxu0 %v2982
        %3279 = vmatprep.subr.bf16.mxu0 0
        %3280 = vmatpush1.bf16.msra.mxu0 %v2981
        %3281 = vmatprep.subr.bf16.mxu0 0
        %3282 = vmatpush1.bf16.msra.mxu0 %v2980
        %3283 = vmatprep.subr.bf16.mxu0 0
        %3284 = vmatpush1.bf16.msra.mxu0 %v2979
        %3285 = vmatprep.subr.bf16.mxu0 0
        %3286 = vmatpush2.bf16.msra.mxu0 %v2994
        %3287 = vmatprep.subr.bf16.mxu0 0
        %3288 = vmatpush2.bf16.msra.mxu0 %v2993
        %3289 = vmatprep.subr.bf16.mxu0 0
        %3290 = vmatpush2.bf16.msra.mxu0 %v2992
        %3291 = vmatprep.subr.bf16.mxu0 0
        %3292 = vmatpush2.bf16.msra.mxu0 %v2991
        %3293 = vmatprep.subr.bf16.mxu0 0
        %3294 = vmatpush2.bf16.msra.mxu0 %v2990
        %3295 = vmatprep.subr.bf16.mxu0 0
        %3296 = vmatpush2.bf16.msra.mxu0 %v2989
        %3297 = vmatprep.subr.bf16.mxu0 0
        %3298 = vmatpush2.bf16.msra.mxu0 %v2988
        %3299 = vmatprep.subr.bf16.mxu0 0
        %3300 = vmatpush2.bf16.msra.mxu0 %v2987
        %3301 = vmatprep.mubr.bf16.mxu0 %v2504
        %3302 = vmatmul.mubr.bf16.gmra.mxu0 %v2503
        %v3303 = vpop.f32.mrf.mxu0
        %v3304 = vadd.f32 %v3207, %v3303
        %v3305 = vpop.f32.mrf.mxu0
        %v3306 = vpop.f32.mrf.mxu0
        %v3307 = vadd.f32 %v3210, %v3306
        %v3308 = vpop.f32.mrf.mxu0
        %3309 = vmatprep.mubr.bf16.mxu0 %v2512
        %3310 = vmatmul.mubr.bf16.gmra.mxu0 %v2511
        %v3311 = vpop.f32.mrf.mxu0
        %v3312 = vadd.f32 %v3215, %v3311
        %v3313 = vpop.f32.mrf.mxu0
        %v3314 = vpop.f32.mrf.mxu0
        %v3315 = vadd.f32 %v3218, %v3314
        %v3316 = vpop.f32.mrf.mxu0
        %3317 = vmatprep.mubr.bf16.mxu0 %v2520
        %3318 = vmatmul.mubr.bf16.gmra.mxu0 %v2519
        %v3319 = vpop.f32.mrf.mxu0
        %v3320 = vadd.f32 %v3223, %v3319
        %v3321 = vpop.f32.mrf.mxu0
        %v3322 = vpop.f32.mrf.mxu0
        %v3323 = vadd.f32 %v3226, %v3322
        %v3324 = vpop.f32.mrf.mxu0
        %3325 = vmatprep.mubr.bf16.mxu0 %v2528
        %3326 = vmatmul.mubr.bf16.gmra.mxu0 %v2527
        %v3327 = vpop.f32.mrf.mxu0
        %v3328 = vadd.f32 %v3231, %v3327
        %v3329 = vpop.f32.mrf.mxu0
        %v3330 = vpop.f32.mrf.mxu0
        %v3331 = vadd.f32 %v3234, %v3330
        %v3332 = vpop.f32.mrf.mxu0
        %3333 = vmatprep.mubr.bf16.mxu0 %v2536
        %3334 = vmatmul.mubr.bf16.gmra.mxu0 %v2535
        %v3335 = vpop.f32.mrf.mxu0
        %v3336 = vadd.f32 %v3239, %v3335
        %v3337 = vpop.f32.mrf.mxu0
        %v3338 = vpop.f32.mrf.mxu0
        %v3339 = vadd.f32 %v3242, %v3338
        %v3340 = vpop.f32.mrf.mxu0
        %3341 = vmatprep.mubr.bf16.mxu0 %v2544
        %3342 = vmatmul.mubr.bf16.gmra.mxu0 %v2543
        %v3343 = vpop.f32.mrf.mxu0
        %v3344 = vadd.f32 %v3247, %v3343
        %v3345 = vpop.f32.mrf.mxu0
        %v3346 = vpop.f32.mrf.mxu0
        %v3347 = vadd.f32 %v3250, %v3346
        %v3348 = vpop.f32.mrf.mxu0
        %3349 = vmatprep.mubr.bf16.mxu0 %v2552
        %3350 = vmatmul.mubr.bf16.gmra.mxu0 %v2551
        %v3351 = vpop.f32.mrf.mxu0
        %v3352 = vadd.f32 %v3255, %v3351
        %v3353 = vpop.f32.mrf.mxu0
        %v3354 = vpop.f32.mrf.mxu0
        %v3355 = vadd.f32 %v3258, %v3354
        %v3356 = vpop.f32.mrf.mxu0
        %3357 = vmatprep.mubr.bf16.mxu0 %v2560
        %3358 = vmatmul.mubr.bf16.gmra.mxu0 %v2559
        %v3359 = vpop.f32.mrf.mxu0
        %v3360 = vadd.f32 %v3263, %v3359
        %v3361 = vpop.f32.mrf.mxu0
        %v3362 = vpop.f32.mrf.mxu0
        %v3363 = vadd.f32 %v3266, %v3362
        %v3364 = vpop.f32.mrf.mxu0
        %3365 = vdwg.mxu0
        %3366 = vmatprep.subr.bf16.mxu0 0
        %3367 = vmatpush1.bf16.msra.mxu0 %v3002
        %3368 = vmatprep.subr.bf16.mxu0 0
        %3369 = vmatpush1.bf16.msra.mxu0 %v3001
        %3370 = vmatprep.subr.bf16.mxu0 0
        %3371 = vmatpush1.bf16.msra.mxu0 %v3000
        %3372 = vmatprep.subr.bf16.mxu0 0
        %3373 = vmatpush1.bf16.msra.mxu0 %v2999
        %3374 = vmatprep.subr.bf16.mxu0 0
        %3375 = vmatpush1.bf16.msra.mxu0 %v2998
        %3376 = vmatprep.subr.bf16.mxu0 0
        %3377 = vmatpush1.bf16.msra.mxu0 %v2997
        %3378 = vmatprep.subr.bf16.mxu0 0
        %3379 = vmatpush1.bf16.msra.mxu0 %v2996
        %3380 = vmatprep.subr.bf16.mxu0 0
        %3381 = vmatpush1.bf16.msra.mxu0 %v2995
        %3382 = vmatprep.subr.bf16.mxu0 0
        %3383 = vmatpush2.bf16.msra.mxu0 %v3010
        %3384 = vmatprep.subr.bf16.mxu0 0
        %3385 = vmatpush2.bf16.msra.mxu0 %v3009
        %3386 = vmatprep.subr.bf16.mxu0 0
        %3387 = vmatpush2.bf16.msra.mxu0 %v3008
        %3388 = vmatprep.subr.bf16.mxu0 0
        %3389 = vmatpush2.bf16.msra.mxu0 %v3007
        %3390 = vmatprep.subr.bf16.mxu0 0
        %3391 = vmatpush2.bf16.msra.mxu0 %v3006
        %3392 = vmatprep.subr.bf16.mxu0 0
        %3393 = vmatpush2.bf16.msra.mxu0 %v3005
        %3394 = vmatprep.subr.bf16.mxu0 0
        %3395 = vmatpush2.bf16.msra.mxu0 %v3004
        %3396 = vmatprep.subr.bf16.mxu0 0
        %3397 = vmatpush2.bf16.msra.mxu0 %v3003
        %3398 = vmatprep.mubr.bf16.mxu0 %v2506
        %3399 = vmatmul.mubr.bf16.gmra.mxu0 %v2505
        %v3400 = vpop.f32.mrf.mxu0
        %v3401 = vadd.f32 %v3304, %v3400
        %v3402 = vpop.f32.mrf.mxu0
        %v3403 = vpop.f32.mrf.mxu0
        %v3404 = vadd.f32 %v3307, %v3403
        %v3405 = vpop.f32.mrf.mxu0
        %3406 = vmatprep.mubr.bf16.mxu0 %v2514
        %3407 = vmatmul.mubr.bf16.gmra.mxu0 %v2513
        %v3408 = vpop.f32.mrf.mxu0
        %v3409 = vadd.f32 %v3312, %v3408
        %v3410 = vpop.f32.mrf.mxu0
        %v3411 = vpop.f32.mrf.mxu0
        %v3412 = vadd.f32 %v3315, %v3411
        %v3413 = vpop.f32.mrf.mxu0
        %3414 = vmatprep.mubr.bf16.mxu0 %v2522
        %3415 = vmatmul.mubr.bf16.gmra.mxu0 %v2521
        %v3416 = vpop.f32.mrf.mxu0
        %v3417 = vadd.f32 %v3320, %v3416
        %v3418 = vpop.f32.mrf.mxu0
        %v3419 = vpop.f32.mrf.mxu0
        %v3420 = vadd.f32 %v3323, %v3419
        %v3421 = vpop.f32.mrf.mxu0
        %3422 = vmatprep.mubr.bf16.mxu0 %v2530
        %3423 = vmatmul.mubr.bf16.gmra.mxu0 %v2529
        %v3424 = vpop.f32.mrf.mxu0
        %v3425 = vadd.f32 %v3328, %v3424
        %v3426 = vpop.f32.mrf.mxu0
        %v3427 = vpop.f32.mrf.mxu0
        %v3428 = vadd.f32 %v3331, %v3427
        %v3429 = vpop.f32.mrf.mxu0
        %3430 = vmatprep.mubr.bf16.mxu0 %v2538
        %3431 = vmatmul.mubr.bf16.gmra.mxu0 %v2537
        %v3432 = vpop.f32.mrf.mxu0
        %v3433 = vadd.f32 %v3336, %v3432
        %v3434 = vpop.f32.mrf.mxu0
        %v3435 = vpop.f32.mrf.mxu0
        %v3436 = vadd.f32 %v3339, %v3435
        %v3437 = vpop.f32.mrf.mxu0
        %3438 = vmatprep.mubr.bf16.mxu0 %v2546
        %3439 = vmatmul.mubr.bf16.gmra.mxu0 %v2545
        %v3440 = vpop.f32.mrf.mxu0
        %v3441 = vadd.f32 %v3344, %v3440
        %v3442 = vpop.f32.mrf.mxu0
        %v3443 = vpop.f32.mrf.mxu0
        %v3444 = vadd.f32 %v3347, %v3443
        %v3445 = vpop.f32.mrf.mxu0
        %3446 = vmatprep.mubr.bf16.mxu0 %v2554
        %3447 = vmatmul.mubr.bf16.gmra.mxu0 %v2553
        %v3448 = vpop.f32.mrf.mxu0
        %v3449 = vadd.f32 %v3352, %v3448
        %v3450 = vpop.f32.mrf.mxu0
        %v3451 = vpop.f32.mrf.mxu0
        %v3452 = vadd.f32 %v3355, %v3451
        %v3453 = vpop.f32.mrf.mxu0
        %3454 = vmatprep.mubr.bf16.mxu0 %v2562
        %3455 = vmatmul.mubr.bf16.gmra.mxu0 %v2561
        %v3456 = vpop.f32.mrf.mxu0
        %v3457 = vadd.f32 %v3360, %v3456
        %v3458 = vpop.f32.mrf.mxu0
        %v3459 = vpop.f32.mrf.mxu0
        %v3460 = vadd.f32 %v3363, %v3459
        %v3461 = vpop.f32.mrf.mxu0
        %3462 = vdwg.mxu0
        %v3463 = vpack.c.bf16 %v3404, %v3401
        %v3464 = vpack.c.bf16 %v3412, %v3409
        %v3465 = vpack.c.bf16 %v3420, %v3417
        %v3466 = vpack.c.bf16 %v3428, %v3425
        %v3467 = vpack.c.bf16 %v3436, %v3433
        %v3468 = vpack.c.bf16 %v3444, %v3441
        %v3469 = vpack.c.bf16 %v3452, %v3449
        %v3470 = vpack.c.bf16 %v3460, %v3457
        %v3471 = vld [vmem:[#allocation4] sm:$0xff]
        %v3472 = vld [vmem:[#allocation4 + $0x8] sm:$0xff]
        %v3473 = vld [vmem:[#allocation4 + $0x10] sm:$0xff]
        %v3474 = vld [vmem:[#allocation4 + $0x18] sm:$0xff]
        %v3475 = vld [vmem:[#allocation4 + $0x20] sm:$0xff]
        %v3476 = vld [vmem:[#allocation4 + $0x28] sm:$0xff]
        %v3477 = vld [vmem:[#allocation4 + $0x30] sm:$0xff]
        %v3478 = vld [vmem:[#allocation4 + $0x38] sm:$0xff]
        %v3479 = vld [vmem:[#allocation4 + $0x40] sm:$0xff]
        %v3480 = vld [vmem:[#allocation4 + $0x48] sm:$0xff]
        %v3481 = vld [vmem:[#allocation4 + $0x50] sm:$0xff]
        %v3482 = vld [vmem:[#allocation4 + $0x58] sm:$0xff]
        %v3483 = vld [vmem:[#allocation4 + $0x60] sm:$0xff]
        %v3484 = vld [vmem:[#allocation4 + $0x68] sm:$0xff]
        %v3485 = vld [vmem:[#allocation4 + $0x70] sm:$0xff]
        %v3486 = vld [vmem:[#allocation4 + $0x78] sm:$0xff]
        %v3487 = vld [vmem:[#allocation4 + $0x80] sm:$0xff]
        %v3488 = vld [vmem:[#allocation4 + $0x88] sm:$0xff]
        %v3489 = vld [vmem:[#allocation4 + $0x90] sm:$0xff]
        %v3490 = vld [vmem:[#allocation4 + $0x98] sm:$0xff]
        %v3491 = vld [vmem:[#allocation4 + $0xa0] sm:$0xff]
        %v3492 = vld [vmem:[#allocation4 + $0xa8] sm:$0xff]
        %v3493 = vld [vmem:[#allocation4 + $0xb0] sm:$0xff]
        %v3494 = vld [vmem:[#allocation4 + $0xb8] sm:$0xff]
        %v3495 = vld [vmem:[#allocation4 + $0xc0] sm:$0xff]
        %v3496 = vld [vmem:[#allocation4 + $0xc8] sm:$0xff]
        %v3497 = vld [vmem:[#allocation4 + $0xd0] sm:$0xff]
        %v3498 = vld [vmem:[#allocation4 + $0xd8] sm:$0xff]
        %v3499 = vld [vmem:[#allocation4 + $0xe0] sm:$0xff]
        %v3500 = vld [vmem:[#allocation4 + $0xe8] sm:$0xff]
        %v3501 = vld [vmem:[#allocation4 + $0xf0] sm:$0xff]
        %v3502 = vld [vmem:[#allocation4 + $0xf8] sm:$0xff]
        %v3503 = vld [vmem:[#allocation4 + $0x100] sm:$0xff]
        %v3504 = vld [vmem:[#allocation4 + $0x108] sm:$0xff]
        %v3505 = vld [vmem:[#allocation4 + $0x110] sm:$0xff]
        %v3506 = vld [vmem:[#allocation4 + $0x118] sm:$0xff]
        %v3507 = vld [vmem:[#allocation4 + $0x120] sm:$0xff]
        %v3508 = vld [vmem:[#allocation4 + $0x128] sm:$0xff]
        %v3509 = vld [vmem:[#allocation4 + $0x130] sm:$0xff]
        %v3510 = vld [vmem:[#allocation4 + $0x138] sm:$0xff]
        %v3511 = vld [vmem:[#allocation4 + $0x140] sm:$0xff]
        %v3512 = vld [vmem:[#allocation4 + $0x148] sm:$0xff]
        %v3513 = vld [vmem:[#allocation4 + $0x150] sm:$0xff]
        %v3514 = vld [vmem:[#allocation4 + $0x158] sm:$0xff]
        %v3515 = vld [vmem:[#allocation4 + $0x160] sm:$0xff]
        %v3516 = vld [vmem:[#allocation4 + $0x168] sm:$0xff]
        %v3517 = vld [vmem:[#allocation4 + $0x170] sm:$0xff]
        %v3518 = vld [vmem:[#allocation4 + $0x178] sm:$0xff]
        %v3519 = vld [vmem:[#allocation4 + $0x180] sm:$0xff]
        %v3520 = vld [vmem:[#allocation4 + $0x188] sm:$0xff]
        %v3521 = vld [vmem:[#allocation4 + $0x190] sm:$0xff]
        %v3522 = vld [vmem:[#allocation4 + $0x198] sm:$0xff]
        %v3523 = vld [vmem:[#allocation4 + $0x1a0] sm:$0xff]
        %v3524 = vld [vmem:[#allocation4 + $0x1a8] sm:$0xff]
        %v3525 = vld [vmem:[#allocation4 + $0x1b0] sm:$0xff]
        %v3526 = vld [vmem:[#allocation4 + $0x1b8] sm:$0xff]
        %v3527 = vld [vmem:[#allocation4 + $0x1c0] sm:$0xff]
        %v3528 = vld [vmem:[#allocation4 + $0x1c8] sm:$0xff]
        %v3529 = vld [vmem:[#allocation4 + $0x1d0] sm:$0xff]
        %v3530 = vld [vmem:[#allocation4 + $0x1d8] sm:$0xff]
        %v3531 = vld [vmem:[#allocation4 + $0x1e0] sm:$0xff]
        %v3532 = vld [vmem:[#allocation4 + $0x1e8] sm:$0xff]
        %v3533 = vld [vmem:[#allocation4 + $0x1f0] sm:$0xff]
        %v3534 = vld [vmem:[#allocation4 + $0x1f8] sm:$0xff]
        %v3535 = vld [vmem:[%s3] sm:$0xff]
        %v3537 = vlaneseq
        %v3538 = vshrl.u32 %v3537, 7
        %v3539 = vsub.s32 0, %v3538
        %v3540 = vrot.slane %v3535, %v3539
        %v3541 = vlaneseq
        %v3542 = vshrl.u32 %v3541, 7
        %v3543 = vsub.s32 1, %v3542
        %v3544 = vrot.slane %v3535, %v3543
        %v3545 = vlaneseq
        %v3546 = vshrl.u32 %v3545, 7
        %v3547 = vsub.s32 2, %v3546
        %v3548 = vrot.slane %v3535, %v3547
        %v3549 = vlaneseq
        %v3550 = vshrl.u32 %v3549, 7
        %v3551 = vsub.s32 3, %v3550
        %v3552 = vrot.slane %v3535, %v3551
        %v3553 = vlaneseq
        %v3554 = vshrl.u32 %v3553, 7
        %v3555 = vsub.s32 4, %v3554
        %v3556 = vrot.slane %v3535, %v3555
        %v3557 = vlaneseq
        %v3558 = vshrl.u32 %v3557, 7
        %v3559 = vsub.s32 5, %v3558
        %v3560 = vrot.slane %v3535, %v3559
        %v3561 = vlaneseq
        %v3562 = vshrl.u32 %v3561, 7
        %v3563 = vsub.s32 6, %v3562
        %v3564 = vrot.slane %v3535, %v3563
        %v3565 = vlaneseq
        %v3566 = vshrl.u32 %v3565, 7
        %v3567 = vsub.s32 7, %v3566
        %v3568 = vrot.slane %v3535, %v3567
        %v3641 = vunpack.c.l.b16 %v3471
        %v3642 = vunpack.c.h.b16 %v3471
        %v3643 = vunpack.c.l.b16 %v3472
        %v3644 = vunpack.c.h.b16 %v3472
        %v3645 = vunpack.c.l.b16 %v3473
        %v3646 = vunpack.c.h.b16 %v3473
        %v3647 = vunpack.c.l.b16 %v3474
        %v3648 = vunpack.c.h.b16 %v3474
        %v3649 = vunpack.c.l.b16 %v3475
        %v3650 = vunpack.c.h.b16 %v3475
        %v3651 = vunpack.c.l.b16 %v3476
        %v3652 = vunpack.c.h.b16 %v3476
        %v3653 = vunpack.c.l.b16 %v3477
        %v3654 = vunpack.c.h.b16 %v3477
        %v3655 = vunpack.c.l.b16 %v3478
        %v3656 = vunpack.c.h.b16 %v3478
        %v3657 = vunpack.c.l.b16 %v3479
        %v3658 = vunpack.c.h.b16 %v3479
        %v3659 = vunpack.c.l.b16 %v3480
        %v3660 = vunpack.c.h.b16 %v3480
        %v3661 = vunpack.c.l.b16 %v3481
        %v3662 = vunpack.c.h.b16 %v3481
        %v3663 = vunpack.c.l.b16 %v3482
        %v3664 = vunpack.c.h.b16 %v3482
        %v3665 = vunpack.c.l.b16 %v3483
        %v3666 = vunpack.c.h.b16 %v3483
        %v3667 = vunpack.c.l.b16 %v3484
        %v3668 = vunpack.c.h.b16 %v3484
        %v3669 = vunpack.c.l.b16 %v3485
        %v3670 = vunpack.c.h.b16 %v3485
        %v3671 = vunpack.c.l.b16 %v3486
        %v3672 = vunpack.c.h.b16 %v3486
        %v3673 = vunpack.c.l.b16 %v3487
        %v3674 = vunpack.c.h.b16 %v3487
        %v3675 = vunpack.c.l.b16 %v3488
        %v3676 = vunpack.c.h.b16 %v3488
        %v3677 = vunpack.c.l.b16 %v3489
        %v3678 = vunpack.c.h.b16 %v3489
        %v3679 = vunpack.c.l.b16 %v3490
        %v3680 = vunpack.c.h.b16 %v3490
        %v3681 = vunpack.c.l.b16 %v3491
        %v3682 = vunpack.c.h.b16 %v3491
        %v3683 = vunpack.c.l.b16 %v3492
        %v3684 = vunpack.c.h.b16 %v3492
        %v3685 = vunpack.c.l.b16 %v3493
        %v3686 = vunpack.c.h.b16 %v3493
        %v3687 = vunpack.c.l.b16 %v3494
        %v3688 = vunpack.c.h.b16 %v3494
        %v3689 = vunpack.c.l.b16 %v3495
        %v3690 = vunpack.c.h.b16 %v3495
        %v3691 = vunpack.c.l.b16 %v3496
        %v3692 = vunpack.c.h.b16 %v3496
        %v3693 = vunpack.c.l.b16 %v3497
        %v3694 = vunpack.c.h.b16 %v3497
        %v3695 = vunpack.c.l.b16 %v3498
        %v3696 = vunpack.c.h.b16 %v3498
        %v3697 = vunpack.c.l.b16 %v3499
        %v3698 = vunpack.c.h.b16 %v3499
        %v3699 = vunpack.c.l.b16 %v3500
        %v3700 = vunpack.c.h.b16 %v3500
        %v3701 = vunpack.c.l.b16 %v3501
        %v3702 = vunpack.c.h.b16 %v3501
        %v3703 = vunpack.c.l.b16 %v3502
        %v3704 = vunpack.c.h.b16 %v3502
        %v3705 = vunpack.c.l.b16 %v3503
        %v3706 = vunpack.c.h.b16 %v3503
        %v3707 = vunpack.c.l.b16 %v3504
        %v3708 = vunpack.c.h.b16 %v3504
        %v3709 = vunpack.c.l.b16 %v3505
        %v3710 = vunpack.c.h.b16 %v3505
        %v3711 = vunpack.c.l.b16 %v3506
        %v3712 = vunpack.c.h.b16 %v3506
        %v3713 = vunpack.c.l.b16 %v3507
        %v3714 = vunpack.c.h.b16 %v3507
        %v3715 = vunpack.c.l.b16 %v3508
        %v3716 = vunpack.c.h.b16 %v3508
        %v3717 = vunpack.c.l.b16 %v3509
        %v3718 = vunpack.c.h.b16 %v3509
        %v3719 = vunpack.c.l.b16 %v3510
        %v3720 = vunpack.c.h.b16 %v3510
        %v3721 = vunpack.c.l.b16 %v3511
        %v3722 = vunpack.c.h.b16 %v3511
        %v3723 = vunpack.c.l.b16 %v3512
        %v3724 = vunpack.c.h.b16 %v3512
        %v3725 = vunpack.c.l.b16 %v3513
        %v3726 = vunpack.c.h.b16 %v3513
        %v3727 = vunpack.c.l.b16 %v3514
        %v3728 = vunpack.c.h.b16 %v3514
        %v3729 = vunpack.c.l.b16 %v3515
        %v3730 = vunpack.c.h.b16 %v3515
        %v3731 = vunpack.c.l.b16 %v3516
        %v3732 = vunpack.c.h.b16 %v3516
        %v3733 = vunpack.c.l.b16 %v3517
        %v3734 = vunpack.c.h.b16 %v3517
        %v3735 = vunpack.c.l.b16 %v3518
        %v3736 = vunpack.c.h.b16 %v3518
        %v3737 = vunpack.c.l.b16 %v3519
        %v3738 = vunpack.c.h.b16 %v3519
        %v3739 = vunpack.c.l.b16 %v3520
        %v3740 = vunpack.c.h.b16 %v3520
        %v3741 = vunpack.c.l.b16 %v3521
        %v3742 = vunpack.c.h.b16 %v3521
        %v3743 = vunpack.c.l.b16 %v3522
        %v3744 = vunpack.c.h.b16 %v3522
        %v3745 = vunpack.c.l.b16 %v3523
        %v3746 = vunpack.c.h.b16 %v3523
        %v3747 = vunpack.c.l.b16 %v3524
        %v3748 = vunpack.c.h.b16 %v3524
        %v3749 = vunpack.c.l.b16 %v3525
        %v3750 = vunpack.c.h.b16 %v3525
        %v3751 = vunpack.c.l.b16 %v3526
        %v3752 = vunpack.c.h.b16 %v3526
        %v3753 = vunpack.c.l.b16 %v3527
        %v3754 = vunpack.c.h.b16 %v3527
        %v3755 = vunpack.c.l.b16 %v3528
        %v3756 = vunpack.c.h.b16 %v3528
        %v3757 = vunpack.c.l.b16 %v3529
        %v3758 = vunpack.c.h.b16 %v3529
        %v3759 = vunpack.c.l.b16 %v3530
        %v3760 = vunpack.c.h.b16 %v3530
        %v3761 = vunpack.c.l.b16 %v3531
        %v3762 = vunpack.c.h.b16 %v3531
        %v3763 = vunpack.c.l.b16 %v3532
        %v3764 = vunpack.c.h.b16 %v3532
        %v3765 = vunpack.c.l.b16 %v3533
        %v3766 = vunpack.c.h.b16 %v3533
        %v3767 = vunpack.c.l.b16 %v3534
        %v3768 = vunpack.c.h.b16 %v3534
        %v3769 = vpack.c.b16 %v3649, %v3641
        %v3770 = vpack.c.b16 %v3650, %v3642
        %v3771 = vpack.c.b16 %v3651, %v3643
        %v3772 = vpack.c.b16 %v3652, %v3644
        %v3773 = vpack.c.b16 %v3653, %v3645
        %v3774 = vpack.c.b16 %v3654, %v3646
        %v3775 = vpack.c.b16 %v3655, %v3647
        %v3776 = vpack.c.b16 %v3656, %v3648
        %v3777 = vpack.c.b16 %v3665, %v3657
        %v3778 = vpack.c.b16 %v3666, %v3658
        %v3779 = vpack.c.b16 %v3667, %v3659
        %v3780 = vpack.c.b16 %v3668, %v3660
        %v3781 = vpack.c.b16 %v3669, %v3661
        %v3782 = vpack.c.b16 %v3670, %v3662
        %v3783 = vpack.c.b16 %v3671, %v3663
        %v3784 = vpack.c.b16 %v3672, %v3664
        %v3785 = vpack.c.b16 %v3681, %v3673
        %v3786 = vpack.c.b16 %v3682, %v3674
        %v3787 = vpack.c.b16 %v3683, %v3675
        %v3788 = vpack.c.b16 %v3684, %v3676
        %v3789 = vpack.c.b16 %v3685, %v3677
        %v3790 = vpack.c.b16 %v3686, %v3678
        %v3791 = vpack.c.b16 %v3687, %v3679
        %v3792 = vpack.c.b16 %v3688, %v3680
        %v3793 = vpack.c.b16 %v3697, %v3689
        %v3794 = vpack.c.b16 %v3698, %v3690
        %v3795 = vpack.c.b16 %v3699, %v3691
        %v3796 = vpack.c.b16 %v3700, %v3692
        %v3797 = vpack.c.b16 %v3701, %v3693
        %v3798 = vpack.c.b16 %v3702, %v3694
        %v3799 = vpack.c.b16 %v3703, %v3695
        %v3800 = vpack.c.b16 %v3704, %v3696
        %v3801 = vpack.c.b16 %v3713, %v3705
        %v3802 = vpack.c.b16 %v3714, %v3706
        %v3803 = vpack.c.b16 %v3715, %v3707
        %v3804 = vpack.c.b16 %v3716, %v3708
        %v3805 = vpack.c.b16 %v3717, %v3709
        %v3806 = vpack.c.b16 %v3718, %v3710
        %v3807 = vpack.c.b16 %v3719, %v3711
        %v3808 = vpack.c.b16 %v3720, %v3712
        %v3809 = vpack.c.b16 %v3729, %v3721
        %v3810 = vpack.c.b16 %v3730, %v3722
        %v3811 = vpack.c.b16 %v3731, %v3723
        %v3812 = vpack.c.b16 %v3732, %v3724
        %v3813 = vpack.c.b16 %v3733, %v3725
        %v3814 = vpack.c.b16 %v3734, %v3726
        %v3815 = vpack.c.b16 %v3735, %v3727
        %v3816 = vpack.c.b16 %v3736, %v3728
        %v3817 = vpack.c.b16 %v3745, %v3737
        %v3818 = vpack.c.b16 %v3746, %v3738
        %v3819 = vpack.c.b16 %v3747, %v3739
        %v3820 = vpack.c.b16 %v3748, %v3740
        %v3821 = vpack.c.b16 %v3749, %v3741
        %v3822 = vpack.c.b16 %v3750, %v3742
        %v3823 = vpack.c.b16 %v3751, %v3743
        %v3824 = vpack.c.b16 %v3752, %v3744
        %v3825 = vpack.c.b16 %v3761, %v3753
        %v3826 = vpack.c.b16 %v3762, %v3754
        %v3827 = vpack.c.b16 %v3763, %v3755
        %v3828 = vpack.c.b16 %v3764, %v3756
        %v3829 = vpack.c.b16 %v3765, %v3757
        %v3830 = vpack.c.b16 %v3766, %v3758
        %v3831 = vpack.c.b16 %v3767, %v3759
        %v3832 = vpack.c.b16 %v3768, %v3760
        %3897 = vmatprep.subr.bf16.mxu0 %v3826
        %3898 = vmatpush1.bf16.msra.mxu0 %v3825
        %3899 = vmatprep.subr.bf16.mxu0 %v3818
        %3900 = vmatpush1.bf16.msra.mxu0 %v3817
        %3901 = vmatprep.subr.bf16.mxu0 %v3810
        %3902 = vmatpush1.bf16.msra.mxu0 %v3809
        %3903 = vmatprep.subr.bf16.mxu0 %v3802
        %3904 = vmatpush1.bf16.msra.mxu0 %v3801
        %3905 = vmatprep.subr.bf16.mxu0 %v3794
        %3906 = vmatpush1.bf16.msra.mxu0 %v3793
        %3907 = vmatprep.subr.bf16.mxu0 %v3786
        %3908 = vmatpush1.bf16.msra.mxu0 %v3785
        %3909 = vmatprep.subr.bf16.mxu0 %v3778
        %3910 = vmatpush1.bf16.msra.mxu0 %v3777
        %3911 = vmatprep.subr.bf16.mxu0 %v3770
        %3912 = vmatpush1.bf16.msra.mxu0 %v3769
        %3913 = vmatprep.subr.bf16.mxu0 0
        %3914 = vmatpush2.bf16.msra.mxu0 0
        %3915 = vmatprep.subr.bf16.mxu0 0
        %3916 = vmatpush2.bf16.msra.mxu0 0
        %3917 = vmatprep.subr.bf16.mxu0 0
        %3918 = vmatpush2.bf16.msra.mxu0 0
        %3919 = vmatprep.subr.bf16.mxu0 0
        %3920 = vmatpush2.bf16.msra.mxu0 0
        %3921 = vmatprep.subr.bf16.mxu0 0
        %3922 = vmatpush2.bf16.msra.mxu0 0
        %3923 = vmatprep.subr.bf16.mxu0 0
        %3924 = vmatpush2.bf16.msra.mxu0 0
        %3925 = vmatprep.subr.bf16.mxu0 0
        %3926 = vmatpush2.bf16.msra.mxu0 0
        %3927 = vmatprep.subr.bf16.mxu0 0
        %3928 = vmatpush2.bf16.msra.mxu0 0
        %3929 = vmatprep.mubr.bf16.mxu0 0
        %3930 = vmatmul.mubr.bf16.gmra.mxu0 %v3463
        %v3931 = vpop.f32.mrf.mxu0
        %v3932 = vadd.f32 %v3540, %v3931
        %v3933 = vpop.f32.mrf.mxu0
        %v3934 = vadd.f32 %v3544, %v3933
        %v3935 = vpop.f32.mrf.mxu0
        %v3936 = vadd.f32 %v3540, %v3935
        %v3937 = vpop.f32.mrf.mxu0
        %v3938 = vadd.f32 %v3544, %v3937
        %3939 = vmatprep.mubr.bf16.mxu0 0
        %3940 = vmatmul.mubr.bf16.gmra.mxu0 %v3464
        %v3941 = vpop.f32.mrf.mxu0
        %v3942 = vadd.f32 %v3540, %v3941
        %v3943 = vpop.f32.mrf.mxu0
        %v3944 = vadd.f32 %v3544, %v3943
        %v3945 = vpop.f32.mrf.mxu0
        %v3946 = vadd.f32 %v3540, %v3945
        %v3947 = vpop.f32.mrf.mxu0
        %v3948 = vadd.f32 %v3544, %v3947
        %3949 = vmatprep.mubr.bf16.mxu0 0
        %3950 = vmatmul.mubr.bf16.gmra.mxu0 %v3465
        %v3951 = vpop.f32.mrf.mxu0
        %v3952 = vadd.f32 %v3540, %v3951
        %v3953 = vpop.f32.mrf.mxu0
        %v3954 = vadd.f32 %v3544, %v3953
        %v3955 = vpop.f32.mrf.mxu0
        %v3956 = vadd.f32 %v3540, %v3955
        %v3957 = vpop.f32.mrf.mxu0
        %v3958 = vadd.f32 %v3544, %v3957
        %3959 = vmatprep.mubr.bf16.mxu0 0
        %3960 = vmatmul.mubr.bf16.gmra.mxu0 %v3466
        %v3961 = vpop.f32.mrf.mxu0
        %v3962 = vadd.f32 %v3540, %v3961
        %v3963 = vpop.f32.mrf.mxu0
        %v3964 = vadd.f32 %v3544, %v3963
        %v3965 = vpop.f32.mrf.mxu0
        %v3966 = vadd.f32 %v3540, %v3965
        %v3967 = vpop.f32.mrf.mxu0
        %v3968 = vadd.f32 %v3544, %v3967
        %3969 = vmatprep.mubr.bf16.mxu0 0
        %3970 = vmatmul.mubr.bf16.gmra.mxu0 %v3467
        %v3971 = vpop.f32.mrf.mxu0
        %v3972 = vadd.f32 %v3540, %v3971
        %v3973 = vpop.f32.mrf.mxu0
        %v3974 = vadd.f32 %v3544, %v3973
        %v3975 = vpop.f32.mrf.mxu0
        %v3976 = vadd.f32 %v3540, %v3975
        %v3977 = vpop.f32.mrf.mxu0
        %v3978 = vadd.f32 %v3544, %v3977
        %3979 = vmatprep.mubr.bf16.mxu0 0
        %3980 = vmatmul.mubr.bf16.gmra.mxu0 %v3468
        %v3981 = vpop.f32.mrf.mxu0
        %v3982 = vadd.f32 %v3540, %v3981
        %v3983 = vpop.f32.mrf.mxu0
        %v3984 = vadd.f32 %v3544, %v3983
        %v3985 = vpop.f32.mrf.mxu0
        %v3986 = vadd.f32 %v3540, %v3985
        %v3987 = vpop.f32.mrf.mxu0
        %v3988 = vadd.f32 %v3544, %v3987
        %3989 = vmatprep.mubr.bf16.mxu0 0
        %3990 = vmatmul.mubr.bf16.gmra.mxu0 %v3469
        %v3991 = vpop.f32.mrf.mxu0
        %v3992 = vadd.f32 %v3540, %v3991
        %v3993 = vpop.f32.mrf.mxu0
        %v3994 = vadd.f32 %v3544, %v3993
        %v3995 = vpop.f32.mrf.mxu0
        %v3996 = vadd.f32 %v3540, %v3995
        %v3997 = vpop.f32.mrf.mxu0
        %v3998 = vadd.f32 %v3544, %v3997
        %3999 = vmatprep.mubr.bf16.mxu0 0
        %4000 = vmatmul.mubr.bf16.gmra.mxu0 %v3470
        %v4001 = vpop.f32.mrf.mxu0
        %v4002 = vadd.f32 %v3540, %v4001
        %v4003 = vpop.f32.mrf.mxu0
        %v4004 = vadd.f32 %v3544, %v4003
        %v4005 = vpop.f32.mrf.mxu0
        %v4006 = vadd.f32 %v3540, %v4005
        %v4007 = vpop.f32.mrf.mxu0
        %v4008 = vadd.f32 %v3544, %v4007
        %4009 = vdwg.mxu0
        %4010 = vmatprep.subr.bf16.mxu0 %v3828
        %4011 = vmatpush1.bf16.msra.mxu0 %v3827
        %4012 = vmatprep.subr.bf16.mxu0 %v3820
        %4013 = vmatpush1.bf16.msra.mxu0 %v3819
        %4014 = vmatprep.subr.bf16.mxu0 %v3812
        %4015 = vmatpush1.bf16.msra.mxu0 %v3811
        %4016 = vmatprep.subr.bf16.mxu0 %v3804
        %4017 = vmatpush1.bf16.msra.mxu0 %v3803
        %4018 = vmatprep.subr.bf16.mxu0 %v3796
        %4019 = vmatpush1.bf16.msra.mxu0 %v3795
        %4020 = vmatprep.subr.bf16.mxu0 %v3788
        %4021 = vmatpush1.bf16.msra.mxu0 %v3787
        %4022 = vmatprep.subr.bf16.mxu0 %v3780
        %4023 = vmatpush1.bf16.msra.mxu0 %v3779
        %4024 = vmatprep.subr.bf16.mxu0 %v3772
        %4025 = vmatpush1.bf16.msra.mxu0 %v3771
        %4026 = vmatprep.subr.bf16.mxu0 0
        %4027 = vmatpush2.bf16.msra.mxu0 0
        %4028 = vmatprep.subr.bf16.mxu0 0
        %4029 = vmatpush2.bf16.msra.mxu0 0
        %4030 = vmatprep.subr.bf16.mxu0 0
        %4031 = vmatpush2.bf16.msra.mxu0 0
        %4032 = vmatprep.subr.bf16.mxu0 0
        %4033 = vmatpush2.bf16.msra.mxu0 0
        %4034 = vmatprep.subr.bf16.mxu0 0
        %4035 = vmatpush2.bf16.msra.mxu0 0
        %4036 = vmatprep.subr.bf16.mxu0 0
        %4037 = vmatpush2.bf16.msra.mxu0 0
        %4038 = vmatprep.subr.bf16.mxu0 0
        %4039 = vmatpush2.bf16.msra.mxu0 0
        %4040 = vmatprep.subr.bf16.mxu0 0
        %4041 = vmatpush2.bf16.msra.mxu0 0
        %4042 = vmatprep.mubr.bf16.mxu0 0
        %4043 = vmatmul.mubr.bf16.gmra.mxu0 %v3463
        %v4044 = vpop.f32.mrf.mxu0
        %v4045 = vadd.f32 %v3548, %v4044
        %v4046 = vpop.f32.mrf.mxu0
        %v4047 = vadd.f32 %v3552, %v4046
        %v4048 = vpop.f32.mrf.mxu0
        %v4049 = vadd.f32 %v3548, %v4048
        %v4050 = vpop.f32.mrf.mxu0
        %v4051 = vadd.f32 %v3552, %v4050
        %4052 = vmatprep.mubr.bf16.mxu0 0
        %4053 = vmatmul.mubr.bf16.gmra.mxu0 %v3464
        %v4054 = vpop.f32.mrf.mxu0
        %v4055 = vadd.f32 %v3548, %v4054
        %v4056 = vpop.f32.mrf.mxu0
        %v4057 = vadd.f32 %v3552, %v4056
        %v4058 = vpop.f32.mrf.mxu0
        %v4059 = vadd.f32 %v3548, %v4058
        %v4060 = vpop.f32.mrf.mxu0
        %v4061 = vadd.f32 %v3552, %v4060
        %4062 = vmatprep.mubr.bf16.mxu0 0
        %4063 = vmatmul.mubr.bf16.gmra.mxu0 %v3465
        %v4064 = vpop.f32.mrf.mxu0
        %v4065 = vadd.f32 %v3548, %v4064
        %v4066 = vpop.f32.mrf.mxu0
        %v4067 = vadd.f32 %v3552, %v4066
        %v4068 = vpop.f32.mrf.mxu0
        %v4069 = vadd.f32 %v3548, %v4068
        %v4070 = vpop.f32.mrf.mxu0
        %v4071 = vadd.f32 %v3552, %v4070
        %4072 = vmatprep.mubr.bf16.mxu0 0
        %4073 = vmatmul.mubr.bf16.gmra.mxu0 %v3466
        %v4074 = vpop.f32.mrf.mxu0
        %v4075 = vadd.f32 %v3548, %v4074
        %v4076 = vpop.f32.mrf.mxu0
        %v4077 = vadd.f32 %v3552, %v4076
        %v4078 = vpop.f32.mrf.mxu0
        %v4079 = vadd.f32 %v3548, %v4078
        %v4080 = vpop.f32.mrf.mxu0
        %v4081 = vadd.f32 %v3552, %v4080
        %4082 = vmatprep.mubr.bf16.mxu0 0
        %4083 = vmatmul.mubr.bf16.gmra.mxu0 %v3467
        %v4084 = vpop.f32.mrf.mxu0
        %v4085 = vadd.f32 %v3548, %v4084
        %v4086 = vpop.f32.mrf.mxu0
        %v4087 = vadd.f32 %v3552, %v4086
        %v4088 = vpop.f32.mrf.mxu0
        %v4089 = vadd.f32 %v3548, %v4088
        %v4090 = vpop.f32.mrf.mxu0
        %v4091 = vadd.f32 %v3552, %v4090
        %4092 = vmatprep.mubr.bf16.mxu0 0
        %4093 = vmatmul.mubr.bf16.gmra.mxu0 %v3468
        %v4094 = vpop.f32.mrf.mxu0
        %v4095 = vadd.f32 %v3548, %v4094
        %v4096 = vpop.f32.mrf.mxu0
        %v4097 = vadd.f32 %v3552, %v4096
        %v4098 = vpop.f32.mrf.mxu0
        %v4099 = vadd.f32 %v3548, %v4098
        %v4100 = vpop.f32.mrf.mxu0
        %v4101 = vadd.f32 %v3552, %v4100
        %4102 = vmatprep.mubr.bf16.mxu0 0
        %4103 = vmatmul.mubr.bf16.gmra.mxu0 %v3469
        %v4104 = vpop.f32.mrf.mxu0
        %v4105 = vadd.f32 %v3548, %v4104
        %v4106 = vpop.f32.mrf.mxu0
        %v4107 = vadd.f32 %v3552, %v4106
        %v4108 = vpop.f32.mrf.mxu0
        %v4109 = vadd.f32 %v3548, %v4108
        %v4110 = vpop.f32.mrf.mxu0
        %v4111 = vadd.f32 %v3552, %v4110
        %4112 = vmatprep.mubr.bf16.mxu0 0
        %4113 = vmatmul.mubr.bf16.gmra.mxu0 %v3470
        %v4114 = vpop.f32.mrf.mxu0
        %v4115 = vadd.f32 %v3548, %v4114
        %v4116 = vpop.f32.mrf.mxu0
        %v4117 = vadd.f32 %v3552, %v4116
        %v4118 = vpop.f32.mrf.mxu0
        %v4119 = vadd.f32 %v3548, %v4118
        %v4120 = vpop.f32.mrf.mxu0
        %v4121 = vadd.f32 %v3552, %v4120
        %4122 = vdwg.mxu0
        %4123 = vmatprep.subr.bf16.mxu0 %v3830
        %4124 = vmatpush1.bf16.msra.mxu0 %v3829
        %4125 = vmatprep.subr.bf16.mxu0 %v3822
        %4126 = vmatpush1.bf16.msra.mxu0 %v3821
        %4127 = vmatprep.subr.bf16.mxu0 %v3814
        %4128 = vmatpush1.bf16.msra.mxu0 %v3813
        %4129 = vmatprep.subr.bf16.mxu0 %v3806
        %4130 = vmatpush1.bf16.msra.mxu0 %v3805
        %4131 = vmatprep.subr.bf16.mxu0 %v3798
        %4132 = vmatpush1.bf16.msra.mxu0 %v3797
        %4133 = vmatprep.subr.bf16.mxu0 %v3790
        %4134 = vmatpush1.bf16.msra.mxu0 %v3789
        %4135 = vmatprep.subr.bf16.mxu0 %v3782
        %4136 = vmatpush1.bf16.msra.mxu0 %v3781
        %4137 = vmatprep.subr.bf16.mxu0 %v3774
        %4138 = vmatpush1.bf16.msra.mxu0 %v3773
        %4139 = vmatprep.subr.bf16.mxu0 0
        %4140 = vmatpush2.bf16.msra.mxu0 0
        %4141 = vmatprep.subr.bf16.mxu0 0
        %4142 = vmatpush2.bf16.msra.mxu0 0
        %4143 = vmatprep.subr.bf16.mxu0 0
        %4144 = vmatpush2.bf16.msra.mxu0 0
        %4145 = vmatprep.subr.bf16.mxu0 0
        %4146 = vmatpush2.bf16.msra.mxu0 0
        %4147 = vmatprep.subr.bf16.mxu0 0
        %4148 = vmatpush2.bf16.msra.mxu0 0
        %4149 = vmatprep.subr.bf16.mxu0 0
        %4150 = vmatpush2.bf16.msra.mxu0 0
        %4151 = vmatprep.subr.bf16.mxu0 0
        %4152 = vmatpush2.bf16.msra.mxu0 0
        %4153 = vmatprep.subr.bf16.mxu0 0
        %4154 = vmatpush2.bf16.msra.mxu0 0
        %4155 = vmatprep.mubr.bf16.mxu0 0
        %4156 = vmatmul.mubr.bf16.gmra.mxu0 %v3463
        %v4157 = vpop.f32.mrf.mxu0
        %v4158 = vadd.f32 %v3556, %v4157
        %v4159 = vpop.f32.mrf.mxu0
        %v4160 = vadd.f32 %v3560, %v4159
        %v4161 = vpop.f32.mrf.mxu0
        %v4162 = vadd.f32 %v3556, %v4161
        %v4163 = vpop.f32.mrf.mxu0
        %v4164 = vadd.f32 %v3560, %v4163
        %4165 = vmatprep.mubr.bf16.mxu0 0
        %4166 = vmatmul.mubr.bf16.gmra.mxu0 %v3464
        %v4167 = vpop.f32.mrf.mxu0
        %v4168 = vadd.f32 %v3556, %v4167
        %v4169 = vpop.f32.mrf.mxu0
        %v4170 = vadd.f32 %v3560, %v4169
        %v4171 = vpop.f32.mrf.mxu0
        %v4172 = vadd.f32 %v3556, %v4171
        %v4173 = vpop.f32.mrf.mxu0
        %v4174 = vadd.f32 %v3560, %v4173
        %4175 = vmatprep.mubr.bf16.mxu0 0
        %4176 = vmatmul.mubr.bf16.gmra.mxu0 %v3465
        %v4177 = vpop.f32.mrf.mxu0
        %v4178 = vadd.f32 %v3556, %v4177
        %v4179 = vpop.f32.mrf.mxu0
        %v4180 = vadd.f32 %v3560, %v4179
        %v4181 = vpop.f32.mrf.mxu0
        %v4182 = vadd.f32 %v3556, %v4181
        %v4183 = vpop.f32.mrf.mxu0
        %v4184 = vadd.f32 %v3560, %v4183
        %4185 = vmatprep.mubr.bf16.mxu0 0
        %4186 = vmatmul.mubr.bf16.gmra.mxu0 %v3466
        %v4187 = vpop.f32.mrf.mxu0
        %v4188 = vadd.f32 %v3556, %v4187
        %v4189 = vpop.f32.mrf.mxu0
        %v4190 = vadd.f32 %v3560, %v4189
        %v4191 = vpop.f32.mrf.mxu0
        %v4192 = vadd.f32 %v3556, %v4191
        %v4193 = vpop.f32.mrf.mxu0
        %v4194 = vadd.f32 %v3560, %v4193
        %4195 = vmatprep.mubr.bf16.mxu0 0
        %4196 = vmatmul.mubr.bf16.gmra.mxu0 %v3467
        %v4197 = vpop.f32.mrf.mxu0
        %v4198 = vadd.f32 %v3556, %v4197
        %v4199 = vpop.f32.mrf.mxu0
        %v4200 = vadd.f32 %v3560, %v4199
        %v4201 = vpop.f32.mrf.mxu0
        %v4202 = vadd.f32 %v3556, %v4201
        %v4203 = vpop.f32.mrf.mxu0
        %v4204 = vadd.f32 %v3560, %v4203
        %4205 = vmatprep.mubr.bf16.mxu0 0
        %4206 = vmatmul.mubr.bf16.gmra.mxu0 %v3468
        %v4207 = vpop.f32.mrf.mxu0
        %v4208 = vadd.f32 %v3556, %v4207
        %v4209 = vpop.f32.mrf.mxu0
        %v4210 = vadd.f32 %v3560, %v4209
        %v4211 = vpop.f32.mrf.mxu0
        %v4212 = vadd.f32 %v3556, %v4211
        %v4213 = vpop.f32.mrf.mxu0
        %v4214 = vadd.f32 %v3560, %v4213
        %4215 = vmatprep.mubr.bf16.mxu0 0
        %4216 = vmatmul.mubr.bf16.gmra.mxu0 %v3469
        %v4217 = vpop.f32.mrf.mxu0
        %v4218 = vadd.f32 %v3556, %v4217
        %v4219 = vpop.f32.mrf.mxu0
        %v4220 = vadd.f32 %v3560, %v4219
        %v4221 = vpop.f32.mrf.mxu0
        %v4222 = vadd.f32 %v3556, %v4221
        %v4223 = vpop.f32.mrf.mxu0
        %v4224 = vadd.f32 %v3560, %v4223
        %4225 = vmatprep.mubr.bf16.mxu0 0
        %4226 = vmatmul.mubr.bf16.gmra.mxu0 %v3470
        %v4227 = vpop.f32.mrf.mxu0
        %v4228 = vadd.f32 %v3556, %v4227
        %v4229 = vpop.f32.mrf.mxu0
        %v4230 = vadd.f32 %v3560, %v4229
        %v4231 = vpop.f32.mrf.mxu0
        %v4232 = vadd.f32 %v3556, %v4231
        %v4233 = vpop.f32.mrf.mxu0
        %v4234 = vadd.f32 %v3560, %v4233
        %4235 = vdwg.mxu0
        %4236 = vmatprep.subr.bf16.mxu0 %v3832
        %4237 = vmatpush1.bf16.msra.mxu0 %v3831
        %4238 = vmatprep.subr.bf16.mxu0 %v3824
        %4239 = vmatpush1.bf16.msra.mxu0 %v3823
        %4240 = vmatprep.subr.bf16.mxu0 %v3816
        %4241 = vmatpush1.bf16.msra.mxu0 %v3815
        %4242 = vmatprep.subr.bf16.mxu0 %v3808
        %4243 = vmatpush1.bf16.msra.mxu0 %v3807
        %4244 = vmatprep.subr.bf16.mxu0 %v3800
        %4245 = vmatpush1.bf16.msra.mxu0 %v3799
        %4246 = vmatprep.subr.bf16.mxu0 %v3792
        %4247 = vmatpush1.bf16.msra.mxu0 %v3791
        %4248 = vmatprep.subr.bf16.mxu0 %v3784
        %4249 = vmatpush1.bf16.msra.mxu0 %v3783
        %4250 = vmatprep.subr.bf16.mxu0 %v3776
        %4251 = vmatpush1.bf16.msra.mxu0 %v3775
        %4252 = vmatprep.subr.bf16.mxu0 0
        %4253 = vmatpush2.bf16.msra.mxu0 0
        %4254 = vmatprep.subr.bf16.mxu0 0
        %4255 = vmatpush2.bf16.msra.mxu0 0
        %4256 = vmatprep.subr.bf16.mxu0 0
        %4257 = vmatpush2.bf16.msra.mxu0 0
        %4258 = vmatprep.subr.bf16.mxu0 0
        %4259 = vmatpush2.bf16.msra.mxu0 0
        %4260 = vmatprep.subr.bf16.mxu0 0
        %4261 = vmatpush2.bf16.msra.mxu0 0
        %4262 = vmatprep.subr.bf16.mxu0 0
        %4263 = vmatpush2.bf16.msra.mxu0 0
        %4264 = vmatprep.subr.bf16.mxu0 0
        %4265 = vmatpush2.bf16.msra.mxu0 0
        %4266 = vmatprep.subr.bf16.mxu0 0
        %4267 = vmatpush2.bf16.msra.mxu0 0
        %4268 = vmatprep.mubr.bf16.mxu0 0
        %4269 = vmatmul.mubr.bf16.gmra.mxu0 %v3463
        %v4270 = vpop.f32.mrf.mxu0
        %v4271 = vadd.f32 %v3564, %v4270
        %v4272 = vpop.f32.mrf.mxu0
        %v4273 = vadd.f32 %v3568, %v4272
        %v4274 = vpop.f32.mrf.mxu0
        %v4275 = vadd.f32 %v3564, %v4274
        %v4276 = vpop.f32.mrf.mxu0
        %v4277 = vadd.f32 %v3568, %v4276
        %4278 = vmatprep.mubr.bf16.mxu0 0
        %4279 = vmatmul.mubr.bf16.gmra.mxu0 %v3464
        %v4280 = vpop.f32.mrf.mxu0
        %v4281 = vadd.f32 %v3564, %v4280
        %v4282 = vpop.f32.mrf.mxu0
        %v4283 = vadd.f32 %v3568, %v4282
        %v4284 = vpop.f32.mrf.mxu0
        %v4285 = vadd.f32 %v3564, %v4284
        %v4286 = vpop.f32.mrf.mxu0
        %v4287 = vadd.f32 %v3568, %v4286
        %4288 = vmatprep.mubr.bf16.mxu0 0
        %4289 = vmatmul.mubr.bf16.gmra.mxu0 %v3465
        %v4290 = vpop.f32.mrf.mxu0
        %v4291 = vadd.f32 %v3564, %v4290
        %v4292 = vpop.f32.mrf.mxu0
        %v4293 = vadd.f32 %v3568, %v4292
        %v4294 = vpop.f32.mrf.mxu0
        %v4295 = vadd.f32 %v3564, %v4294
        %v4296 = vpop.f32.mrf.mxu0
        %v4297 = vadd.f32 %v3568, %v4296
        %4298 = vmatprep.mubr.bf16.mxu0 0
        %4299 = vmatmul.mubr.bf16.gmra.mxu0 %v3466
        %v4300 = vpop.f32.mrf.mxu0
        %v4301 = vadd.f32 %v3564, %v4300
        %v4302 = vpop.f32.mrf.mxu0
        %v4303 = vadd.f32 %v3568, %v4302
        %v4304 = vpop.f32.mrf.mxu0
        %v4305 = vadd.f32 %v3564, %v4304
        %v4306 = vpop.f32.mrf.mxu0
        %v4307 = vadd.f32 %v3568, %v4306
        %4308 = vmatprep.mubr.bf16.mxu0 0
        %4309 = vmatmul.mubr.bf16.gmra.mxu0 %v3467
        %v4310 = vpop.f32.mrf.mxu0
        %v4311 = vadd.f32 %v3564, %v4310
        %v4312 = vpop.f32.mrf.mxu0
        %v4313 = vadd.f32 %v3568, %v4312
        %v4314 = vpop.f32.mrf.mxu0
        %v4315 = vadd.f32 %v3564, %v4314
        %v4316 = vpop.f32.mrf.mxu0
        %v4317 = vadd.f32 %v3568, %v4316
        %4318 = vmatprep.mubr.bf16.mxu0 0
        %4319 = vmatmul.mubr.bf16.gmra.mxu0 %v3468
        %v4320 = vpop.f32.mrf.mxu0
        %v4321 = vadd.f32 %v3564, %v4320
        %v4322 = vpop.f32.mrf.mxu0
        %v4323 = vadd.f32 %v3568, %v4322
        %v4324 = vpop.f32.mrf.mxu0
        %v4325 = vadd.f32 %v3564, %v4324
        %v4326 = vpop.f32.mrf.mxu0
        %v4327 = vadd.f32 %v3568, %v4326
        %4328 = vmatprep.mubr.bf16.mxu0 0
        %4329 = vmatmul.mubr.bf16.gmra.mxu0 %v3469
        %v4330 = vpop.f32.mrf.mxu0
        %v4331 = vadd.f32 %v3564, %v4330
        %v4332 = vpop.f32.mrf.mxu0
        %v4333 = vadd.f32 %v3568, %v4332
        %v4334 = vpop.f32.mrf.mxu0
        %v4335 = vadd.f32 %v3564, %v4334
        %v4336 = vpop.f32.mrf.mxu0
        %v4337 = vadd.f32 %v3568, %v4336
        %4338 = vmatprep.mubr.bf16.mxu0 0
        %4339 = vmatmul.mubr.bf16.gmra.mxu0 %v3470
        %v4340 = vpop.f32.mrf.mxu0
        %v4341 = vadd.f32 %v3564, %v4340
        %v4342 = vpop.f32.mrf.mxu0
        %v4343 = vadd.f32 %v3568, %v4342
        %v4344 = vpop.f32.mrf.mxu0
        %v4345 = vadd.f32 %v3564, %v4344
        %v4346 = vpop.f32.mrf.mxu0
        %v4347 = vadd.f32 %v3568, %v4346
        %4348 = vdwg.mxu0
        %v4349 = vmax.f32 %v3932, %v3934
        %v4350 = vmax.f32 %v4349, %v4045
        %v4351 = vmax.f32 %v4350, %v4047
        %v4352 = vmax.f32 %v4351, %v4158
        %v4353 = vmax.f32 %v4352, %v4160
        %v4354 = vmax.f32 %v4353, %v4271
        %v4355 = vmax.f32 %v4354, %v4273
        %4356 = vmax.xlane.f32.xlu0 %v4355
        %v4357 = vpop.xlane.xlu0 %4356
        %v4358 = vmax.f32 %v3936, %v3938
        %v4359 = vmax.f32 %v4358, %v4049
        %v4360 = vmax.f32 %v4359, %v4051
        %v4361 = vmax.f32 %v4360, %v4162
        %v4362 = vmax.f32 %v4361, %v4164
        %v4363 = vmax.f32 %v4362, %v4275
        %v4364 = vmax.f32 %v4363, %v4277
        %4365 = vmax.xlane.f32.xlu0 %v4364
        %v4366 = vpop.xlane.xlu0 %4365
        %v4367 = vmax.f32 %v3942, %v3944
        %v4368 = vmax.f32 %v4367, %v4055
        %v4369 = vmax.f32 %v4368, %v4057
        %v4370 = vmax.f32 %v4369, %v4168
        %v4371 = vmax.f32 %v4370, %v4170
        %v4372 = vmax.f32 %v4371, %v4281
        %v4373 = vmax.f32 %v4372, %v4283
        %4374 = vmax.xlane.f32.xlu0 %v4373
        %v4375 = vpop.xlane.xlu0 %4374
        %v4376 = vmax.f32 %v3946, %v3948
        %v4377 = vmax.f32 %v4376, %v4059
        %v4378 = vmax.f32 %v4377, %v4061
        %v4379 = vmax.f32 %v4378, %v4172
        %v4380 = vmax.f32 %v4379, %v4174
        %v4381 = vmax.f32 %v4380, %v4285
        %v4382 = vmax.f32 %v4381, %v4287
        %4383 = vmax.xlane.f32.xlu0 %v4382
        %v4384 = vpop.xlane.xlu0 %4383
        %v4385 = vmax.f32 %v3952, %v3954
        %v4386 = vmax.f32 %v4385, %v4065
        %v4387 = vmax.f32 %v4386, %v4067
        %v4388 = vmax.f32 %v4387, %v4178
        %v4389 = vmax.f32 %v4388, %v4180
        %v4390 = vmax.f32 %v4389, %v4291
        %v4391 = vmax.f32 %v4390, %v4293
        %4392 = vmax.xlane.f32.xlu0 %v4391
        %v4393 = vpop.xlane.xlu0 %4392
        %v4394 = vmax.f32 %v3956, %v3958
        %v4395 = vmax.f32 %v4394, %v4069
        %v4396 = vmax.f32 %v4395, %v4071
        %v4397 = vmax.f32 %v4396, %v4182
        %v4398 = vmax.f32 %v4397, %v4184
        %v4399 = vmax.f32 %v4398, %v4295
        %v4400 = vmax.f32 %v4399, %v4297
        %4401 = vmax.xlane.f32.xlu0 %v4400
        %v4402 = vpop.xlane.xlu0 %4401
        %v4403 = vmax.f32 %v3962, %v3964
        %v4404 = vmax.f32 %v4403, %v4075
        %v4405 = vmax.f32 %v4404, %v4077
        %v4406 = vmax.f32 %v4405, %v4188
        %v4407 = vmax.f32 %v4406, %v4190
        %v4408 = vmax.f32 %v4407, %v4301
        %v4409 = vmax.f32 %v4408, %v4303
        %4410 = vmax.xlane.f32.xlu0 %v4409
        %v4411 = vpop.xlane.xlu0 %4410
        %v4412 = vmax.f32 %v3966, %v3968
        %v4413 = vmax.f32 %v4412, %v4079
        %v4414 = vmax.f32 %v4413, %v4081
        %v4415 = vmax.f32 %v4414, %v4192
        %v4416 = vmax.f32 %v4415, %v4194
        %v4417 = vmax.f32 %v4416, %v4305
        %v4418 = vmax.f32 %v4417, %v4307
        %4419 = vmax.xlane.f32.xlu0 %v4418
        %v4420 = vpop.xlane.xlu0 %4419
        %v4421 = vmax.f32 %v3972, %v3974
        %v4422 = vmax.f32 %v4421, %v4085
        %v4423 = vmax.f32 %v4422, %v4087
        %v4424 = vmax.f32 %v4423, %v4198
        %v4425 = vmax.f32 %v4424, %v4200
        %v4426 = vmax.f32 %v4425, %v4311
        %v4427 = vmax.f32 %v4426, %v4313
        %4428 = vmax.xlane.f32.xlu0 %v4427
        %v4429 = vpop.xlane.xlu0 %4428
        %v4430 = vmax.f32 %v3976, %v3978
        %v4431 = vmax.f32 %v4430, %v4089
        %v4432 = vmax.f32 %v4431, %v4091
        %v4433 = vmax.f32 %v4432, %v4202
        %v4434 = vmax.f32 %v4433, %v4204
        %v4435 = vmax.f32 %v4434, %v4315
        %v4436 = vmax.f32 %v4435, %v4317
        %4437 = vmax.xlane.f32.xlu0 %v4436
        %v4438 = vpop.xlane.xlu0 %4437
        %v4439 = vmax.f32 %v3982, %v3984
        %v4440 = vmax.f32 %v4439, %v4095
        %v4441 = vmax.f32 %v4440, %v4097
        %v4442 = vmax.f32 %v4441, %v4208
        %v4443 = vmax.f32 %v4442, %v4210
        %v4444 = vmax.f32 %v4443, %v4321
        %v4445 = vmax.f32 %v4444, %v4323
        %4446 = vmax.xlane.f32.xlu0 %v4445
        %v4447 = vpop.xlane.xlu0 %4446
        %v4448 = vmax.f32 %v3986, %v3988
        %v4449 = vmax.f32 %v4448, %v4099
        %v4450 = vmax.f32 %v4449, %v4101
        %v4451 = vmax.f32 %v4450, %v4212
        %v4452 = vmax.f32 %v4451, %v4214
        %v4453 = vmax.f32 %v4452, %v4325
        %v4454 = vmax.f32 %v4453, %v4327
        %4455 = vmax.xlane.f32.xlu0 %v4454
        %v4456 = vpop.xlane.xlu0 %4455
        %v4457 = vmax.f32 %v3992, %v3994
        %v4458 = vmax.f32 %v4457, %v4105
        %v4459 = vmax.f32 %v4458, %v4107
        %v4460 = vmax.f32 %v4459, %v4218
        %v4461 = vmax.f32 %v4460, %v4220
        %v4462 = vmax.f32 %v4461, %v4331
        %v4463 = vmax.f32 %v4462, %v4333
        %4464 = vmax.xlane.f32.xlu0 %v4463
        %v4465 = vpop.xlane.xlu0 %4464
        %v4466 = vmax.f32 %v3996, %v3998
        %v4467 = vmax.f32 %v4466, %v4109
        %v4468 = vmax.f32 %v4467, %v4111
        %v4469 = vmax.f32 %v4468, %v4222
        %v4470 = vmax.f32 %v4469, %v4224
        %v4471 = vmax.f32 %v4470, %v4335
        %v4472 = vmax.f32 %v4471, %v4337
        %4473 = vmax.xlane.f32.xlu0 %v4472
        %v4474 = vpop.xlane.xlu0 %4473
        %v4475 = vmax.f32 %v4002, %v4004
        %v4476 = vmax.f32 %v4475, %v4115
        %v4477 = vmax.f32 %v4476, %v4117
        %v4478 = vmax.f32 %v4477, %v4228
        %v4479 = vmax.f32 %v4478, %v4230
        %v4480 = vmax.f32 %v4479, %v4341
        %v4481 = vmax.f32 %v4480, %v4343
        %4482 = vmax.xlane.f32.xlu0 %v4481
        %v4483 = vpop.xlane.xlu0 %4482
        %v4484 = vmax.f32 %v4006, %v4008
        %v4485 = vmax.f32 %v4484, %v4119
        %v4486 = vmax.f32 %v4485, %v4121
        %v4487 = vmax.f32 %v4486, %v4232
        %v4488 = vmax.f32 %v4487, %v4234
        %v4489 = vmax.f32 %v4488, %v4345
        %v4490 = vmax.f32 %v4489, %v4347
        %4491 = vmax.xlane.f32.xlu0 %v4490
        %v4492 = vpop.xlane.xlu0 %4491
        %v4493 = vsub.f32 %v3932, %v4357
        %v4494 = vsub.f32 %v3934, %v4357
        %v4495 = vsub.f32 %v4045, %v4357
        %v4496 = vsub.f32 %v4047, %v4357
        %v4497 = vsub.f32 %v4158, %v4357
        %v4498 = vsub.f32 %v4160, %v4357
        %v4499 = vsub.f32 %v4271, %v4357
        %v4500 = vsub.f32 %v4273, %v4357
        %v4501 = vsub.f32 %v3936, %v4366
        %v4502 = vsub.f32 %v3938, %v4366
        %v4503 = vsub.f32 %v4049, %v4366
        %v4504 = vsub.f32 %v4051, %v4366
        %v4505 = vsub.f32 %v4162, %v4366
        %v4506 = vsub.f32 %v4164, %v4366
        %v4507 = vsub.f32 %v4275, %v4366
        %v4508 = vsub.f32 %v4277, %v4366
        %v4509 = vsub.f32 %v3942, %v4375
        %v4510 = vsub.f32 %v3944, %v4375
        %v4511 = vsub.f32 %v4055, %v4375
        %v4512 = vsub.f32 %v4057, %v4375
        %v4513 = vsub.f32 %v4168, %v4375
        %v4514 = vsub.f32 %v4170, %v4375
        %v4515 = vsub.f32 %v4281, %v4375
        %v4516 = vsub.f32 %v4283, %v4375
        %v4517 = vsub.f32 %v3946, %v4384
        %v4518 = vsub.f32 %v3948, %v4384
        %v4519 = vsub.f32 %v4059, %v4384
        %v4520 = vsub.f32 %v4061, %v4384
        %v4521 = vsub.f32 %v4172, %v4384
        %v4522 = vsub.f32 %v4174, %v4384
        %v4523 = vsub.f32 %v4285, %v4384
        %v4524 = vsub.f32 %v4287, %v4384
        %v4525 = vsub.f32 %v3952, %v4393
        %v4526 = vsub.f32 %v3954, %v4393
        %v4527 = vsub.f32 %v4065, %v4393
        %v4528 = vsub.f32 %v4067, %v4393
        %v4529 = vsub.f32 %v4178, %v4393
        %v4530 = vsub.f32 %v4180, %v4393
        %v4531 = vsub.f32 %v4291, %v4393
        %v4532 = vsub.f32 %v4293, %v4393
        %v4533 = vsub.f32 %v3956, %v4402
        %v4534 = vsub.f32 %v3958, %v4402
        %v4535 = vsub.f32 %v4069, %v4402
        %v4536 = vsub.f32 %v4071, %v4402
        %v4537 = vsub.f32 %v4182, %v4402
        %v4538 = vsub.f32 %v4184, %v4402
        %v4539 = vsub.f32 %v4295, %v4402
        %v4540 = vsub.f32 %v4297, %v4402
        %v4541 = vsub.f32 %v3962, %v4411
        %v4542 = vsub.f32 %v3964, %v4411
        %v4543 = vsub.f32 %v4075, %v4411
        %v4544 = vsub.f32 %v4077, %v4411
        %v4545 = vsub.f32 %v4188, %v4411
        %v4546 = vsub.f32 %v4190, %v4411
        %v4547 = vsub.f32 %v4301, %v4411
        %v4548 = vsub.f32 %v4303, %v4411
        %v4549 = vsub.f32 %v3966, %v4420
        %v4550 = vsub.f32 %v3968, %v4420
        %v4551 = vsub.f32 %v4079, %v4420
        %v4552 = vsub.f32 %v4081, %v4420
        %v4553 = vsub.f32 %v4192, %v4420
        %v4554 = vsub.f32 %v4194, %v4420
        %v4555 = vsub.f32 %v4305, %v4420
        %v4556 = vsub.f32 %v4307, %v4420
        %v4557 = vsub.f32 %v3972, %v4429
        %v4558 = vsub.f32 %v3974, %v4429
        %v4559 = vsub.f32 %v4085, %v4429
        %v4560 = vsub.f32 %v4087, %v4429
        %v4561 = vsub.f32 %v4198, %v4429
        %v4562 = vsub.f32 %v4200, %v4429
        %v4563 = vsub.f32 %v4311, %v4429
        %v4564 = vsub.f32 %v4313, %v4429
        %v4565 = vsub.f32 %v3976, %v4438
        %v4566 = vsub.f32 %v3978, %v4438
        %v4567 = vsub.f32 %v4089, %v4438
        %v4568 = vsub.f32 %v4091, %v4438
        %v4569 = vsub.f32 %v4202, %v4438
        %v4570 = vsub.f32 %v4204, %v4438
        %v4571 = vsub.f32 %v4315, %v4438
        %v4572 = vsub.f32 %v4317, %v4438
        %v4573 = vsub.f32 %v3982, %v4447
        %v4574 = vsub.f32 %v3984, %v4447
        %v4575 = vsub.f32 %v4095, %v4447
        %v4576 = vsub.f32 %v4097, %v4447
        %v4577 = vsub.f32 %v4208, %v4447
        %v4578 = vsub.f32 %v4210, %v4447
        %v4579 = vsub.f32 %v4321, %v4447
        %v4580 = vsub.f32 %v4323, %v4447
        %v4581 = vsub.f32 %v3986, %v4456
        %v4582 = vsub.f32 %v3988, %v4456
        %v4583 = vsub.f32 %v4099, %v4456
        %v4584 = vsub.f32 %v4101, %v4456
        %v4585 = vsub.f32 %v4212, %v4456
        %v4586 = vsub.f32 %v4214, %v4456
        %v4587 = vsub.f32 %v4325, %v4456
        %v4588 = vsub.f32 %v4327, %v4456
        %v4589 = vsub.f32 %v3992, %v4465
        %v4590 = vsub.f32 %v3994, %v4465
        %v4591 = vsub.f32 %v4105, %v4465
        %v4592 = vsub.f32 %v4107, %v4465
        %v4593 = vsub.f32 %v4218, %v4465
        %v4594 = vsub.f32 %v4220, %v4465
        %v4595 = vsub.f32 %v4331, %v4465
        %v4596 = vsub.f32 %v4333, %v4465
        %v4597 = vsub.f32 %v3996, %v4474
        %v4598 = vsub.f32 %v3998, %v4474
        %v4599 = vsub.f32 %v4109, %v4474
        %v4600 = vsub.f32 %v4111, %v4474
        %v4601 = vsub.f32 %v4222, %v4474
        %v4602 = vsub.f32 %v4224, %v4474
        %v4603 = vsub.f32 %v4335, %v4474
        %v4604 = vsub.f32 %v4337, %v4474
        %v4605 = vsub.f32 %v4002, %v4483
        %v4606 = vsub.f32 %v4004, %v4483
        %v4607 = vsub.f32 %v4115, %v4483
        %v4608 = vsub.f32 %v4117, %v4483
        %v4609 = vsub.f32 %v4228, %v4483
        %v4610 = vsub.f32 %v4230, %v4483
        %v4611 = vsub.f32 %v4341, %v4483
        %v4612 = vsub.f32 %v4343, %v4483
        %v4613 = vsub.f32 %v4006, %v4492
        %v4614 = vsub.f32 %v4008, %v4492
        %v4615 = vsub.f32 %v4119, %v4492
        %v4616 = vsub.f32 %v4121, %v4492
        %v4617 = vsub.f32 %v4232, %v4492
        %v4618 = vsub.f32 %v4234, %v4492
        %v4619 = vsub.f32 %v4345, %v4492
        %v4620 = vsub.f32 %v4347, %v4492
        %v4621 = vmul.f32 %v4493, 1.442695
        %v4622 = vpow.pop %v4621
        %v4623 = vmul.f32 %v4494, 1.442695
        %v4624 = vpow.pop %v4623
        %v4625 = vmul.f32 %v4495, 1.442695
        %v4626 = vpow.pop %v4625
        %v4627 = vmul.f32 %v4496, 1.442695
        %v4628 = vpow.pop %v4627
        %v4629 = vmul.f32 %v4497, 1.442695
        %v4630 = vpow.pop %v4629
        %v4631 = vmul.f32 %v4498, 1.442695
        %v4632 = vpow.pop %v4631
        %v4633 = vmul.f32 %v4499, 1.442695
        %v4634 = vpow.pop %v4633
        %v4635 = vmul.f32 %v4500, 1.442695
        %v4636 = vpow.pop %v4635
        %v4637 = vmul.f32 %v4501, 1.442695
        %v4638 = vpow.pop %v4637
        %v4639 = vmul.f32 %v4502, 1.442695
        %v4640 = vpow.pop %v4639
        %v4641 = vmul.f32 %v4503, 1.442695
        %v4642 = vpow.pop %v4641
        %v4643 = vmul.f32 %v4504, 1.442695
        %v4644 = vpow.pop %v4643
        %v4645 = vmul.f32 %v4505, 1.442695
        %v4646 = vpow.pop %v4645
        %v4647 = vmul.f32 %v4506, 1.442695
        %v4648 = vpow.pop %v4647
        %v4649 = vmul.f32 %v4507, 1.442695
        %v4650 = vpow.pop %v4649
        %v4651 = vmul.f32 %v4508, 1.442695
        %v4652 = vpow.pop %v4651
        %v4653 = vmul.f32 %v4509, 1.442695
        %v4654 = vpow.pop %v4653
        %v4655 = vmul.f32 %v4510, 1.442695
        %v4656 = vpow.pop %v4655
        %v4657 = vmul.f32 %v4511, 1.442695
        %v4658 = vpow.pop %v4657
        %v4659 = vmul.f32 %v4512, 1.442695
        %v4660 = vpow.pop %v4659
        %v4661 = vmul.f32 %v4513, 1.442695
        %v4662 = vpow.pop %v4661
        %v4663 = vmul.f32 %v4514, 1.442695
        %v4664 = vpow.pop %v4663
        %v4665 = vmul.f32 %v4515, 1.442695
        %v4666 = vpow.pop %v4665
        %v4667 = vmul.f32 %v4516, 1.442695
        %v4668 = vpow.pop %v4667
        %v4669 = vmul.f32 %v4517, 1.442695
        %v4670 = vpow.pop %v4669
        %v4671 = vmul.f32 %v4518, 1.442695
        %v4672 = vpow.pop %v4671
        %v4673 = vmul.f32 %v4519, 1.442695
        %v4674 = vpow.pop %v4673
        %v4675 = vmul.f32 %v4520, 1.442695
        %v4676 = vpow.pop %v4675
        %v4677 = vmul.f32 %v4521, 1.442695
        %v4678 = vpow.pop %v4677
        %v4679 = vmul.f32 %v4522, 1.442695
        %v4680 = vpow.pop %v4679
        %v4681 = vmul.f32 %v4523, 1.442695
        %v4682 = vpow.pop %v4681
        %v4683 = vmul.f32 %v4524, 1.442695
        %v4684 = vpow.pop %v4683
        %v4685 = vmul.f32 %v4525, 1.442695
        %v4686 = vpow.pop %v4685
        %v4687 = vmul.f32 %v4526, 1.442695
        %v4688 = vpow.pop %v4687
        %v4689 = vmul.f32 %v4527, 1.442695
        %v4690 = vpow.pop %v4689
        %v4691 = vmul.f32 %v4528, 1.442695
        %v4692 = vpow.pop %v4691
        %v4693 = vmul.f32 %v4529, 1.442695
        %v4694 = vpow.pop %v4693
        %v4695 = vmul.f32 %v4530, 1.442695
        %v4696 = vpow.pop %v4695
        %v4697 = vmul.f32 %v4531, 1.442695
        %v4698 = vpow.pop %v4697
        %v4699 = vmul.f32 %v4532, 1.442695
        %v4700 = vpow.pop %v4699
        %v4701 = vmul.f32 %v4533, 1.442695
        %v4702 = vpow.pop %v4701
        %v4703 = vmul.f32 %v4534, 1.442695
        %v4704 = vpow.pop %v4703
        %v4705 = vmul.f32 %v4535, 1.442695
        %v4706 = vpow.pop %v4705
        %v4707 = vmul.f32 %v4536, 1.442695
        %v4708 = vpow.pop %v4707
        %v4709 = vmul.f32 %v4537, 1.442695
        %v4710 = vpow.pop %v4709
        %v4711 = vmul.f32 %v4538, 1.442695
        %v4712 = vpow.pop %v4711
        %v4713 = vmul.f32 %v4539, 1.442695
        %v4714 = vpow.pop %v4713
        %v4715 = vmul.f32 %v4540, 1.442695
        %v4716 = vpow.pop %v4715
        %v4717 = vmul.f32 %v4541, 1.442695
        %v4718 = vpow.pop %v4717
        %v4719 = vmul.f32 %v4542, 1.442695
        %v4720 = vpow.pop %v4719
        %v4721 = vmul.f32 %v4543, 1.442695
        %v4722 = vpow.pop %v4721
        %v4723 = vmul.f32 %v4544, 1.442695
        %v4724 = vpow.pop %v4723
        %v4725 = vmul.f32 %v4545, 1.442695
        %v4726 = vpow.pop %v4725
        %v4727 = vmul.f32 %v4546, 1.442695
        %v4728 = vpow.pop %v4727
        %v4729 = vmul.f32 %v4547, 1.442695
        %v4730 = vpow.pop %v4729
        %v4731 = vmul.f32 %v4548, 1.442695
        %v4732 = vpow.pop %v4731
        %v4733 = vmul.f32 %v4549, 1.442695
        %v4734 = vpow.pop %v4733
        %v4735 = vmul.f32 %v4550, 1.442695
        %v4736 = vpow.pop %v4735
        %v4737 = vmul.f32 %v4551, 1.442695
        %v4738 = vpow.pop %v4737
        %v4739 = vmul.f32 %v4552, 1.442695
        %v4740 = vpow.pop %v4739
        %v4741 = vmul.f32 %v4553, 1.442695
        %v4742 = vpow.pop %v4741
        %v4743 = vmul.f32 %v4554, 1.442695
        %v4744 = vpow.pop %v4743
        %v4745 = vmul.f32 %v4555, 1.442695
        %v4746 = vpow.pop %v4745
        %v4747 = vmul.f32 %v4556, 1.442695
        %v4748 = vpow.pop %v4747
        %v4749 = vmul.f32 %v4557, 1.442695
        %v4750 = vpow.pop %v4749
        %v4751 = vmul.f32 %v4558, 1.442695
        %v4752 = vpow.pop %v4751
        %v4753 = vmul.f32 %v4559, 1.442695
        %v4754 = vpow.pop %v4753
        %v4755 = vmul.f32 %v4560, 1.442695
        %v4756 = vpow.pop %v4755
        %v4757 = vmul.f32 %v4561, 1.442695
        %v4758 = vpow.pop %v4757
        %v4759 = vmul.f32 %v4562, 1.442695
        %v4760 = vpow.pop %v4759
        %v4761 = vmul.f32 %v4563, 1.442695
        %v4762 = vpow.pop %v4761
        %v4763 = vmul.f32 %v4564, 1.442695
        %v4764 = vpow.pop %v4763
        %v4765 = vmul.f32 %v4565, 1.442695
        %v4766 = vpow.pop %v4765
        %v4767 = vmul.f32 %v4566, 1.442695
        %v4768 = vpow.pop %v4767
        %v4769 = vmul.f32 %v4567, 1.442695
        %v4770 = vpow.pop %v4769
        %v4771 = vmul.f32 %v4568, 1.442695
        %v4772 = vpow.pop %v4771
        %v4773 = vmul.f32 %v4569, 1.442695
        %v4774 = vpow.pop %v4773
        %v4775 = vmul.f32 %v4570, 1.442695
        %v4776 = vpow.pop %v4775
        %v4777 = vmul.f32 %v4571, 1.442695
        %v4778 = vpow.pop %v4777
        %v4779 = vmul.f32 %v4572, 1.442695
        %v4780 = vpow.pop %v4779
        %v4781 = vmul.f32 %v4573, 1.442695
        %v4782 = vpow.pop %v4781
        %v4783 = vmul.f32 %v4574, 1.442695
        %v4784 = vpow.pop %v4783
        %v4785 = vmul.f32 %v4575, 1.442695
        %v4786 = vpow.pop %v4785
        %v4787 = vmul.f32 %v4576, 1.442695
        %v4788 = vpow.pop %v4787
        %v4789 = vmul.f32 %v4577, 1.442695
        %v4790 = vpow.pop %v4789
        %v4791 = vmul.f32 %v4578, 1.442695
        %v4792 = vpow.pop %v4791
        %v4793 = vmul.f32 %v4579, 1.442695
        %v4794 = vpow.pop %v4793
        %v4795 = vmul.f32 %v4580, 1.442695
        %v4796 = vpow.pop %v4795
        %v4797 = vmul.f32 %v4581, 1.442695
        %v4798 = vpow.pop %v4797
        %v4799 = vmul.f32 %v4582, 1.442695
        %v4800 = vpow.pop %v4799
        %v4801 = vmul.f32 %v4583, 1.442695
        %v4802 = vpow.pop %v4801
        %v4803 = vmul.f32 %v4584, 1.442695
        %v4804 = vpow.pop %v4803
        %v4805 = vmul.f32 %v4585, 1.442695
        %v4806 = vpow.pop %v4805
        %v4807 = vmul.f32 %v4586, 1.442695
        %v4808 = vpow.pop %v4807
        %v4809 = vmul.f32 %v4587, 1.442695
        %v4810 = vpow.pop %v4809
        %v4811 = vmul.f32 %v4588, 1.442695
        %v4812 = vpow.pop %v4811
        %v4813 = vmul.f32 %v4589, 1.442695
        %v4814 = vpow.pop %v4813
        %v4815 = vmul.f32 %v4590, 1.442695
        %v4816 = vpow.pop %v4815
        %v4817 = vmul.f32 %v4591, 1.442695
        %v4818 = vpow.pop %v4817
        %v4819 = vmul.f32 %v4592, 1.442695
        %v4820 = vpow.pop %v4819
        %v4821 = vmul.f32 %v4593, 1.442695
        %v4822 = vpow.pop %v4821
        %v4823 = vmul.f32 %v4594, 1.442695
        %v4824 = vpow.pop %v4823
        %v4825 = vmul.f32 %v4595, 1.442695
        %v4826 = vpow.pop %v4825
        %v4827 = vmul.f32 %v4596, 1.442695
        %v4828 = vpow.pop %v4827
        %v4829 = vmul.f32 %v4597, 1.442695
        %v4830 = vpow.pop %v4829
        %v4831 = vmul.f32 %v4598, 1.442695
        %v4832 = vpow.pop %v4831
        %v4833 = vmul.f32 %v4599, 1.442695
        %v4834 = vpow.pop %v4833
        %v4835 = vmul.f32 %v4600, 1.442695
        %v4836 = vpow.pop %v4835
        %v4837 = vmul.f32 %v4601, 1.442695
        %v4838 = vpow.pop %v4837
        %v4839 = vmul.f32 %v4602, 1.442695
        %v4840 = vpow.pop %v4839
        %v4841 = vmul.f32 %v4603, 1.442695
        %v4842 = vpow.pop %v4841
        %v4843 = vmul.f32 %v4604, 1.442695
        %v4844 = vpow.pop %v4843
        %v4845 = vmul.f32 %v4605, 1.442695
        %v4846 = vpow.pop %v4845
        %v4847 = vmul.f32 %v4606, 1.442695
        %v4848 = vpow.pop %v4847
        %v4849 = vmul.f32 %v4607, 1.442695
        %v4850 = vpow.pop %v4849
        %v4851 = vmul.f32 %v4608, 1.442695
        %v4852 = vpow.pop %v4851
        %v4853 = vmul.f32 %v4609, 1.442695
        %v4854 = vpow.pop %v4853
        %v4855 = vmul.f32 %v4610, 1.442695
        %v4856 = vpow.pop %v4855
        %v4857 = vmul.f32 %v4611, 1.442695
        %v4858 = vpow.pop %v4857
        %v4859 = vmul.f32 %v4612, 1.442695
        %v4860 = vpow.pop %v4859
        %v4861 = vmul.f32 %v4613, 1.442695
        %v4862 = vpow.pop %v4861
        %v4863 = vmul.f32 %v4614, 1.442695
        %v4864 = vpow.pop %v4863
        %v4865 = vmul.f32 %v4615, 1.442695
        %v4866 = vpow.pop %v4865
        %v4867 = vmul.f32 %v4616, 1.442695
        %v4868 = vpow.pop %v4867
        %v4869 = vmul.f32 %v4617, 1.442695
        %v4870 = vpow.pop %v4869
        %v4871 = vmul.f32 %v4618, 1.442695
        %v4872 = vpow.pop %v4871
        %v4873 = vmul.f32 %v4619, 1.442695
        %v4874 = vpow.pop %v4873
        %v4875 = vmul.f32 %v4620, 1.442695
        %v4876 = vpow.pop %v4875
        %v4877 = vadd.f32 %v4622, %v4624
        %v4878 = vadd.f32 %v4877, %v4626
        %v4879 = vadd.f32 %v4878, %v4628
        %v4880 = vadd.f32 %v4879, %v4630
        %v4881 = vadd.f32 %v4880, %v4632
        %v4882 = vadd.f32 %v4881, %v4634
        %v4883 = vadd.f32 %v4882, %v4636
        %4884 = vadd.xlane.f32.xlu0 %v4883
        %v4885 = vpop.xlane.xlu0 %4884
        %v4886 = vadd.f32 %v4638, %v4640
        %v4887 = vadd.f32 %v4886, %v4642
        %v4888 = vadd.f32 %v4887, %v4644
        %v4889 = vadd.f32 %v4888, %v4646
        %v4890 = vadd.f32 %v4889, %v4648
        %v4891 = vadd.f32 %v4890, %v4650
        %v4892 = vadd.f32 %v4891, %v4652
        %4893 = vadd.xlane.f32.xlu0 %v4892
        %v4894 = vpop.xlane.xlu0 %4893
        %v4895 = vadd.f32 %v4654, %v4656
        %v4896 = vadd.f32 %v4895, %v4658
        %v4897 = vadd.f32 %v4896, %v4660
        %v4898 = vadd.f32 %v4897, %v4662
        %v4899 = vadd.f32 %v4898, %v4664
        %v4900 = vadd.f32 %v4899, %v4666
        %v4901 = vadd.f32 %v4900, %v4668
        %4902 = vadd.xlane.f32.xlu0 %v4901
        %v4903 = vpop.xlane.xlu0 %4902
        %v4904 = vadd.f32 %v4670, %v4672
        %v4905 = vadd.f32 %v4904, %v4674
        %v4906 = vadd.f32 %v4905, %v4676
        %v4907 = vadd.f32 %v4906, %v4678
        %v4908 = vadd.f32 %v4907, %v4680
        %v4909 = vadd.f32 %v4908, %v4682
        %v4910 = vadd.f32 %v4909, %v4684
        %4911 = vadd.xlane.f32.xlu0 %v4910
        %v4912 = vpop.xlane.xlu0 %4911
        %v4913 = vadd.f32 %v4686, %v4688
        %v4914 = vadd.f32 %v4913, %v4690
        %v4915 = vadd.f32 %v4914, %v4692
        %v4916 = vadd.f32 %v4915, %v4694
        %v4917 = vadd.f32 %v4916, %v4696
        %v4918 = vadd.f32 %v4917, %v4698
        %v4919 = vadd.f32 %v4918, %v4700
        %4920 = vadd.xlane.f32.xlu0 %v4919
        %v4921 = vpop.xlane.xlu0 %4920
        %v4922 = vadd.f32 %v4702, %v4704
        %v4923 = vadd.f32 %v4922, %v4706
        %v4924 = vadd.f32 %v4923, %v4708
        %v4925 = vadd.f32 %v4924, %v4710
        %v4926 = vadd.f32 %v4925, %v4712
        %v4927 = vadd.f32 %v4926, %v4714
        %v4928 = vadd.f32 %v4927, %v4716
        %4929 = vadd.xlane.f32.xlu0 %v4928
        %v4930 = vpop.xlane.xlu0 %4929
        %v4931 = vadd.f32 %v4718, %v4720
        %v4932 = vadd.f32 %v4931, %v4722
        %v4933 = vadd.f32 %v4932, %v4724
        %v4934 = vadd.f32 %v4933, %v4726
        %v4935 = vadd.f32 %v4934, %v4728
        %v4936 = vadd.f32 %v4935, %v4730
        %v4937 = vadd.f32 %v4936, %v4732
        %4938 = vadd.xlane.f32.xlu0 %v4937
        %v4939 = vpop.xlane.xlu0 %4938
        %v4940 = vadd.f32 %v4734, %v4736
        %v4941 = vadd.f32 %v4940, %v4738
        %v4942 = vadd.f32 %v4941, %v4740
        %v4943 = vadd.f32 %v4942, %v4742
        %v4944 = vadd.f32 %v4943, %v4744
        %v4945 = vadd.f32 %v4944, %v4746
        %v4946 = vadd.f32 %v4945, %v4748
        %4947 = vadd.xlane.f32.xlu0 %v4946
        %v4948 = vpop.xlane.xlu0 %4947
        %v4949 = vadd.f32 %v4750, %v4752
        %v4950 = vadd.f32 %v4949, %v4754
        %v4951 = vadd.f32 %v4950, %v4756
        %v4952 = vadd.f32 %v4951, %v4758
        %v4953 = vadd.f32 %v4952, %v4760
        %v4954 = vadd.f32 %v4953, %v4762
        %v4955 = vadd.f32 %v4954, %v4764
        %4956 = vadd.xlane.f32.xlu0 %v4955
        %v4957 = vpop.xlane.xlu0 %4956
        %v4958 = vadd.f32 %v4766, %v4768
        %v4959 = vadd.f32 %v4958, %v4770
        %v4960 = vadd.f32 %v4959, %v4772
        %v4961 = vadd.f32 %v4960, %v4774
        %v4962 = vadd.f32 %v4961, %v4776
        %v4963 = vadd.f32 %v4962, %v4778
        %v4964 = vadd.f32 %v4963, %v4780
        %4965 = vadd.xlane.f32.xlu0 %v4964
        %v4966 = vpop.xlane.xlu0 %4965
        %v4967 = vadd.f32 %v4782, %v4784
        %v4968 = vadd.f32 %v4967, %v4786
        %v4969 = vadd.f32 %v4968, %v4788
        %v4970 = vadd.f32 %v4969, %v4790
        %v4971 = vadd.f32 %v4970, %v4792
        %v4972 = vadd.f32 %v4971, %v4794
        %v4973 = vadd.f32 %v4972, %v4796
        %4974 = vadd.xlane.f32.xlu0 %v4973
        %v4975 = vpop.xlane.xlu0 %4974
        %v4976 = vadd.f32 %v4798, %v4800
        %v4977 = vadd.f32 %v4976, %v4802
        %v4978 = vadd.f32 %v4977, %v4804
        %v4979 = vadd.f32 %v4978, %v4806
        %v4980 = vadd.f32 %v4979, %v4808
        %v4981 = vadd.f32 %v4980, %v4810
        %v4982 = vadd.f32 %v4981, %v4812
        %4983 = vadd.xlane.f32.xlu0 %v4982
        %v4984 = vpop.xlane.xlu0 %4983
        %v4985 = vadd.f32 %v4814, %v4816
        %v4986 = vadd.f32 %v4985, %v4818
        %v4987 = vadd.f32 %v4986, %v4820
        %v4988 = vadd.f32 %v4987, %v4822
        %v4989 = vadd.f32 %v4988, %v4824
        %v4990 = vadd.f32 %v4989, %v4826
        %v4991 = vadd.f32 %v4990, %v4828
        %4992 = vadd.xlane.f32.xlu0 %v4991
        %v4993 = vpop.xlane.xlu0 %4992
        %v4994 = vadd.f32 %v4830, %v4832
        %v4995 = vadd.f32 %v4994, %v4834
        %v4996 = vadd.f32 %v4995, %v4836
        %v4997 = vadd.f32 %v4996, %v4838
        %v4998 = vadd.f32 %v4997, %v4840
        %v4999 = vadd.f32 %v4998, %v4842
        %v5000 = vadd.f32 %v4999, %v4844
        %5001 = vadd.xlane.f32.xlu0 %v5000
        %v5002 = vpop.xlane.xlu0 %5001
        %v5003 = vadd.f32 %v4846, %v4848
        %v5004 = vadd.f32 %v5003, %v4850
        %v5005 = vadd.f32 %v5004, %v4852
        %v5006 = vadd.f32 %v5005, %v4854
        %v5007 = vadd.f32 %v5006, %v4856
        %v5008 = vadd.f32 %v5007, %v4858
        %v5009 = vadd.f32 %v5008, %v4860
        %5010 = vadd.xlane.f32.xlu0 %v5009
        %v5011 = vpop.xlane.xlu0 %5010
        %v5012 = vadd.f32 %v4862, %v4864
        %v5013 = vadd.f32 %v5012, %v4866
        %v5014 = vadd.f32 %v5013, %v4868
        %v5015 = vadd.f32 %v5014, %v4870
        %v5016 = vadd.f32 %v5015, %v4872
        %v5017 = vadd.f32 %v5016, %v4874
        %v5018 = vadd.f32 %v5017, %v4876
        %5019 = vadd.xlane.f32.xlu0 %v5018
        %v5020 = vpop.xlane.xlu0 %5019
        %v5021 = vlog2.pop %v4885
        %v5022 = vmul.f32 %v5021, 0.6931472
        %v5023 = vlog2.pop %v4894
        %v5024 = vmul.f32 %v5023, 0.6931472
        %v5025 = vlog2.pop %v4903
        %v5026 = vmul.f32 %v5025, 0.6931472
        %v5027 = vlog2.pop %v4912
        %v5028 = vmul.f32 %v5027, 0.6931472
        %v5029 = vlog2.pop %v4921
        %v5030 = vmul.f32 %v5029, 0.6931472
        %v5031 = vlog2.pop %v4930
        %v5032 = vmul.f32 %v5031, 0.6931472
        %v5033 = vlog2.pop %v4939
        %v5034 = vmul.f32 %v5033, 0.6931472
        %v5035 = vlog2.pop %v4948
        %v5036 = vmul.f32 %v5035, 0.6931472
        %v5037 = vlog2.pop %v4957
        %v5038 = vmul.f32 %v5037, 0.6931472
        %v5039 = vlog2.pop %v4966
        %v5040 = vmul.f32 %v5039, 0.6931472
        %v5041 = vlog2.pop %v4975
        %v5042 = vmul.f32 %v5041, 0.6931472
        %v5043 = vlog2.pop %v4984
        %v5044 = vmul.f32 %v5043, 0.6931472
        %v5045 = vlog2.pop %v4993
        %v5046 = vmul.f32 %v5045, 0.6931472
        %v5047 = vlog2.pop %v5002
        %v5048 = vmul.f32 %v5047, 0.6931472
        %v5049 = vlog2.pop %v5011
        %v5050 = vmul.f32 %v5049, 0.6931472
        %v5051 = vlog2.pop %v5020
        %v5052 = vmul.f32 %v5051, 0.6931472
        %v5053 = vsub.f32 %v4493, %v5022
        %v5054 = vsub.f32 %v4494, %v5022
        %v5055 = vsub.f32 %v4495, %v5022
        %v5056 = vsub.f32 %v4496, %v5022
        %v5057 = vsub.f32 %v4497, %v5022
        %v5058 = vsub.f32 %v4498, %v5022
        %v5059 = vsub.f32 %v4499, %v5022
        %v5060 = vsub.f32 %v4500, %v5022
        %v5061 = vsub.f32 %v4501, %v5024
        %v5062 = vsub.f32 %v4502, %v5024
        %v5063 = vsub.f32 %v4503, %v5024
        %v5064 = vsub.f32 %v4504, %v5024
        %v5065 = vsub.f32 %v4505, %v5024
        %v5066 = vsub.f32 %v4506, %v5024
        %v5067 = vsub.f32 %v4507, %v5024
        %v5068 = vsub.f32 %v4508, %v5024
        %v5069 = vsub.f32 %v4509, %v5026
        %v5070 = vsub.f32 %v4510, %v5026
        %v5071 = vsub.f32 %v4511, %v5026
        %v5072 = vsub.f32 %v4512, %v5026
        %v5073 = vsub.f32 %v4513, %v5026
        %v5074 = vsub.f32 %v4514, %v5026
        %v5075 = vsub.f32 %v4515, %v5026
        %v5076 = vsub.f32 %v4516, %v5026
        %v5077 = vsub.f32 %v4517, %v5028
        %v5078 = vsub.f32 %v4518, %v5028
        %v5079 = vsub.f32 %v4519, %v5028
        %v5080 = vsub.f32 %v4520, %v5028
        %v5081 = vsub.f32 %v4521, %v5028
        %v5082 = vsub.f32 %v4522, %v5028
        %v5083 = vsub.f32 %v4523, %v5028
        %v5084 = vsub.f32 %v4524, %v5028
        %v5085 = vsub.f32 %v4525, %v5030
        %v5086 = vsub.f32 %v4526, %v5030
        %v5087 = vsub.f32 %v4527, %v5030
        %v5088 = vsub.f32 %v4528, %v5030
        %v5089 = vsub.f32 %v4529, %v5030
        %v5090 = vsub.f32 %v4530, %v5030
        %v5091 = vsub.f32 %v4531, %v5030
        %v5092 = vsub.f32 %v4532, %v5030
        %v5093 = vsub.f32 %v4533, %v5032
        %v5094 = vsub.f32 %v4534, %v5032
        %v5095 = vsub.f32 %v4535, %v5032
        %v5096 = vsub.f32 %v4536, %v5032
        %v5097 = vsub.f32 %v4537, %v5032
        %v5098 = vsub.f32 %v4538, %v5032
        %v5099 = vsub.f32 %v4539, %v5032
        %v5100 = vsub.f32 %v4540, %v5032
        %v5101 = vsub.f32 %v4541, %v5034
        %v5102 = vsub.f32 %v4542, %v5034
        %v5103 = vsub.f32 %v4543, %v5034
        %v5104 = vsub.f32 %v4544, %v5034
        %v5105 = vsub.f32 %v4545, %v5034
        %v5106 = vsub.f32 %v4546, %v5034
        %v5107 = vsub.f32 %v4547, %v5034
        %v5108 = vsub.f32 %v4548, %v5034
        %v5109 = vsub.f32 %v4549, %v5036
        %v5110 = vsub.f32 %v4550, %v5036
        %v5111 = vsub.f32 %v4551, %v5036
        %v5112 = vsub.f32 %v4552, %v5036
        %v5113 = vsub.f32 %v4553, %v5036
        %v5114 = vsub.f32 %v4554, %v5036
        %v5115 = vsub.f32 %v4555, %v5036
        %v5116 = vsub.f32 %v4556, %v5036
        %v5117 = vsub.f32 %v4557, %v5038
        %v5118 = vsub.f32 %v4558, %v5038
        %v5119 = vsub.f32 %v4559, %v5038
        %v5120 = vsub.f32 %v4560, %v5038
        %v5121 = vsub.f32 %v4561, %v5038
        %v5122 = vsub.f32 %v4562, %v5038
        %v5123 = vsub.f32 %v4563, %v5038
        %v5124 = vsub.f32 %v4564, %v5038
        %v5125 = vsub.f32 %v4565, %v5040
        %v5126 = vsub.f32 %v4566, %v5040
        %v5127 = vsub.f32 %v4567, %v5040
        %v5128 = vsub.f32 %v4568, %v5040
        %v5129 = vsub.f32 %v4569, %v5040
        %v5130 = vsub.f32 %v4570, %v5040
        %v5131 = vsub.f32 %v4571, %v5040
        %v5132 = vsub.f32 %v4572, %v5040
        %v5133 = vsub.f32 %v4573, %v5042
        %v5134 = vsub.f32 %v4574, %v5042
        %v5135 = vsub.f32 %v4575, %v5042
        %v5136 = vsub.f32 %v4576, %v5042
        %v5137 = vsub.f32 %v4577, %v5042
        %v5138 = vsub.f32 %v4578, %v5042
        %v5139 = vsub.f32 %v4579, %v5042
        %v5140 = vsub.f32 %v4580, %v5042
        %v5141 = vsub.f32 %v4581, %v5044
        %v5142 = vsub.f32 %v4582, %v5044
        %v5143 = vsub.f32 %v4583, %v5044
        %v5144 = vsub.f32 %v4584, %v5044
        %v5145 = vsub.f32 %v4585, %v5044
        %v5146 = vsub.f32 %v4586, %v5044
        %v5147 = vsub.f32 %v4587, %v5044
        %v5148 = vsub.f32 %v4588, %v5044
        %v5149 = vsub.f32 %v4589, %v5046
        %v5150 = vsub.f32 %v4590, %v5046
        %v5151 = vsub.f32 %v4591, %v5046
        %v5152 = vsub.f32 %v4592, %v5046
        %v5153 = vsub.f32 %v4593, %v5046
        %v5154 = vsub.f32 %v4594, %v5046
        %v5155 = vsub.f32 %v4595, %v5046
        %v5156 = vsub.f32 %v4596, %v5046
        %v5157 = vsub.f32 %v4597, %v5048
        %v5158 = vsub.f32 %v4598, %v5048
        %v5159 = vsub.f32 %v4599, %v5048
        %v5160 = vsub.f32 %v4600, %v5048
        %v5161 = vsub.f32 %v4601, %v5048
        %v5162 = vsub.f32 %v4602, %v5048
        %v5163 = vsub.f32 %v4603, %v5048
        %v5164 = vsub.f32 %v4604, %v5048
        %v5165 = vsub.f32 %v4605, %v5050
        %v5166 = vsub.f32 %v4606, %v5050
        %v5167 = vsub.f32 %v4607, %v5050
        %v5168 = vsub.f32 %v4608, %v5050
        %v5169 = vsub.f32 %v4609, %v5050
        %v5170 = vsub.f32 %v4610, %v5050
        %v5171 = vsub.f32 %v4611, %v5050
        %v5172 = vsub.f32 %v4612, %v5050
        %v5173 = vsub.f32 %v4613, %v5052
        %v5174 = vsub.f32 %v4614, %v5052
        %v5175 = vsub.f32 %v4615, %v5052
        %v5176 = vsub.f32 %v4616, %v5052
        %v5177 = vsub.f32 %v4617, %v5052
        %v5178 = vsub.f32 %v4618, %v5052
        %v5179 = vsub.f32 %v4619, %v5052
        %v5180 = vsub.f32 %v4620, %v5052
        %5181 = vst [vmem:[%s231] sm:$0xff] %v5053
        %5182 = vst [vmem:[%s231 + $0x8] sm:$0xff] %v5054
        %5183 = vst [vmem:[%s231 + $0x10] sm:$0xff] %v5055
        %5184 = vst [vmem:[%s231 + $0x18] sm:$0xff] %v5056
        %5185 = vst [vmem:[%s231 + $0x20] sm:$0xff] %v5057
        %5186 = vst [vmem:[%s231 + $0x28] sm:$0xff] %v5058
        %5187 = vst [vmem:[%s231 + $0x30] sm:$0xff] %v5059
        %5188 = vst [vmem:[%s231 + $0x38] sm:$0xff] %v5060
        %5189 = vst [vmem:[%s231 + $0x40] sm:$0xff] %v5061
        %5190 = vst [vmem:[%s231 + $0x48] sm:$0xff] %v5062
        %5191 = vst [vmem:[%s231 + $0x50] sm:$0xff] %v5063
        %5192 = vst [vmem:[%s231 + $0x58] sm:$0xff] %v5064
        %5193 = vst [vmem:[%s231 + $0x60] sm:$0xff] %v5065
        %5194 = vst [vmem:[%s231 + $0x68] sm:$0xff] %v5066
        %5195 = vst [vmem:[%s231 + $0x70] sm:$0xff] %v5067
        %5196 = vst [vmem:[%s231 + $0x78] sm:$0xff] %v5068
        %5197 = vst [vmem:[%s231 + $0x80] sm:$0xff] %v5069
        %5198 = vst [vmem:[%s231 + $0x88] sm:$0xff] %v5070
        %5199 = vst [vmem:[%s231 + $0x90] sm:$0xff] %v5071
        %5200 = vst [vmem:[%s231 + $0x98] sm:$0xff] %v5072
        %5201 = vst [vmem:[%s231 + $0xa0] sm:$0xff] %v5073
        %5202 = vst [vmem:[%s231 + $0xa8] sm:$0xff] %v5074
        %5203 = vst [vmem:[%s231 + $0xb0] sm:$0xff] %v5075
        %5204 = vst [vmem:[%s231 + $0xb8] sm:$0xff] %v5076
        %5205 = vst [vmem:[%s231 + $0xc0] sm:$0xff] %v5077
        %5206 = vst [vmem:[%s231 + $0xc8] sm:$0xff] %v5078
        %5207 = vst [vmem:[%s231 + $0xd0] sm:$0xff] %v5079
        %5208 = vst [vmem:[%s231 + $0xd8] sm:$0xff] %v5080
        %5209 = vst [vmem:[%s231 + $0xe0] sm:$0xff] %v5081
        %5210 = vst [vmem:[%s231 + $0xe8] sm:$0xff] %v5082
        %5211 = vst [vmem:[%s231 + $0xf0] sm:$0xff] %v5083
        %5212 = vst [vmem:[%s231 + $0xf8] sm:$0xff] %v5084
        %5213 = vst [vmem:[%s231 + $0x100] sm:$0xff] %v5085
        %5214 = vst [vmem:[%s231 + $0x108] sm:$0xff] %v5086
        %5215 = vst [vmem:[%s231 + $0x110] sm:$0xff] %v5087
        %5216 = vst [vmem:[%s231 + $0x118] sm:$0xff] %v5088
        %5217 = vst [vmem:[%s231 + $0x120] sm:$0xff] %v5089
        %5218 = vst [vmem:[%s231 + $0x128] sm:$0xff] %v5090
        %5219 = vst [vmem:[%s231 + $0x130] sm:$0xff] %v5091
        %5220 = vst [vmem:[%s231 + $0x138] sm:$0xff] %v5092
        %5221 = vst [vmem:[%s231 + $0x140] sm:$0xff] %v5093
        %5222 = vst [vmem:[%s231 + $0x148] sm:$0xff] %v5094
        %5223 = vst [vmem:[%s231 + $0x150] sm:$0xff] %v5095
        %5224 = vst [vmem:[%s231 + $0x158] sm:$0xff] %v5096
        %5225 = vst [vmem:[%s231 + $0x160] sm:$0xff] %v5097
        %5226 = vst [vmem:[%s231 + $0x168] sm:$0xff] %v5098
        %5227 = vst [vmem:[%s231 + $0x170] sm:$0xff] %v5099
        %5228 = vst [vmem:[%s231 + $0x178] sm:$0xff] %v5100
        %5229 = vst [vmem:[%s231 + $0x180] sm:$0xff] %v5101
        %5230 = vst [vmem:[%s231 + $0x188] sm:$0xff] %v5102
        %5231 = vst [vmem:[%s231 + $0x190] sm:$0xff] %v5103
        %5232 = vst [vmem:[%s231 + $0x198] sm:$0xff] %v5104
        %5233 = vst [vmem:[%s231 + $0x1a0] sm:$0xff] %v5105
        %5234 = vst [vmem:[%s231 + $0x1a8] sm:$0xff] %v5106
        %5235 = vst [vmem:[%s231 + $0x1b0] sm:$0xff] %v5107
        %5236 = vst [vmem:[%s231 + $0x1b8] sm:$0xff] %v5108
        %5237 = vst [vmem:[%s231 + $0x1c0] sm:$0xff] %v5109
        %5238 = vst [vmem:[%s231 + $0x1c8] sm:$0xff] %v5110
        %5239 = vst [vmem:[%s231 + $0x1d0] sm:$0xff] %v5111
        %5240 = vst [vmem:[%s231 + $0x1d8] sm:$0xff] %v5112
        %5241 = vst [vmem:[%s231 + $0x1e0] sm:$0xff] %v5113
        %5242 = vst [vmem:[%s231 + $0x1e8] sm:$0xff] %v5114
        %5243 = vst [vmem:[%s231 + $0x1f0] sm:$0xff] %v5115
        %5244 = vst [vmem:[%s231 + $0x1f8] sm:$0xff] %v5116
        %5245 = vst [vmem:[%s231 + $0x200] sm:$0xff] %v5117
        %5246 = vst [vmem:[%s231 + $0x208] sm:$0xff] %v5118
        %5247 = vst [vmem:[%s231 + $0x210] sm:$0xff] %v5119
        %5248 = vst [vmem:[%s231 + $0x218] sm:$0xff] %v5120
        %5249 = vst [vmem:[%s231 + $0x220] sm:$0xff] %v5121
        %5250 = vst [vmem:[%s231 + $0x228] sm:$0xff] %v5122
        %5251 = vst [vmem:[%s231 + $0x230] sm:$0xff] %v5123
        %5252 = vst [vmem:[%s231 + $0x238] sm:$0xff] %v5124
        %5253 = vst [vmem:[%s231 + $0x240] sm:$0xff] %v5125
        %5254 = vst [vmem:[%s231 + $0x248] sm:$0xff] %v5126
        %5255 = vst [vmem:[%s231 + $0x250] sm:$0xff] %v5127
        %5256 = vst [vmem:[%s231 + $0x258] sm:$0xff] %v5128
        %5257 = vst [vmem:[%s231 + $0x260] sm:$0xff] %v5129
        %5258 = vst [vmem:[%s231 + $0x268] sm:$0xff] %v5130
        %5259 = vst [vmem:[%s231 + $0x270] sm:$0xff] %v5131
        %5260 = vst [vmem:[%s231 + $0x278] sm:$0xff] %v5132
        %5261 = vst [vmem:[%s231 + $0x280] sm:$0xff] %v5133
        %5262 = vst [vmem:[%s231 + $0x288] sm:$0xff] %v5134
        %5263 = vst [vmem:[%s231 + $0x290] sm:$0xff] %v5135
        %5264 = vst [vmem:[%s231 + $0x298] sm:$0xff] %v5136
        %5265 = vst [vmem:[%s231 + $0x2a0] sm:$0xff] %v5137
        %5266 = vst [vmem:[%s231 + $0x2a8] sm:$0xff] %v5138
        %5267 = vst [vmem:[%s231 + $0x2b0] sm:$0xff] %v5139
        %5268 = vst [vmem:[%s231 + $0x2b8] sm:$0xff] %v5140
        %5269 = vst [vmem:[%s231 + $0x2c0] sm:$0xff] %v5141
        %5270 = vst [vmem:[%s231 + $0x2c8] sm:$0xff] %v5142
        %5271 = vst [vmem:[%s231 + $0x2d0] sm:$0xff] %v5143
        %5272 = vst [vmem:[%s231 + $0x2d8] sm:$0xff] %v5144
        %5273 = vst [vmem:[%s231 + $0x2e0] sm:$0xff] %v5145
        %5274 = vst [vmem:[%s231 + $0x2e8] sm:$0xff] %v5146
        %5275 = vst [vmem:[%s231 + $0x2f0] sm:$0xff] %v5147
        %5276 = vst [vmem:[%s231 + $0x2f8] sm:$0xff] %v5148
        %5277 = vst [vmem:[%s231 + $0x300] sm:$0xff] %v5149
        %5278 = vst [vmem:[%s231 + $0x308] sm:$0xff] %v5150
        %5279 = vst [vmem:[%s231 + $0x310] sm:$0xff] %v5151
        %5280 = vst [vmem:[%s231 + $0x318] sm:$0xff] %v5152
        %5281 = vst [vmem:[%s231 + $0x320] sm:$0xff] %v5153
        %5282 = vst [vmem:[%s231 + $0x328] sm:$0xff] %v5154
        %5283 = vst [vmem:[%s231 + $0x330] sm:$0xff] %v5155
        %5284 = vst [vmem:[%s231 + $0x338] sm:$0xff] %v5156
        %5285 = vst [vmem:[%s231 + $0x340] sm:$0xff] %v5157
        %5286 = vst [vmem:[%s231 + $0x348] sm:$0xff] %v5158
        %5287 = vst [vmem:[%s231 + $0x350] sm:$0xff] %v5159
        %5288 = vst [vmem:[%s231 + $0x358] sm:$0xff] %v5160
        %5289 = vst [vmem:[%s231 + $0x360] sm:$0xff] %v5161
        %5290 = vst [vmem:[%s231 + $0x368] sm:$0xff] %v5162
        %5291 = vst [vmem:[%s231 + $0x370] sm:$0xff] %v5163
        %5292 = vst [vmem:[%s231 + $0x378] sm:$0xff] %v5164
        %5293 = vst [vmem:[%s231 + $0x380] sm:$0xff] %v5165
        %5294 = vst [vmem:[%s231 + $0x388] sm:$0xff] %v5166
        %5295 = vst [vmem:[%s231 + $0x390] sm:$0xff] %v5167
        %5296 = vst [vmem:[%s231 + $0x398] sm:$0xff] %v5168
        %5297 = vst [vmem:[%s231 + $0x3a0] sm:$0xff] %v5169
        %5298 = vst [vmem:[%s231 + $0x3a8] sm:$0xff] %v5170
        %5299 = vst [vmem:[%s231 + $0x3b0] sm:$0xff] %v5171
        %5300 = vst [vmem:[%s231 + $0x3b8] sm:$0xff] %v5172
        %5301 = vst [vmem:[%s231 + $0x3c0] sm:$0xff] %v5173
        %5302 = vst [vmem:[%s231 + $0x3c8] sm:$0xff] %v5174
        %5303 = vst [vmem:[%s231 + $0x3d0] sm:$0xff] %v5175
        %5304 = vst [vmem:[%s231 + $0x3d8] sm:$0xff] %v5176
        %5305 = vst [vmem:[%s231 + $0x3e0] sm:$0xff] %v5177
        %5306 = vst [vmem:[%s231 + $0x3e8] sm:$0xff] %v5178
        %5307 = vst [vmem:[%s231 + $0x3f0] sm:$0xff] %v5179
        %5308 = vst [vmem:[%s231 + $0x3f8] sm:$0xff] %v5180
        %s5309 = smul.u32 16, %s17
        %p5310 = scmp.lt.s32.totalorder %s5309, 31
        %s5311 = scalar_select %p5310, %s5309, 31
        %s5312 = smul.addr %s5311, 8
        %s5313 = smul.addr %s5312, 8
        %s5314 = scalar_lea.vmem %s4, %s5313
        // Predicated region
        $region45: #{cbow_forward_prepared.1} parent=35 // pred_check
          %p5315 = pneg %p124
        $region46: #{cbow_forward_prepared.1} parent=35 // pred_check_branch
          %5317 = sbr.rel (%p5315) target = $region48
        $region47: #{cbow_forward_prepared.1} parent=35 // pred_region
          %s5318 = smul.u32 16, %s17
        $region48: #{cbow_forward_prepared.1} parent=35 // pred_fallthru
          _
      $region36: #{cbow_forward_prepared.1} parent=5 // pred_fallthru
        _
      %p5319 = scmp.le.s32.totalorder 2, %s12
      // Predicated region
      $region49: #{cbow_forward_prepared.1} parent=5 // pred_check
        %p5320 = pneg %p5319
      $region50: #{cbow_forward_prepared.1} parent=5 // pred_check_branch
        %5322 = sbr.rel (%p5320) target = $region52
      $region51: #{cbow_forward_prepared.1} parent=5 // pred_region
        %s5323 = ssub.s32 %s12, 2
        // Predicated region
        $region53: #{cbow_forward_prepared.1} parent=51 // pred_check
          %p5324 = pneg %p130
        $region54: #{cbow_forward_prepared.1} parent=51 // pred_check_branch
          %5326 = sbr.rel (%p5324) target = $region56
        $region55: #{cbow_forward_prepared.1} parent=51 // pred_region
          %s5327 = smul.u32 16, %s18
          %p5328 = scmp.lt.s32.totalorder %s5327, 31
          %s5329 = scalar_select %p5328, %s5327, 31
          %s5330 = smul.addr %s5329, 8
          %s5331 = smul.addr %s5330, 8
          %s5332 = scalar_lea.vmem %s4, %s5331
        $region56: #{cbow_forward_prepared.1} parent=51 // pred_fallthru
          _
      $region52: #{cbow_forward_prepared.1} parent=5 // pred_fallthru
        _
    $region6: #{cbow_forward_prepared.1} parent=1 // loop_footer
      %s16 = sadd.s32 1, %s12
    $region7: #{cbow_forward_prepared.1} parent=1 // loop_footer_branch
      %11 = sbr.rel target = $region3
    $region8: #{cbow_forward_prepared.1} parent=1 // loop_exit
      _
    %5333 = vsyncpa [#allocation3], 1
    %s5334 = scalar_lea.sflag [#allocation3], 1
    %5335 = vsyncpa %s5334, 1
    %5336 = vsyncpa [#allocation5], 1

</llo_original>
